<compile_context>
chip_gen: v6e
topology: v6e:2x2x1
jax: 0.10.0
libtpu: 0.0.40
codegen_flags: <defaults>
</compile_context>

<pallas_src>
import jax
import jax.numpy as jnp
from jax.experimental import pallas as pl
from jax.experimental.pallas import tpu as pltpu

# Small config consistent with the module (n_features must equal 2*hidden_dim
# for the autoregressive feedback to typecheck, as with the PyTorch defaults).
NUM_STEPS = 8
HIDDEN = 32
N_FEATURES = 2 * HIDDEN          # 64
NUM_LAYERS = 2
D = 2                            # bidirectional
NDIR = D * NUM_LAYERS            # 4 (layer, direction) cells; PyTorch index = layer*2 + dir
BATCH = 8
H2 = 2 * HIDDEN                  # per-layer (fwd|bwd) state width = 64
GATES = 4 * H2                   # fused gate slab width per layer = 256


def decoder_kernel(code_ref, wx_ref, wh_ref, b_ref, out_ref):
    """One invocation runs the whole autoregressive decode.

    code_ref : (B, 2*NDIR*H)            initial h/c states packed as in PyTorch
    wx_ref   : (L, F, 8H)  = (2,64,256) fused input->gates weights per layer
    wh_ref   : (L, 2H, 8H) = (2,64,256) fused hidden->gates weights per layer
    b_ref    : (L, 1, 8H)  = (2,1,256)  fused bias per layer (g block pre-scaled x2)
    out_ref  : (NUM_STEPS, B, F)        per-step lane-0-aligned output slab
    """
    code = code_ref[...]                                     # (B, 256)
    B = code.shape[0]

    # Per-layer states, already (fwd|bwd) contiguous in the code layout.
    h0 = code[:, 0 * H2:1 * H2]                              # layer 0 h  (B, 64)
    h1 = code[:, 1 * H2:2 * H2]                              # layer 1 h
    c0 = code[:, 2 * H2:3 * H2]                              # layer 0 c
    c1 = code[:, 3 * H2:4 * H2]                              # layer 1 c

    w0x = wx_ref[0]                                          # (64, 256)
    w1x = wx_ref[1]
    w0h = wh_ref[0]                                          # (64, 256)
    w1h = wh_ref[1]

    # Bias broadcast once (sublane broadcast, hoisted out of the unrolled loop).
    b0 = jnp.broadcast_to(b_ref[0], (B, GATES))              # (B, 256)
    b1 = jnp.broadcast_to(b_ref[1], (B, GATES))

    def gate_math(gates, c):
        # One full-slab sigmoid (B, 256); g columns were pre-scaled by 2 so that
        # tanh(g) == 2 * sigmoid(2 g) - 1 needs only a half-vreg FMA afterwards.
        s = jax.nn.sigmoid(gates)
        i = s[:, 0 * H2:1 * H2]
        f = s[:, 1 * H2:2 * H2]
        g = 2.0 * s[:, 2 * H2:3 * H2] - 1.0
        o = s[:, 3 * H2:4 * H2]
        c_new = f * c + i * g
        h_new = o * jnp.tanh(c_new)                          # layer output == h block
        return h_new, c_new

    # Fully unrolled decode; recurrent (h-part) matmuls depend only on the
    # previous step's states, so the scheduler can overlap them with the
    # preceding step's gate math.

    # t = 0: decoder input is all zeros -> layer 0's x-part matmul vanishes.
    hh0 = jnp.dot(h0, w0h, preferred_element_type=jnp.float32) + b0
    hh1 = jnp.dot(h1, w1h, preferred_element_type=jnp.float32) + b1
    h0, c0 = gate_math(hh0, c0)
    gates1 = jnp.dot(h0, w1x, preferred_element_type=jnp.float32) + hh1
    h1, c1 = gate_math(gates1, c1)
    out_ref[0] = h1

    for t in range(1, NUM_STEPS):
        # Recurrent contributions for step t (off the x-path critical chain).
        hh0 = jnp.dot(h0, w0h, preferred_element_type=jnp.float32) + b0
        hh1 = jnp.dot(h1, w1h, preferred_element_type=jnp.float32) + b1
        x = h1                                               # autoregressive feedback
        gates0 = jnp.dot(x, w0x, preferred_element_type=jnp.float32) + hh0
        h0, c0 = gate_math(gates0, c0)                       # layer 0 (both directions)
        gates1 = jnp.dot(h0, w1x, preferred_element_type=jnp.float32) + hh1
        h1, c1 = gate_math(gates1, c1)                       # layer 1 (both directions)
        out_ref[t] = h1                                      # (8, 64) lane-0 store


@jax.jit
def signal_decoder_forward(code, x, wx_fused, wh_fused, b_fused):
    B = x.shape[0]
    out_tbf = pl.pallas_call(
        decoder_kernel,
        out_shape=jax.ShapeDtypeStruct((NUM_STEPS, B, N_FEATURES), jnp.float32),
        in_specs=[pl.BlockSpec(memory_space=pltpu.MemorySpace.VMEM)] * 4,
        out_specs=pl.BlockSpec(memory_space=pltpu.MemorySpace.VMEM),
    )(code, wx_fused, wh_fused, b_fused)
    return jnp.transpose(out_tbf, (1, 0, 2))                 # (B, T, F) batch_first


def init_params(key):
    """PyTorch-style per-(layer, direction) LSTM params, uniform(-1/sqrt(H), 1/sqrt(H))."""
    scale = 1.0 / float(HIDDEN) ** 0.5
    keys = jax.random.split(key, NDIR * 4)
    raw = []
    idx = 0
    for layer in range(NUM_LAYERS):
        in_dim = N_FEATURES if layer == 0 else D * HIDDEN    # both 64 here
        for _direction in range(D):
            w_ih = jax.random.uniform(keys[idx], (4 * HIDDEN, in_dim),
                                      minval=-scale, maxval=scale); idx += 1
            w_hh = jax.random.uniform(keys[idx], (4 * HIDDEN, HIDDEN),
                                      minval=-scale, maxval=scale); idx += 1
            b_ih = jax.random.uniform(keys[idx], (4 * HIDDEN,),
                                      minval=-scale, maxval=scale); idx += 1
            b_hh = jax.random.uniform(keys[idx], (4 * HIDDEN,),
                                      minval=-scale, maxval=scale); idx += 1
            raw.append((w_ih.astype(jnp.float32), w_hh.astype(jnp.float32),
                        (b_ih + b_hh).astype(jnp.float32)))
    return raw


def fuse_params(raw):
    """Build split fused weights wx (L, F, 8H), wh (L, 2H, 8H) and bias (L, 1, 8H).

    wx rows: [ x (in_dim) ]            wh rows: [ h_fwd (H) | h_bwd (H) ]
    columns: [ i_f i_b | f_f f_b | g_f g_b | o_f o_b ]  (each block H wide)
    The g (tanh) gate's weight columns and bias are pre-scaled by 2 so the kernel
    can use tanh(g) = 2*sigmoid(2g) - 1 with a single full-slab sigmoid.
    """
    H = HIDDEN
    wxs, whs, bs = [], [], []
    for layer in range(NUM_LAYERS):
        wih_f, whh_f, b_f = raw[2 * layer]
        wih_b, whh_b, b_b = raw[2 * layer + 1]
        zero = jnp.zeros((H, H), jnp.float32)
        wx_blocks, wh_blocks, bias_blocks = [], [], []
        for g in range(4):
            sl = slice(g * H, (g + 1) * H)
            scale = 2.0 if g == 2 else 1.0                                # tanh-gate pre-scale
            wx_blocks.append(scale *
                             jnp.concatenate([wih_f[sl].T, wih_b[sl].T], axis=1))   # (in_dim, 2H)
            top = jnp.concatenate([whh_f[sl].T, zero], axis=1)                      # fwd hidden rows
            bot = jnp.concatenate([zero, whh_b[sl].T], axis=1)                      # bwd hidden rows
            wh_blocks.append(scale * jnp.concatenate([top, bot], axis=0))           # (2H, 2H)
            bias_blocks.append(scale * jnp.concatenate([b_f[sl], b_b[sl]]))         # (2H,)
        wxs.append(jnp.concatenate(wx_blocks, axis=1))                    # (in_dim, 8H)
        whs.append(jnp.concatenate(wh_blocks, axis=1))                    # (2H, 8H)
        bs.append(jnp.concatenate(bias_blocks))                           # (8H,)
    wx = jnp.stack(wxs).astype(jnp.float32)                               # (2, 64, 256)
    wh = jnp.stack(whs).astype(jnp.float32)                               # (2, 64, 256)
    b = jnp.stack(bs).astype(jnp.float32).reshape(NUM_LAYERS, 1, GATES)   # (2, 1, 256)
    return wx, wh, b


def reference_forward(code, raw):
    """Pure-JAX reference using the raw per-direction weights (validates the fusion)."""
    H = HIDDEN
    B = code.shape[0]
    h = [code[:, k * H:(k + 1) * H] for k in range(NDIR)]
    c = [code[:, (NDIR + k) * H:(NDIR + k + 1) * H] for k in range(NDIR)]
    inp = jnp.zeros((B, N_FEATURES), jnp.float32)

    def cell(x_, hk, ck, k):
        w_ih, w_hh, b = raw[k]
        g = x_ @ w_ih.T + hk @ w_hh.T + b
        i = jax.nn.sigmoid(g[:, :H]); f = jax.nn.sigmoid(g[:, H:2 * H])
        gg = jnp.tanh(g[:, 2 * H:3 * H]); o = jax.nn.sigmoid(g[:, 3 * H:])
        cn = f * ck + i * gg
        return o * jnp.tanh(cn), cn

    outs = []
    for _ in range(NUM_STEPS):
        h0f, c0f = cell(inp, h[0], c[0], 0)
        h0b, c0b = cell(inp, h[1], c[1], 1)
        l0 = jnp.concatenate([h0f, h0b], axis=-1)
        h1f, c1f = cell(l0, h[2], c[2], 2)
        h1b, c1b = cell(l0, h[3], c[3], 3)
        out = jnp.concatenate([h1f, h1b], axis=-1)
        h = [h0f, h0b, h1f, h1b]
        c = [c0f, c0b, c1f, c1b]
        inp = out
        outs.append(out)
    return jnp.stack(outs, axis=1)  # (B, T, F)


if __name__ == "__main__":
    key = jax.random.PRNGKey(0)
    k_code, k_x, k_p = jax.random.split(key, 3)

    code = jax.random.normal(k_code, (BATCH, 2 * NDIR * HIDDEN), jnp.float32)   # (8, 256)
    x = jax.random.normal(k_x, (BATCH, NUM_STEPS, N_FEATURES), jnp.float32)     # (8, 8, 64)

    raw_params = init_params(k_p)
    wx_fused, wh_fused, b_fused = fuse_params(raw_params)    # (2,64,256), (2,64,256), (2,1,256)

    out = signal_decoder_forward(code, x, wx_fused, wh_fused, b_fused)
    out = jax.block_until_ready(out)

    assert out.shape == (BATCH, NUM_STEPS, N_FEATURES)
    ref = reference_forward(code, raw_params)
    # Tolerance 1e-4: the kernel computes tanh(g) as 2*sigmoid(2g)-1 (exact identity,
    # ~1e-7/step transcendental-approximation difference vs. direct tanh).
    assert jnp.allclose(out, ref, atol=1e-4, rtol=1e-4), "Pallas kernel mismatch vs JAX reference"

    print("KERNEL_OK")
</pallas_src>

<mosaic_0001>
module attributes {stable_mosaic.version = 11 : i64} {
  func.func @decoder_kernel(%arg0: memref<8x256xf32, #tpu.memory_space<vmem>>, %arg1: memref<2x64x256xf32, #tpu.memory_space<vmem>>, %arg2: memref<2x64x256xf32, #tpu.memory_space<vmem>>, %arg3: memref<2x1x256xf32, #tpu.memory_space<vmem>>, %arg4: memref<8x8x64xf32, #tpu.memory_space<vmem>>) attributes {dimension_semantics = [], scalar_prefetch = 0 : i64, scratch_operands = 0 : i64, tpu.core_type = #tpu.core_type<tc>} {
    %c0 = arith.constant 0 : index
    %c0_0 = arith.constant 0 : index
    %0 = vector.load %arg0[%c0, %c0_0] : memref<8x256xf32, #tpu.memory_space<vmem>>, vector<8x256xf32>
    %1 = vector.extract_strided_slice %0 {offsets = [0, 0], sizes = [8, 64], strides = [1, 1]} : vector<8x256xf32> to vector<8x64xf32>
    %2 = vector.extract_strided_slice %0 {offsets = [0, 64], sizes = [8, 64], strides = [1, 1]} : vector<8x256xf32> to vector<8x64xf32>
    %3 = vector.extract_strided_slice %0 {offsets = [0, 128], sizes = [8, 64], strides = [1, 1]} : vector<8x256xf32> to vector<8x64xf32>
    %4 = vector.extract_strided_slice %0 {offsets = [0, 192], sizes = [8, 64], strides = [1, 1]} : vector<8x256xf32> to vector<8x64xf32>
    %c0_1 = arith.constant 0 : index
    %c0_2 = arith.constant 0 : index
    %c0_3 = arith.constant 0 : index
    %5 = vector.load %arg1[%c0_1, %c0_2, %c0_3] : memref<2x64x256xf32, #tpu.memory_space<vmem>>, vector<1x64x256xf32>
    %6 = vector.shape_cast %5 : vector<1x64x256xf32> to vector<64x256xf32>
    %c1 = arith.constant 1 : index
    %c0_4 = arith.constant 0 : index
    %c0_5 = arith.constant 0 : index
    %7 = vector.load %arg1[%c1, %c0_4, %c0_5] : memref<2x64x256xf32, #tpu.memory_space<vmem>>, vector<1x64x256xf32>
    %8 = vector.shape_cast %7 : vector<1x64x256xf32> to vector<64x256xf32>
    %c0_6 = arith.constant 0 : index
    %c0_7 = arith.constant 0 : index
    %c0_8 = arith.constant 0 : index
    %9 = vector.load %arg2[%c0_6, %c0_7, %c0_8] : memref<2x64x256xf32, #tpu.memory_space<vmem>>, vector<1x64x256xf32>
    %10 = vector.shape_cast %9 : vector<1x64x256xf32> to vector<64x256xf32>
    %c1_9 = arith.constant 1 : index
    %c0_10 = arith.constant 0 : index
    %c0_11 = arith.constant 0 : index
    %11 = vector.load %arg2[%c1_9, %c0_10, %c0_11] : memref<2x64x256xf32, #tpu.memory_space<vmem>>, vector<1x64x256xf32>
    %12 = vector.shape_cast %11 : vector<1x64x256xf32> to vector<64x256xf32>
    %c0_12 = arith.constant 0 : index
    %c0_13 = arith.constant 0 : index
    %c0_14 = arith.constant 0 : index
    %13 = vector.load %arg3[%c0_12, %c0_13, %c0_14] : memref<2x1x256xf32, #tpu.memory_space<vmem>>, vector<1x1x256xf32>
    %14 = vector.shape_cast %13 : vector<1x1x256xf32> to vector<1x256xf32>
    %15 = vector.shape_cast %14 : vector<1x256xf32> to vector<1x256xf32>
    %16 = vector.broadcast %15 : vector<1x256xf32> to vector<8x256xf32>
    %c1_15 = arith.constant 1 : index
    %c0_16 = arith.constant 0 : index
    %c0_17 = arith.constant 0 : index
    %17 = vector.load %arg3[%c1_15, %c0_16, %c0_17] : memref<2x1x256xf32, #tpu.memory_space<vmem>>, vector<1x1x256xf32>
    %18 = vector.shape_cast %17 : vector<1x1x256xf32> to vector<1x256xf32>
    %19 = vector.shape_cast %18 : vector<1x256xf32> to vector<1x256xf32>
    %20 = vector.broadcast %19 : vector<1x256xf32> to vector<8x256xf32>
    %cst = arith.constant dense<0.000000e+00> : vector<8x256xf32>
    %21 = tpu.matmul %1, %10, %cst {dimension_numbers = #tpu.dot_dimension_numbers<[1], [0], [0], [1], [0, 0, 1, 1], [], []>} : vector<8x64xf32>, vector<64x256xf32>, vector<8x256xf32> -> vector<8x256xf32>
    %22 = arith.addf %21, %16 : vector<8x256xf32>
    %cst_18 = arith.constant dense<0.000000e+00> : vector<8x256xf32>
    %23 = tpu.matmul %2, %12, %cst_18 {dimension_numbers = #tpu.dot_dimension_numbers<[1], [0], [0], [1], [0, 0, 1, 1], [], []>} : vector<8x64xf32>, vector<64x256xf32>, vector<8x256xf32> -> vector<8x256xf32>
    %24 = arith.addf %23, %20 : vector<8x256xf32>
    %25 = arith.negf %22 : vector<8x256xf32>
    %26 = math.exp %25 : vector<8x256xf32>
    %cst_19 = arith.constant 1.000000e+00 : f32
    %27 = vector.broadcast %cst_19 : f32 to vector<8x256xf32>
    %28 = arith.addf %27, %26 : vector<8x256xf32>
    %29 = arith.divf %27, %28 : vector<8x256xf32>
    %30 = vector.extract_strided_slice %29 {offsets = [0, 0], sizes = [8, 64], strides = [1, 1]} : vector<8x256xf32> to vector<8x64xf32>
    %31 = vector.extract_strided_slice %29 {offsets = [0, 64], sizes = [8, 64], strides = [1, 1]} : vector<8x256xf32> to vector<8x64xf32>
    %32 = vector.extract_strided_slice %29 {offsets = [0, 128], sizes = [8, 64], strides = [1, 1]} : vector<8x256xf32> to vector<8x64xf32>
    %cst_20 = arith.constant 2.000000e+00 : f32
    %33 = vector.broadcast %cst_20 : f32 to vector<8x64xf32>
    %34 = arith.mulf %33, %32 : vector<8x64xf32>
    %cst_21 = arith.constant 1.000000e+00 : f32
    %35 = vector.broadcast %cst_21 : f32 to vector<8x64xf32>
    %36 = arith.subf %34, %35 : vector<8x64xf32>
    %37 = vector.extract_strided_slice %29 {offsets = [0, 192], sizes = [8, 64], strides = [1, 1]} : vector<8x256xf32> to vector<8x64xf32>
    %38 = arith.mulf %31, %3 : vector<8x64xf32>
    %39 = arith.mulf %30, %36 : vector<8x64xf32>
    %40 = arith.addf %38, %39 : vector<8x64xf32>
    %41 = math.tanh %40 : vector<8x64xf32>
    %42 = arith.mulf %37, %41 : vector<8x64xf32>
    %cst_22 = arith.constant dense<0.000000e+00> : vector<8x256xf32>
    %43 = tpu.matmul %42, %8, %cst_22 {dimension_numbers = #tpu.dot_dimension_numbers<[1], [0], [0], [1], [0, 0, 1, 1], [], []>} : vector<8x64xf32>, vector<64x256xf32>, vector<8x256xf32> -> vector<8x256xf32>
    %44 = arith.addf %43, %24 : vector<8x256xf32>
    %45 = arith.negf %44 : vector<8x256xf32>
    %46 = math.exp %45 : vector<8x256xf32>
    %cst_23 = arith.constant 1.000000e+00 : f32
    %47 = vector.broadcast %cst_23 : f32 to vector<8x256xf32>
    %48 = arith.addf %47, %46 : vector<8x256xf32>
    %49 = arith.divf %47, %48 : vector<8x256xf32>
    %50 = vector.extract_strided_slice %49 {offsets = [0, 0], sizes = [8, 64], strides = [1, 1]} : vector<8x256xf32> to vector<8x64xf32>
    %51 = vector.extract_strided_slice %49 {offsets = [0, 64], sizes = [8, 64], strides = [1, 1]} : vector<8x256xf32> to vector<8x64xf32>
    %52 = vector.extract_strided_slice %49 {offsets = [0, 128], sizes = [8, 64], strides = [1, 1]} : vector<8x256xf32> to vector<8x64xf32>
    %cst_24 = arith.constant 2.000000e+00 : f32
    %53 = vector.broadcast %cst_24 : f32 to vector<8x64xf32>
    %54 = arith.mulf %53, %52 : vector<8x64xf32>
    %cst_25 = arith.constant 1.000000e+00 : f32
    %55 = vector.broadcast %cst_25 : f32 to vector<8x64xf32>
    %56 = arith.subf %54, %55 : vector<8x64xf32>
    %57 = vector.extract_strided_slice %49 {offsets = [0, 192], sizes = [8, 64], strides = [1, 1]} : vector<8x256xf32> to vector<8x64xf32>
    %58 = arith.mulf %51, %4 : vector<8x64xf32>
    %59 = arith.mulf %50, %56 : vector<8x64xf32>
    %60 = arith.addf %58, %59 : vector<8x64xf32>
    %61 = math.tanh %60 : vector<8x64xf32>
    %62 = arith.mulf %57, %61 : vector<8x64xf32>
    %c0_26 = arith.constant 0 : index
    %c0_27 = arith.constant 0 : index
    %c0_28 = arith.constant 0 : index
    %63 = vector.load %arg4[%c0_26, %c0_27, %c0_28] : memref<8x8x64xf32, #tpu.memory_space<vmem>>, vector<1x8x64xf32>
    %64 = vector.shape_cast %63 : vector<1x8x64xf32> to vector<8x64xf32>
    %65 = vector.shape_cast %62 : vector<8x64xf32> to vector<1x8x64xf32>
    tpu.vector_store %arg4[%c0_26, %c0_27, %c0_28], %65 {strides = array<i32>} : memref<8x8x64xf32, #tpu.memory_space<vmem>>, vector<1x8x64xf32>,
    %cst_29 = arith.constant dense<0.000000e+00> : vector<8x256xf32>
    %66 = tpu.matmul %42, %10, %cst_29 {dimension_numbers = #tpu.dot_dimension_numbers<[1], [0], [0], [1], [0, 0, 1, 1], [], []>} : vector<8x64xf32>, vector<64x256xf32>, vector<8x256xf32> -> vector<8x256xf32>
    %67 = arith.addf %66, %16 : vector<8x256xf32>
    %cst_30 = arith.constant dense<0.000000e+00> : vector<8x256xf32>
    %68 = tpu.matmul %62, %12, %cst_30 {dimension_numbers = #tpu.dot_dimension_numbers<[1], [0], [0], [1], [0, 0, 1, 1], [], []>} : vector<8x64xf32>, vector<64x256xf32>, vector<8x256xf32> -> vector<8x256xf32>
    %69 = arith.addf %68, %20 : vector<8x256xf32>
    %cst_31 = arith.constant dense<0.000000e+00> : vector<8x256xf32>
    %70 = tpu.matmul %62, %6, %cst_31 {dimension_numbers = #tpu.dot_dimension_numbers<[1], [0], [0], [1], [0, 0, 1, 1], [], []>} : vector<8x64xf32>, vector<64x256xf32>, vector<8x256xf32> -> vector<8x256xf32>
    %71 = arith.addf %70, %67 : vector<8x256xf32>
    %72 = arith.negf %71 : vector<8x256xf32>
    %73 = math.exp %72 : vector<8x256xf32>
    %cst_32 = arith.constant 1.000000e+00 : f32
    %74 = vector.broadcast %cst_32 : f32 to vector<8x256xf32>
    %75 = arith.addf %74, %73 : vector<8x256xf32>
    %76 = arith.divf %74, %75 : vector<8x256xf32>
    %77 = vector.extract_strided_slice %76 {offsets = [0, 0], sizes = [8, 64], strides = [1, 1]} : vector<8x256xf32> to vector<8x64xf32>
    %78 = vector.extract_strided_slice %76 {offsets = [0, 64], sizes = [8, 64], strides = [1, 1]} : vector<8x256xf32> to vector<8x64xf32>
    %79 = vector.extract_strided_slice %76 {offsets = [0, 128], sizes = [8, 64], strides = [1, 1]} : vector<8x256xf32> to vector<8x64xf32>
    %cst_33 = arith.constant 2.000000e+00 : f32
    %80 = vector.broadcast %cst_33 : f32 to vector<8x64xf32>
    %81 = arith.mulf %80, %79 : vector<8x64xf32>
    %cst_34 = arith.constant 1.000000e+00 : f32
    %82 = vector.broadcast %cst_34 : f32 to vector<8x64xf32>
    %83 = arith.subf %81, %82 : vector<8x64xf32>
    %84 = vector.extract_strided_slice %76 {offsets = [0, 192], sizes = [8, 64], strides = [1, 1]} : vector<8x256xf32> to vector<8x64xf32>
    %85 = arith.mulf %78, %40 : vector<8x64xf32>
    %86 = arith.mulf %77, %83 : vector<8x64xf32>
    %87 = arith.addf %85, %86 : vector<8x64xf32>
    %88 = math.tanh %87 : vector<8x64xf32>
    %89 = arith.mulf %84, %88 : vector<8x64xf32>
    %cst_35 = arith.constant dense<0.000000e+00> : vector<8x256xf32>
    %90 = tpu.matmul %89, %8, %cst_35 {dimension_numbers = #tpu.dot_dimension_numbers<[1], [0], [0], [1], [0, 0, 1, 1], [], []>} : vector<8x64xf32>, vector<64x256xf32>, vector<8x256xf32> -> vector<8x256xf32>
    %91 = arith.addf %90, %69 : vector<8x256xf32>
    %92 = arith.negf %91 : vector<8x256xf32>
    %93 = math.exp %92 : vector<8x256xf32>
    %cst_36 = arith.constant 1.000000e+00 : f32
    %94 = vector.broadcast %cst_36 : f32 to vector<8x256xf32>
    %95 = arith.addf %94, %93 : vector<8x256xf32>
    %96 = arith.divf %94, %95 : vector<8x256xf32>
    %97 = vector.extract_strided_slice %96 {offsets = [0, 0], sizes = [8, 64], strides = [1, 1]} : vector<8x256xf32> to vector<8x64xf32>
    %98 = vector.extract_strided_slice %96 {offsets = [0, 64], sizes = [8, 64], strides = [1, 1]} : vector<8x256xf32> to vector<8x64xf32>
    %99 = vector.extract_strided_slice %96 {offsets = [0, 128], sizes = [8, 64], strides = [1, 1]} : vector<8x256xf32> to vector<8x64xf32>
    %cst_37 = arith.constant 2.000000e+00 : f32
    %100 = vector.broadcast %cst_37 : f32 to vector<8x64xf32>
    %101 = arith.mulf %100, %99 : vector<8x64xf32>
    %cst_38 = arith.constant 1.000000e+00 : f32
    %102 = vector.broadcast %cst_38 : f32 to vector<8x64xf32>
    %103 = arith.subf %101, %102 : vector<8x64xf32>
    %104 = vector.extract_strided_slice %96 {offsets = [0, 192], sizes = [8, 64], strides = [1, 1]} : vector<8x256xf32> to vector<8x64xf32>
    %105 = arith.mulf %98, %60 : vector<8x64xf32>
    %106 = arith.mulf %97, %103 : vector<8x64xf32>
    %107 = arith.addf %105, %106 : vector<8x64xf32>
    %108 = math.tanh %107 : vector<8x64xf32>
    %109 = arith.mulf %104, %108 : vector<8x64xf32>
    %c1_39 = arith.constant 1 : index
    %c0_40 = arith.constant 0 : index
    %c0_41 = arith.constant 0 : index
    %110 = vector.load %arg4[%c1_39, %c0_40, %c0_41] : memref<8x8x64xf32, #tpu.memory_space<vmem>>, vector<1x8x64xf32>
    %111 = vector.shape_cast %110 : vector<1x8x64xf32> to vector<8x64xf32>
    %112 = vector.shape_cast %109 : vector<8x64xf32> to vector<1x8x64xf32>
    tpu.vector_store %arg4[%c1_39, %c0_40, %c0_41], %112 {strides = array<i32>} : memref<8x8x64xf32, #tpu.memory_space<vmem>>, vector<1x8x64xf32>,
    %cst_42 = arith.constant dense<0.000000e+00> : vector<8x256xf32>
    %113 = tpu.matmul %89, %10, %cst_42 {dimension_numbers = #tpu.dot_dimension_numbers<[1], [0], [0], [1], [0, 0, 1, 1], [], []>} : vector<8x64xf32>, vector<64x256xf32>, vector<8x256xf32> -> vector<8x256xf32>
    %114 = arith.addf %113, %16 : vector<8x256xf32>
    %cst_43 = arith.constant dense<0.000000e+00> : vector<8x256xf32>
    %115 = tpu.matmul %109, %12, %cst_43 {dimension_numbers = #tpu.dot_dimension_numbers<[1], [0], [0], [1], [0, 0, 1, 1], [], []>} : vector<8x64xf32>, vector<64x256xf32>, vector<8x256xf32> -> vector<8x256xf32>
    %116 = arith.addf %115, %20 : vector<8x256xf32>
    %cst_44 = arith.constant dense<0.000000e+00> : vector<8x256xf32>
    %117 = tpu.matmul %109, %6, %cst_44 {dimension_numbers = #tpu.dot_dimension_numbers<[1], [0], [0], [1], [0, 0, 1, 1], [], []>} : vector<8x64xf32>, vector<64x256xf32>, vector<8x256xf32> -> vector<8x256xf32>
    %118 = arith.addf %117, %114 : vector<8x256xf32>
    %119 = arith.negf %118 : vector<8x256xf32>
    %120 = math.exp %119 : vector<8x256xf32>
    %cst_45 = arith.constant 1.000000e+00 : f32
    %121 = vector.broadcast %cst_45 : f32 to vector<8x256xf32>
    %122 = arith.addf %121, %120 : vector<8x256xf32>
    %123 = arith.divf %121, %122 : vector<8x256xf32>
    %124 = vector.extract_strided_slice %123 {offsets = [0, 0], sizes = [8, 64], strides = [1, 1]} : vector<8x256xf32> to vector<8x64xf32>
    %125 = vector.extract_strided_slice %123 {offsets = [0, 64], sizes = [8, 64], strides = [1, 1]} : vector<8x256xf32> to vector<8x64xf32>
    %126 = vector.extract_strided_slice %123 {offsets = [0, 128], sizes = [8, 64], strides = [1, 1]} : vector<8x256xf32> to vector<8x64xf32>
    %cst_46 = arith.constant 2.000000e+00 : f32
    %127 = vector.broadcast %cst_46 : f32 to vector<8x64xf32>
    %128 = arith.mulf %127, %126 : vector<8x64xf32>
    %cst_47 = arith.constant 1.000000e+00 : f32
    %129 = vector.broadcast %cst_47 : f32 to vector<8x64xf32>
    %130 = arith.subf %128, %129 : vector<8x64xf32>
    %131 = vector.extract_strided_slice %123 {offsets = [0, 192], sizes = [8, 64], strides = [1, 1]} : vector<8x256xf32> to vector<8x64xf32>
    %132 = arith.mulf %125, %87 : vector<8x64xf32>
    %133 = arith.mulf %124, %130 : vector<8x64xf32>
    %134 = arith.addf %132, %133 : vector<8x64xf32>
    %135 = math.tanh %134 : vector<8x64xf32>
    %136 = arith.mulf %131, %135 : vector<8x64xf32>
    %cst_48 = arith.constant dense<0.000000e+00> : vector<8x256xf32>
    %137 = tpu.matmul %136, %8, %cst_48 {dimension_numbers = #tpu.dot_dimension_numbers<[1], [0], [0], [1], [0, 0, 1, 1], [], []>} : vector<8x64xf32>, vector<64x256xf32>, vector<8x256xf32> -> vector<8x256xf32>
    %138 = arith.addf %137, %116 : vector<8x256xf32>
    %139 = arith.negf %138 : vector<8x256xf32>
    %140 = math.exp %139 : vector<8x256xf32>
    %cst_49 = arith.constant 1.000000e+00 : f32
    %141 = vector.broadcast %cst_49 : f32 to vector<8x256xf32>
    %142 = arith.addf %141, %140 : vector<8x256xf32>
    %143 = arith.divf %141, %142 : vector<8x256xf32>
    %144 = vector.extract_strided_slice %143 {offsets = [0, 0], sizes = [8, 64], strides = [1, 1]} : vector<8x256xf32> to vector<8x64xf32>
    %145 = vector.extract_strided_slice %143 {offsets = [0, 64], sizes = [8, 64], strides = [1, 1]} : vector<8x256xf32> to vector<8x64xf32>
    %146 = vector.extract_strided_slice %143 {offsets = [0, 128], sizes = [8, 64], strides = [1, 1]} : vector<8x256xf32> to vector<8x64xf32>
    %cst_50 = arith.constant 2.000000e+00 : f32
    %147 = vector.broadcast %cst_50 : f32 to vector<8x64xf32>
    %148 = arith.mulf %147, %146 : vector<8x64xf32>
    %cst_51 = arith.constant 1.000000e+00 : f32
    %149 = vector.broadcast %cst_51 : f32 to vector<8x64xf32>
    %150 = arith.subf %148, %149 : vector<8x64xf32>
    %151 = vector.extract_strided_slice %143 {offsets = [0, 192], sizes = [8, 64], strides = [1, 1]} : vector<8x256xf32> to vector<8x64xf32>
    %152 = arith.mulf %145, %107 : vector<8x64xf32>
    %153 = arith.mulf %144, %150 : vector<8x64xf32>
    %154 = arith.addf %152, %153 : vector<8x64xf32>
    %155 = math.tanh %154 : vector<8x64xf32>
    %156 = arith.mulf %151, %155 : vector<8x64xf32>
    %c2 = arith.constant 2 : index
    %c0_52 = arith.constant 0 : index
    %c0_53 = arith.constant 0 : index
    %157 = vector.load %arg4[%c2, %c0_52, %c0_53] : memref<8x8x64xf32, #tpu.memory_space<vmem>>, vector<1x8x64xf32>
    %158 = vector.shape_cast %157 : vector<1x8x64xf32> to vector<8x64xf32>
    %159 = vector.shape_cast %156 : vector<8x64xf32> to vector<1x8x64xf32>
    tpu.vector_store %arg4[%c2, %c0_52, %c0_53], %159 {strides = array<i32>} : memref<8x8x64xf32, #tpu.memory_space<vmem>>, vector<1x8x64xf32>,
    %cst_54 = arith.constant dense<0.000000e+00> : vector<8x256xf32>
    %160 = tpu.matmul %136, %10, %cst_54 {dimension_numbers = #tpu.dot_dimension_numbers<[1], [0], [0], [1], [0, 0, 1, 1], [], []>} : vector<8x64xf32>, vector<64x256xf32>, vector<8x256xf32> -> vector<8x256xf32>
    %161 = arith.addf %160, %16 : vector<8x256xf32>
    %cst_55 = arith.constant dense<0.000000e+00> : vector<8x256xf32>
    %162 = tpu.matmul %156, %12, %cst_55 {dimension_numbers = #tpu.dot_dimension_numbers<[1], [0], [0], [1], [0, 0, 1, 1], [], []>} : vector<8x64xf32>, vector<64x256xf32>, vector<8x256xf32> -> vector<8x256xf32>
    %163 = arith.addf %162, %20 : vector<8x256xf32>
    %cst_56 = arith.constant dense<0.000000e+00> : vector<8x256xf32>
    %164 = tpu.matmul %156, %6, %cst_56 {dimension_numbers = #tpu.dot_dimension_numbers<[1], [0], [0], [1], [0, 0, 1, 1], [], []>} : vector<8x64xf32>, vector<64x256xf32>, vector<8x256xf32> -> vector<8x256xf32>
    %165 = arith.addf %164, %161 : vector<8x256xf32>
    %166 = arith.negf %165 : vector<8x256xf32>
    %167 = math.exp %166 : vector<8x256xf32>
    %cst_57 = arith.constant 1.000000e+00 : f32
    %168 = vector.broadcast %cst_57 : f32 to vector<8x256xf32>
    %169 = arith.addf %168, %167 : vector<8x256xf32>
    %170 = arith.divf %168, %169 : vector<8x256xf32>
    %171 = vector.extract_strided_slice %170 {offsets = [0, 0], sizes = [8, 64], strides = [1, 1]} : vector<8x256xf32> to vector<8x64xf32>
    %172 = vector.extract_strided_slice %170 {offsets = [0, 64], sizes = [8, 64], strides = [1, 1]} : vector<8x256xf32> to vector<8x64xf32>
    %173 = vector.extract_strided_slice %170 {offsets = [0, 128], sizes = [8, 64], strides = [1, 1]} : vector<8x256xf32> to vector<8x64xf32>
    %cst_58 = arith.constant 2.000000e+00 : f32
    %174 = vector.broadcast %cst_58 : f32 to vector<8x64xf32>
    %175 = arith.mulf %174, %173 : vector<8x64xf32>
    %cst_59 = arith.constant 1.000000e+00 : f32
    %176 = vector.broadcast %cst_59 : f32 to vector<8x64xf32>
    %177 = arith.subf %175, %176 : vector<8x64xf32>
    %178 = vector.extract_strided_slice %170 {offsets = [0, 192], sizes = [8, 64], strides = [1, 1]} : vector<8x256xf32> to vector<8x64xf32>
    %179 = arith.mulf %172, %134 : vector<8x64xf32>
    %180 = arith.mulf %171, %177 : vector<8x64xf32>
    %181 = arith.addf %179, %180 : vector<8x64xf32>
    %182 = math.tanh %181 : vector<8x64xf32>
    %183 = arith.mulf %178, %182 : vector<8x64xf32>
    %cst_60 = arith.constant dense<0.000000e+00> : vector<8x256xf32>
    %184 = tpu.matmul %183, %8, %cst_60 {dimension_numbers = #tpu.dot_dimension_numbers<[1], [0], [0], [1], [0, 0, 1, 1], [], []>} : vector<8x64xf32>, vector<64x256xf32>, vector<8x256xf32> -> vector<8x256xf32>
    %185 = arith.addf %184, %163 : vector<8x256xf32>
    %186 = arith.negf %185 : vector<8x256xf32>
    %187 = math.exp %186 : vector<8x256xf32>
    %cst_61 = arith.constant 1.000000e+00 : f32
    %188 = vector.broadcast %cst_61 : f32 to vector<8x256xf32>
    %189 = arith.addf %188, %187 : vector<8x256xf32>
    %190 = arith.divf %188, %189 : vector<8x256xf32>
    %191 = vector.extract_strided_slice %190 {offsets = [0, 0], sizes = [8, 64], strides = [1, 1]} : vector<8x256xf32> to vector<8x64xf32>
    %192 = vector.extract_strided_slice %190 {offsets = [0, 64], sizes = [8, 64], strides = [1, 1]} : vector<8x256xf32> to vector<8x64xf32>
    %193 = vector.extract_strided_slice %190 {offsets = [0, 128], sizes = [8, 64], strides = [1, 1]} : vector<8x256xf32> to vector<8x64xf32>
    %cst_62 = arith.constant 2.000000e+00 : f32
    %194 = vector.broadcast %cst_62 : f32 to vector<8x64xf32>
    %195 = arith.mulf %194, %193 : vector<8x64xf32>
    %cst_63 = arith.constant 1.000000e+00 : f32
    %196 = vector.broadcast %cst_63 : f32 to vector<8x64xf32>
    %197 = arith.subf %195, %196 : vector<8x64xf32>
    %198 = vector.extract_strided_slice %190 {offsets = [0, 192], sizes = [8, 64], strides = [1, 1]} : vector<8x256xf32> to vector<8x64xf32>
    %199 = arith.mulf %192, %154 : vector<8x64xf32>
    %200 = arith.mulf %191, %197 : vector<8x64xf32>
    %201 = arith.addf %199, %200 : vector<8x64xf32>
    %202 = math.tanh %201 : vector<8x64xf32>
    %203 = arith.mulf %198, %202 : vector<8x64xf32>
    %c3 = arith.constant 3 : index
    %c0_64 = arith.constant 0 : index
    %c0_65 = arith.constant 0 : index
    %204 = vector.load %arg4[%c3, %c0_64, %c0_65] : memref<8x8x64xf32, #tpu.memory_space<vmem>>, vector<1x8x64xf32>
    %205 = vector.shape_cast %204 : vector<1x8x64xf32> to vector<8x64xf32>
    %206 = vector.shape_cast %203 : vector<8x64xf32> to vector<1x8x64xf32>
    tpu.vector_store %arg4[%c3, %c0_64, %c0_65], %206 {strides = array<i32>} : memref<8x8x64xf32, #tpu.memory_space<vmem>>, vector<1x8x64xf32>,
    %cst_66 = arith.constant dense<0.000000e+00> : vector<8x256xf32>
    %207 = tpu.matmul %183, %10, %cst_66 {dimension_numbers = #tpu.dot_dimension_numbers<[1], [0], [0], [1], [0, 0, 1, 1], [], []>} : vector<8x64xf32>, vector<64x256xf32>, vector<8x256xf32> -> vector<8x256xf32>
    %208 = arith.addf %207, %16 : vector<8x256xf32>
    %cst_67 = arith.constant dense<0.000000e+00> : vector<8x256xf32>
    %209 = tpu.matmul %203, %12, %cst_67 {dimension_numbers = #tpu.dot_dimension_numbers<[1], [0], [0], [1], [0, 0, 1, 1], [], []>} : vector<8x64xf32>, vector<64x256xf32>, vector<8x256xf32> -> vector<8x256xf32>
    %210 = arith.addf %209, %20 : vector<8x256xf32>
    %cst_68 = arith.constant dense<0.000000e+00> : vector<8x256xf32>
    %211 = tpu.matmul %203, %6, %cst_68 {dimension_numbers = #tpu.dot_dimension_numbers<[1], [0], [0], [1], [0, 0, 1, 1], [], []>} : vector<8x64xf32>, vector<64x256xf32>, vector<8x256xf32> -> vector<8x256xf32>
    %212 = arith.addf %211, %208 : vector<8x256xf32>
    %213 = arith.negf %212 : vector<8x256xf32>
    %214 = math.exp %213 : vector<8x256xf32>
    %cst_69 = arith.constant 1.000000e+00 : f32
    %215 = vector.broadcast %cst_69 : f32 to vector<8x256xf32>
    %216 = arith.addf %215, %214 : vector<8x256xf32>
    %217 = arith.divf %215, %216 : vector<8x256xf32>
    %218 = vector.extract_strided_slice %217 {offsets = [0, 0], sizes = [8, 64], strides = [1, 1]} : vector<8x256xf32> to vector<8x64xf32>
    %219 = vector.extract_strided_slice %217 {offsets = [0, 64], sizes = [8, 64], strides = [1, 1]} : vector<8x256xf32> to vector<8x64xf32>
    %220 = vector.extract_strided_slice %217 {offsets = [0, 128], sizes = [8, 64], strides = [1, 1]} : vector<8x256xf32> to vector<8x64xf32>
    %cst_70 = arith.constant 2.000000e+00 : f32
    %221 = vector.broadcast %cst_70 : f32 to vector<8x64xf32>
    %222 = arith.mulf %221, %220 : vector<8x64xf32>
    %cst_71 = arith.constant 1.000000e+00 : f32
    %223 = vector.broadcast %cst_71 : f32 to vector<8x64xf32>
    %224 = arith.subf %222, %223 : vector<8x64xf32>
    %225 = vector.extract_strided_slice %217 {offsets = [0, 192], sizes = [8, 64], strides = [1, 1]} : vector<8x256xf32> to vector<8x64xf32>
    %226 = arith.mulf %219, %181 : vector<8x64xf32>
    %227 = arith.mulf %218, %224 : vector<8x64xf32>
    %228 = arith.addf %226, %227 : vector<8x64xf32>
    %229 = math.tanh %228 : vector<8x64xf32>
    %230 = arith.mulf %225, %229 : vector<8x64xf32>
    %cst_72 = arith.constant dense<0.000000e+00> : vector<8x256xf32>
    %231 = tpu.matmul %230, %8, %cst_72 {dimension_numbers = #tpu.dot_dimension_numbers<[1], [0], [0], [1], [0, 0, 1, 1], [], []>} : vector<8x64xf32>, vector<64x256xf32>, vector<8x256xf32> -> vector<8x256xf32>
    %232 = arith.addf %231, %210 : vector<8x256xf32>
    %233 = arith.negf %232 : vector<8x256xf32>
    %234 = math.exp %233 : vector<8x256xf32>
    %cst_73 = arith.constant 1.000000e+00 : f32
    %235 = vector.broadcast %cst_73 : f32 to vector<8x256xf32>
    %236 = arith.addf %235, %234 : vector<8x256xf32>
    %237 = arith.divf %235, %236 : vector<8x256xf32>
    %238 = vector.extract_strided_slice %237 {offsets = [0, 0], sizes = [8, 64], strides = [1, 1]} : vector<8x256xf32> to vector<8x64xf32>
    %239 = vector.extract_strided_slice %237 {offsets = [0, 64], sizes = [8, 64], strides = [1, 1]} : vector<8x256xf32> to vector<8x64xf32>
    %240 = vector.extract_strided_slice %237 {offsets = [0, 128], sizes = [8, 64], strides = [1, 1]} : vector<8x256xf32> to vector<8x64xf32>
    %cst_74 = arith.constant 2.000000e+00 : f32
    %241 = vector.broadcast %cst_74 : f32 to vector<8x64xf32>
    %242 = arith.mulf %241, %240 : vector<8x64xf32>
    %cst_75 = arith.constant 1.000000e+00 : f32
    %243 = vector.broadcast %cst_75 : f32 to vector<8x64xf32>
    %244 = arith.subf %242, %243 : vector<8x64xf32>
    %245 = vector.extract_strided_slice %237 {offsets = [0, 192], sizes = [8, 64], strides = [1, 1]} : vector<8x256xf32> to vector<8x64xf32>
    %246 = arith.mulf %239, %201 : vector<8x64xf32>
    %247 = arith.mulf %238, %244 : vector<8x64xf32>
    %248 = arith.addf %246, %247 : vector<8x64xf32>
    %249 = math.tanh %248 : vector<8x64xf32>
    %250 = arith.mulf %245, %249 : vector<8x64xf32>
    %c4 = arith.constant 4 : index
    %c0_76 = arith.constant 0 : index
    %c0_77 = arith.constant 0 : index
    %251 = vector.load %arg4[%c4, %c0_76, %c0_77] : memref<8x8x64xf32, #tpu.memory_space<vmem>>, vector<1x8x64xf32>
    %252 = vector.shape_cast %251 : vector<1x8x64xf32> to vector<8x64xf32>
    %253 = vector.shape_cast %250 : vector<8x64xf32> to vector<1x8x64xf32>
    tpu.vector_store %arg4[%c4, %c0_76, %c0_77], %253 {strides = array<i32>} : memref<8x8x64xf32, #tpu.memory_space<vmem>>, vector<1x8x64xf32>,
    %cst_78 = arith.constant dense<0.000000e+00> : vector<8x256xf32>
    %254 = tpu.matmul %230, %10, %cst_78 {dimension_numbers = #tpu.dot_dimension_numbers<[1], [0], [0], [1], [0, 0, 1, 1], [], []>} : vector<8x64xf32>, vector<64x256xf32>, vector<8x256xf32> -> vector<8x256xf32>
    %255 = arith.addf %254, %16 : vector<8x256xf32>
    %cst_79 = arith.constant dense<0.000000e+00> : vector<8x256xf32>
    %256 = tpu.matmul %250, %12, %cst_79 {dimension_numbers = #tpu.dot_dimension_numbers<[1], [0], [0], [1], [0, 0, 1, 1], [], []>} : vector<8x64xf32>, vector<64x256xf32>, vector<8x256xf32> -> vector<8x256xf32>
    %257 = arith.addf %256, %20 : vector<8x256xf32>
    %cst_80 = arith.constant dense<0.000000e+00> : vector<8x256xf32>
    %258 = tpu.matmul %250, %6, %cst_80 {dimension_numbers = #tpu.dot_dimension_numbers<[1], [0], [0], [1], [0, 0, 1, 1], [], []>} : vector<8x64xf32>, vector<64x256xf32>, vector<8x256xf32> -> vector<8x256xf32>
    %259 = arith.addf %258, %255 : vector<8x256xf32>
    %260 = arith.negf %259 : vector<8x256xf32>
    %261 = math.exp %260 : vector<8x256xf32>
    %cst_81 = arith.constant 1.000000e+00 : f32
    %262 = vector.broadcast %cst_81 : f32 to vector<8x256xf32>
    %263 = arith.addf %262, %261 : vector<8x256xf32>
    %264 = arith.divf %262, %263 : vector<8x256xf32>
    %265 = vector.extract_strided_slice %264 {offsets = [0, 0], sizes = [8, 64], strides = [1, 1]} : vector<8x256xf32> to vector<8x64xf32>
    %266 = vector.extract_strided_slice %264 {offsets = [0, 64], sizes = [8, 64], strides = [1, 1]} : vector<8x256xf32> to vector<8x64xf32>
    %267 = vector.extract_strided_slice %264 {offsets = [0, 128], sizes = [8, 64], strides = [1, 1]} : vector<8x256xf32> to vector<8x64xf32>
    %cst_82 = arith.constant 2.000000e+00 : f32
    %268 = vector.broadcast %cst_82 : f32 to vector<8x64xf32>
    %269 = arith.mulf %268, %267 : vector<8x64xf32>
    %cst_83 = arith.constant 1.000000e+00 : f32
    %270 = vector.broadcast %cst_83 : f32 to vector<8x64xf32>
    %271 = arith.subf %269, %270 : vector<8x64xf32>
    %272 = vector.extract_strided_slice %264 {offsets = [0, 192], sizes = [8, 64], strides = [1, 1]} : vector<8x256xf32> to vector<8x64xf32>
    %273 = arith.mulf %266, %228 : vector<8x64xf32>
    %274 = arith.mulf %265, %271 : vector<8x64xf32>
    %275 = arith.addf %273, %274 : vector<8x64xf32>
    %276 = math.tanh %275 : vector<8x64xf32>
    %277 = arith.mulf %272, %276 : vector<8x64xf32>
    %cst_84 = arith.constant dense<0.000000e+00> : vector<8x256xf32>
    %278 = tpu.matmul %277, %8, %cst_84 {dimension_numbers = #tpu.dot_dimension_numbers<[1], [0], [0], [1], [0, 0, 1, 1], [], []>} : vector<8x64xf32>, vector<64x256xf32>, vector<8x256xf32> -> vector<8x256xf32>
    %279 = arith.addf %278, %257 : vector<8x256xf32>
    %280 = arith.negf %279 : vector<8x256xf32>
    %281 = math.exp %280 : vector<8x256xf32>
    %cst_85 = arith.constant 1.000000e+00 : f32
    %282 = vector.broadcast %cst_85 : f32 to vector<8x256xf32>
    %283 = arith.addf %282, %281 : vector<8x256xf32>
    %284 = arith.divf %282, %283 : vector<8x256xf32>
    %285 = vector.extract_strided_slice %284 {offsets = [0, 0], sizes = [8, 64], strides = [1, 1]} : vector<8x256xf32> to vector<8x64xf32>
    %286 = vector.extract_strided_slice %284 {offsets = [0, 64], sizes = [8, 64], strides = [1, 1]} : vector<8x256xf32> to vector<8x64xf32>
    %287 = vector.extract_strided_slice %284 {offsets = [0, 128], sizes = [8, 64], strides = [1, 1]} : vector<8x256xf32> to vector<8x64xf32>
    %cst_86 = arith.constant 2.000000e+00 : f32
    %288 = vector.broadcast %cst_86 : f32 to vector<8x64xf32>
    %289 = arith.mulf %288, %287 : vector<8x64xf32>
    %cst_87 = arith.constant 1.000000e+00 : f32
    %290 = vector.broadcast %cst_87 : f32 to vector<8x64xf32>
    %291 = arith.subf %289, %290 : vector<8x64xf32>
    %292 = vector.extract_strided_slice %284 {offsets = [0, 192], sizes = [8, 64], strides = [1, 1]} : vector<8x256xf32> to vector<8x64xf32>
    %293 = arith.mulf %286, %248 : vector<8x64xf32>
    %294 = arith.mulf %285, %291 : vector<8x64xf32>
    %295 = arith.addf %293, %294 : vector<8x64xf32>
    %296 = math.tanh %295 : vector<8x64xf32>
    %297 = arith.mulf %292, %296 : vector<8x64xf32>
    %c5 = arith.constant 5 : index
    %c0_88 = arith.constant 0 : index
    %c0_89 = arith.constant 0 : index
    %298 = vector.load %arg4[%c5, %c0_88, %c0_89] : memref<8x8x64xf32, #tpu.memory_space<vmem>>, vector<1x8x64xf32>
    %299 = vector.shape_cast %298 : vector<1x8x64xf32> to vector<8x64xf32>
    %300 = vector.shape_cast %297 : vector<8x64xf32> to vector<1x8x64xf32>
    tpu.vector_store %arg4[%c5, %c0_88, %c0_89], %300 {strides = array<i32>} : memref<8x8x64xf32, #tpu.memory_space<vmem>>, vector<1x8x64xf32>,
    %cst_90 = arith.constant dense<0.000000e+00> : vector<8x256xf32>
    %301 = tpu.matmul %277, %10, %cst_90 {dimension_numbers = #tpu.dot_dimension_numbers<[1], [0], [0], [1], [0, 0, 1, 1], [], []>} : vector<8x64xf32>, vector<64x256xf32>, vector<8x256xf32> -> vector<8x256xf32>
    %302 = arith.addf %301, %16 : vector<8x256xf32>
    %cst_91 = arith.constant dense<0.000000e+00> : vector<8x256xf32>
    %303 = tpu.matmul %297, %12, %cst_91 {dimension_numbers = #tpu.dot_dimension_numbers<[1], [0], [0], [1], [0, 0, 1, 1], [], []>} : vector<8x64xf32>, vector<64x256xf32>, vector<8x256xf32> -> vector<8x256xf32>
    %304 = arith.addf %303, %20 : vector<8x256xf32>
    %cst_92 = arith.constant dense<0.000000e+00> : vector<8x256xf32>
    %305 = tpu.matmul %297, %6, %cst_92 {dimension_numbers = #tpu.dot_dimension_numbers<[1], [0], [0], [1], [0, 0, 1, 1], [], []>} : vector<8x64xf32>, vector<64x256xf32>, vector<8x256xf32> -> vector<8x256xf32>
    %306 = arith.addf %305, %302 : vector<8x256xf32>
    %307 = arith.negf %306 : vector<8x256xf32>
    %308 = math.exp %307 : vector<8x256xf32>
    %cst_93 = arith.constant 1.000000e+00 : f32
    %309 = vector.broadcast %cst_93 : f32 to vector<8x256xf32>
    %310 = arith.addf %309, %308 : vector<8x256xf32>
    %311 = arith.divf %309, %310 : vector<8x256xf32>
    %312 = vector.extract_strided_slice %311 {offsets = [0, 0], sizes = [8, 64], strides = [1, 1]} : vector<8x256xf32> to vector<8x64xf32>
    %313 = vector.extract_strided_slice %311 {offsets = [0, 64], sizes = [8, 64], strides = [1, 1]} : vector<8x256xf32> to vector<8x64xf32>
    %314 = vector.extract_strided_slice %311 {offsets = [0, 128], sizes = [8, 64], strides = [1, 1]} : vector<8x256xf32> to vector<8x64xf32>
    %cst_94 = arith.constant 2.000000e+00 : f32
    %315 = vector.broadcast %cst_94 : f32 to vector<8x64xf32>
    %316 = arith.mulf %315, %314 : vector<8x64xf32>
    %cst_95 = arith.constant 1.000000e+00 : f32
    %317 = vector.broadcast %cst_95 : f32 to vector<8x64xf32>
    %318 = arith.subf %316, %317 : vector<8x64xf32>
    %319 = vector.extract_strided_slice %311 {offsets = [0, 192], sizes = [8, 64], strides = [1, 1]} : vector<8x256xf32> to vector<8x64xf32>
    %320 = arith.mulf %313, %275 : vector<8x64xf32>
    %321 = arith.mulf %312, %318 : vector<8x64xf32>
    %322 = arith.addf %320, %321 : vector<8x64xf32>
    %323 = math.tanh %322 : vector<8x64xf32>
    %324 = arith.mulf %319, %323 : vector<8x64xf32>
    %cst_96 = arith.constant dense<0.000000e+00> : vector<8x256xf32>
    %325 = tpu.matmul %324, %8, %cst_96 {dimension_numbers = #tpu.dot_dimension_numbers<[1], [0], [0], [1], [0, 0, 1, 1], [], []>} : vector<8x64xf32>, vector<64x256xf32>, vector<8x256xf32> -> vector<8x256xf32>
    %326 = arith.addf %325, %304 : vector<8x256xf32>
    %327 = arith.negf %326 : vector<8x256xf32>
    %328 = math.exp %327 : vector<8x256xf32>
    %cst_97 = arith.constant 1.000000e+00 : f32
    %329 = vector.broadcast %cst_97 : f32 to vector<8x256xf32>
    %330 = arith.addf %329, %328 : vector<8x256xf32>
    %331 = arith.divf %329, %330 : vector<8x256xf32>
    %332 = vector.extract_strided_slice %331 {offsets = [0, 0], sizes = [8, 64], strides = [1, 1]} : vector<8x256xf32> to vector<8x64xf32>
    %333 = vector.extract_strided_slice %331 {offsets = [0, 64], sizes = [8, 64], strides = [1, 1]} : vector<8x256xf32> to vector<8x64xf32>
    %334 = vector.extract_strided_slice %331 {offsets = [0, 128], sizes = [8, 64], strides = [1, 1]} : vector<8x256xf32> to vector<8x64xf32>
    %cst_98 = arith.constant 2.000000e+00 : f32
    %335 = vector.broadcast %cst_98 : f32 to vector<8x64xf32>
    %336 = arith.mulf %335, %334 : vector<8x64xf32>
    %cst_99 = arith.constant 1.000000e+00 : f32
    %337 = vector.broadcast %cst_99 : f32 to vector<8x64xf32>
    %338 = arith.subf %336, %337 : vector<8x64xf32>
    %339 = vector.extract_strided_slice %331 {offsets = [0, 192], sizes = [8, 64], strides = [1, 1]} : vector<8x256xf32> to vector<8x64xf32>
    %340 = arith.mulf %333, %295 : vector<8x64xf32>
    %341 = arith.mulf %332, %338 : vector<8x64xf32>
    %342 = arith.addf %340, %341 : vector<8x64xf32>
    %343 = math.tanh %342 : vector<8x64xf32>
    %344 = arith.mulf %339, %343 : vector<8x64xf32>
    %c6 = arith.constant 6 : index
    %c0_100 = arith.constant 0 : index
    %c0_101 = arith.constant 0 : index
    %345 = vector.load %arg4[%c6, %c0_100, %c0_101] : memref<8x8x64xf32, #tpu.memory_space<vmem>>, vector<1x8x64xf32>
    %346 = vector.shape_cast %345 : vector<1x8x64xf32> to vector<8x64xf32>
    %347 = vector.shape_cast %344 : vector<8x64xf32> to vector<1x8x64xf32>
    tpu.vector_store %arg4[%c6, %c0_100, %c0_101], %347 {strides = array<i32>} : memref<8x8x64xf32, #tpu.memory_space<vmem>>, vector<1x8x64xf32>,
    %cst_102 = arith.constant dense<0.000000e+00> : vector<8x256xf32>
    %348 = tpu.matmul %324, %10, %cst_102 {dimension_numbers = #tpu.dot_dimension_numbers<[1], [0], [0], [1], [0, 0, 1, 1], [], []>} : vector<8x64xf32>, vector<64x256xf32>, vector<8x256xf32> -> vector<8x256xf32>
    %349 = arith.addf %348, %16 : vector<8x256xf32>
    %cst_103 = arith.constant dense<0.000000e+00> : vector<8x256xf32>
    %350 = tpu.matmul %344, %12, %cst_103 {dimension_numbers = #tpu.dot_dimension_numbers<[1], [0], [0], [1], [0, 0, 1, 1], [], []>} : vector<8x64xf32>, vector<64x256xf32>, vector<8x256xf32> -> vector<8x256xf32>
    %351 = arith.addf %350, %20 : vector<8x256xf32>
    %cst_104 = arith.constant dense<0.000000e+00> : vector<8x256xf32>
    %352 = tpu.matmul %344, %6, %cst_104 {dimension_numbers = #tpu.dot_dimension_numbers<[1], [0], [0], [1], [0, 0, 1, 1], [], []>} : vector<8x64xf32>, vector<64x256xf32>, vector<8x256xf32> -> vector<8x256xf32>
    %353 = arith.addf %352, %349 : vector<8x256xf32>
    %354 = arith.negf %353 : vector<8x256xf32>
    %355 = math.exp %354 : vector<8x256xf32>
    %cst_105 = arith.constant 1.000000e+00 : f32
    %356 = vector.broadcast %cst_105 : f32 to vector<8x256xf32>
    %357 = arith.addf %356, %355 : vector<8x256xf32>
    %358 = arith.divf %356, %357 : vector<8x256xf32>
    %359 = vector.extract_strided_slice %358 {offsets = [0, 0], sizes = [8, 64], strides = [1, 1]} : vector<8x256xf32> to vector<8x64xf32>
    %360 = vector.extract_strided_slice %358 {offsets = [0, 64], sizes = [8, 64], strides = [1, 1]} : vector<8x256xf32> to vector<8x64xf32>
    %361 = vector.extract_strided_slice %358 {offsets = [0, 128], sizes = [8, 64], strides = [1, 1]} : vector<8x256xf32> to vector<8x64xf32>
    %cst_106 = arith.constant 2.000000e+00 : f32
    %362 = vector.broadcast %cst_106 : f32 to vector<8x64xf32>
    %363 = arith.mulf %362, %361 : vector<8x64xf32>
    %cst_107 = arith.constant 1.000000e+00 : f32
    %364 = vector.broadcast %cst_107 : f32 to vector<8x64xf32>
    %365 = arith.subf %363, %364 : vector<8x64xf32>
    %366 = vector.extract_strided_slice %358 {offsets = [0, 192], sizes = [8, 64], strides = [1, 1]} : vector<8x256xf32> to vector<8x64xf32>
    %367 = arith.mulf %360, %322 : vector<8x64xf32>
    %368 = arith.mulf %359, %365 : vector<8x64xf32>
    %369 = arith.addf %367, %368 : vector<8x64xf32>
    %370 = math.tanh %369 : vector<8x64xf32>
    %371 = arith.mulf %366, %370 : vector<8x64xf32>
    %cst_108 = arith.constant dense<0.000000e+00> : vector<8x256xf32>
    %372 = tpu.matmul %371, %8, %cst_108 {dimension_numbers = #tpu.dot_dimension_numbers<[1], [0], [0], [1], [0, 0, 1, 1], [], []>} : vector<8x64xf32>, vector<64x256xf32>, vector<8x256xf32> -> vector<8x256xf32>
    %373 = arith.addf %372, %351 : vector<8x256xf32>
    %374 = arith.negf %373 : vector<8x256xf32>
    %375 = math.exp %374 : vector<8x256xf32>
    %cst_109 = arith.constant 1.000000e+00 : f32
    %376 = vector.broadcast %cst_109 : f32 to vector<8x256xf32>
    %377 = arith.addf %376, %375 : vector<8x256xf32>
    %378 = arith.divf %376, %377 : vector<8x256xf32>
    %379 = vector.extract_strided_slice %378 {offsets = [0, 0], sizes = [8, 64], strides = [1, 1]} : vector<8x256xf32> to vector<8x64xf32>
    %380 = vector.extract_strided_slice %378 {offsets = [0, 64], sizes = [8, 64], strides = [1, 1]} : vector<8x256xf32> to vector<8x64xf32>
    %381 = vector.extract_strided_slice %378 {offsets = [0, 128], sizes = [8, 64], strides = [1, 1]} : vector<8x256xf32> to vector<8x64xf32>
    %cst_110 = arith.constant 2.000000e+00 : f32
    %382 = vector.broadcast %cst_110 : f32 to vector<8x64xf32>
    %383 = arith.mulf %382, %381 : vector<8x64xf32>
    %cst_111 = arith.constant 1.000000e+00 : f32
    %384 = vector.broadcast %cst_111 : f32 to vector<8x64xf32>
    %385 = arith.subf %383, %384 : vector<8x64xf32>
    %386 = vector.extract_strided_slice %378 {offsets = [0, 192], sizes = [8, 64], strides = [1, 1]} : vector<8x256xf32> to vector<8x64xf32>
    %387 = arith.mulf %380, %342 : vector<8x64xf32>
    %388 = arith.mulf %379, %385 : vector<8x64xf32>
    %389 = arith.addf %387, %388 : vector<8x64xf32>
    %390 = math.tanh %389 : vector<8x64xf32>
    %391 = arith.mulf %386, %390 : vector<8x64xf32>
    %c7 = arith.constant 7 : index
    %c0_112 = arith.constant 0 : index
    %c0_113 = arith.constant 0 : index
    %392 = vector.load %arg4[%c7, %c0_112, %c0_113] : memref<8x8x64xf32, #tpu.memory_space<vmem>>, vector<1x8x64xf32>
    %393 = vector.shape_cast %392 : vector<1x8x64xf32> to vector<8x64xf32>
    %394 = vector.shape_cast %391 : vector<8x64xf32> to vector<1x8x64xf32>
    tpu.vector_store %arg4[%c7, %c0_112, %c0_113], %394 {strides = array<i32>} : memref<8x8x64xf32, #tpu.memory_space<vmem>>, vector<1x8x64xf32>,
    return
  }
}

</mosaic_0001>

<llo_original>
// kernel: signal_decoder_forward.1
$region0: #{signal_decoder_forward.1}
  #allocation0 [shape = 'u32[]', space=smem, size = 0x4, offset = 0x4, fixed_abs, tag = 'smem constant byte address 0x4 - core index']
  #allocation1 [shape = 'u32[144,128]{1,0:T(1,128)}', space=vmem, size = 0x12000, scoped, tag = 'internal scratch']
  %s0 = inlined_call_operand.hbm [shape: f32[8,256], index: 0, kind: input, shape index: {}]
  %s1 = inlined_call_operand.hbm [shape: f32[2,64,256], index: 1, kind: input, shape index: {}]
  %s2 = inlined_call_operand.hbm [shape: f32[2,64,256], index: 2, kind: input, shape index: {}]
  %s3 = inlined_call_operand.vmem [shape: f32[2,1,256], index: 3, kind: input, shape index: {}]
  %s4 = inlined_call_operand.vmem [shape: f32[8,8,64], index: 4, kind: output, shape index: {}]
  %s5 = sld [smem:[#allocation0]]
  $region38: #{signal_decoder_forward.1} parent=0
    _
  %s7 = ssub.s32 1, %s5
  %s8 = scalar_select 0, %s7, %s5
  $region1: #{signal_decoder_forward.1} parent=0
    #allocation2 [shape = 'u8[8192]{0}', space=vmem, size = 0x2000, scoped, tag = 'input window, operand 0, single buffered']
    #allocation3 [shape = 's32[1]{0}', space=sflag, size = 0x4, scoped, tag = 'scoped memory for signal_decoder_forward.1']
    #allocation4 [shape = 'u8[131072]{0}', space=vmem, size = 0x20000, scoped, tag = 'input window, operand 1, single buffered']
    #allocation5 [shape = 's32[1]{0}', space=sflag, size = 0x4, scoped, tag = 'scoped memory for signal_decoder_forward.1']
    #allocation6 [shape = 'u8[131072]{0}', space=vmem, size = 0x20000, scoped, tag = 'input window, operand 2, single buffered']
    %9 = vsyncpa [#allocation3], 0
    %10 = vsyncpa [#allocation5], 0
    // Predicated region
    $region2: #{signal_decoder_forward.1} parent=1 // pred_check
      _
    $region3: #{signal_decoder_forward.1} parent=1 // pred_check_branch
      %12 = sbr.rel (0) target = $region5
    $region4: #{signal_decoder_forward.1} parent=1 // pred_region
      %s14 = ssub.s32 256, 256
      %15 = vsyncadd [#allocation3], %s14
      %s17 = sshll.u32 [#allocation2], 4
      %s18 = int_to_ptr.vmem [resolvable:$true] %s17
      %20 = dma.hbm_to_vmem [thread:$0]  %s0, 256, %s18, [#allocation3]
    $region5: #{signal_decoder_forward.1} parent=1 // pred_fallthru
      _
    // Predicated region
    $region6: #{signal_decoder_forward.1} parent=1 // pred_check
      _
    $region7: #{signal_decoder_forward.1} parent=1 // pred_check_branch
      %22 = sbr.rel (0) target = $region9
    $region8: #{signal_decoder_forward.1} parent=1 // pred_region
      %s24 = ssub.s32 4096, 4096
      %25 = vsyncadd [#allocation5], %s24
      %s26 = sshll.u32 [#allocation4], 4
      %s27 = int_to_ptr.vmem [resolvable:$true] %s26
      %32 = dma.hbm_to_vmem [thread:$0]  %s1, 4096, %s27, [#allocation5], 256, 256, 16
    $region9: #{signal_decoder_forward.1} parent=1 // pred_fallthru
      _
    // Predicated region
    $region10: #{signal_decoder_forward.1} parent=1 // pred_check
      _
    $region11: #{signal_decoder_forward.1} parent=1 // pred_check_branch
      %34 = sbr.rel (0) target = $region13
    $region12: #{signal_decoder_forward.1} parent=1 // pred_region
      %s36 = ssub.s32 4096, 4096
      %37 = vsyncadd [#allocation5], %s36
      %s38 = sshll.u32 [#allocation6], 4
      %s39 = int_to_ptr.vmem [resolvable:$true] %s38
      %44 = dma.hbm_to_vmem [thread:$0]  %s2, 4096, %s39, [#allocation5], 256, 256, 16
    $region13: #{signal_decoder_forward.1} parent=1 // pred_fallthru
      _
    // Predicated region
    $region14: #{signal_decoder_forward.1} parent=1 // pred_check
      _
    $region15: #{signal_decoder_forward.1} parent=1 // pred_check_branch
      %46 = sbr.rel (0) target = $region17
    $region16: #{signal_decoder_forward.1} parent=1 // pred_region
      _
    $region17: #{signal_decoder_forward.1} parent=1 // pred_fallthru
      _
    // Predicated region
    $region18: #{signal_decoder_forward.1} parent=1 // pred_check
      _
    $region19: #{signal_decoder_forward.1} parent=1 // pred_check_branch
      %48 = sbr.rel (0) target = $region21
    $region20: #{signal_decoder_forward.1} parent=1 // pred_region
      %49 = dma.done [#allocation3], 256
    $region21: #{signal_decoder_forward.1} parent=1 // pred_fallthru
      _
    // Predicated region
    $region22: #{signal_decoder_forward.1} parent=1 // pred_check
      _
    $region23: #{signal_decoder_forward.1} parent=1 // pred_check_branch
      %51 = sbr.rel (0) target = $region25
    $region24: #{signal_decoder_forward.1} parent=1 // pred_region
      %52 = dma.done [#allocation5], 4096
    $region25: #{signal_decoder_forward.1} parent=1 // pred_fallthru
      _
    // Predicated region
    $region26: #{signal_decoder_forward.1} parent=1 // pred_check
      _
    $region27: #{signal_decoder_forward.1} parent=1 // pred_check_branch
      %54 = sbr.rel (0) target = $region29
    $region28: #{signal_decoder_forward.1} parent=1 // pred_region
      %55 = dma.done [#allocation5], 4096
    $region29: #{signal_decoder_forward.1} parent=1 // pred_fallthru
      _
    %v56 = vld [vmem:[#allocation2] sm:$0xff]
    %v57 = vld [vmem:[#allocation2 + $0x8] sm:$0xff]
    %v58 = vld [vmem:[#allocation4] sm:$0xff]
    %v59 = vld [vmem:[#allocation4 + $0x8] sm:$0xff]
    %v60 = vld [vmem:[#allocation4 + $0x10] sm:$0xff]
    %v61 = vld [vmem:[#allocation4 + $0x18] sm:$0xff]
    %v62 = vld [vmem:[#allocation4 + $0x20] sm:$0xff]
    %v63 = vld [vmem:[#allocation4 + $0x28] sm:$0xff]
    %v64 = vld [vmem:[#allocation4 + $0x30] sm:$0xff]
    %v65 = vld [vmem:[#allocation4 + $0x38] sm:$0xff]
    %v66 = vld [vmem:[#allocation4 + $0x40] sm:$0xff]
    %v67 = vld [vmem:[#allocation4 + $0x48] sm:$0xff]
    %v68 = vld [vmem:[#allocation4 + $0x50] sm:$0xff]
    %v69 = vld [vmem:[#allocation4 + $0x58] sm:$0xff]
    %v70 = vld [vmem:[#allocation4 + $0x60] sm:$0xff]
    %v71 = vld [vmem:[#allocation4 + $0x68] sm:$0xff]
    %v72 = vld [vmem:[#allocation4 + $0x70] sm:$0xff]
    %v73 = vld [vmem:[#allocation4 + $0x78] sm:$0xff]
    %s74 = scalar_lea.vmem [#allocation4], 128
    %v75 = vld [vmem:[%s74] sm:$0xff]
    %v76 = vld [vmem:[%s74 + $0x8] sm:$0xff]
    %v77 = vld [vmem:[%s74 + $0x10] sm:$0xff]
    %v78 = vld [vmem:[%s74 + $0x18] sm:$0xff]
    %v79 = vld [vmem:[%s74 + $0x20] sm:$0xff]
    %v80 = vld [vmem:[%s74 + $0x28] sm:$0xff]
    %v81 = vld [vmem:[%s74 + $0x30] sm:$0xff]
    %v82 = vld [vmem:[%s74 + $0x38] sm:$0xff]
    %v83 = vld [vmem:[%s74 + $0x40] sm:$0xff]
    %v84 = vld [vmem:[%s74 + $0x48] sm:$0xff]
    %v85 = vld [vmem:[%s74 + $0x50] sm:$0xff]
    %v86 = vld [vmem:[%s74 + $0x58] sm:$0xff]
    %v87 = vld [vmem:[%s74 + $0x60] sm:$0xff]
    %v88 = vld [vmem:[%s74 + $0x68] sm:$0xff]
    %v89 = vld [vmem:[%s74 + $0x70] sm:$0xff]
    %v90 = vld [vmem:[%s74 + $0x78] sm:$0xff]
    %v91 = vld [vmem:[#allocation6] sm:$0xff]
    %v92 = vld [vmem:[#allocation6 + $0x8] sm:$0xff]
    %v93 = vld [vmem:[#allocation6 + $0x10] sm:$0xff]
    %v94 = vld [vmem:[#allocation6 + $0x18] sm:$0xff]
    %v95 = vld [vmem:[#allocation6 + $0x20] sm:$0xff]
    %v96 = vld [vmem:[#allocation6 + $0x28] sm:$0xff]
    %v97 = vld [vmem:[#allocation6 + $0x30] sm:$0xff]
    %v98 = vld [vmem:[#allocation6 + $0x38] sm:$0xff]
    %v99 = vld [vmem:[#allocation6 + $0x40] sm:$0xff]
    %v100 = vld [vmem:[#allocation6 + $0x48] sm:$0xff]
    %v101 = vld [vmem:[#allocation6 + $0x50] sm:$0xff]
    %v102 = vld [vmem:[#allocation6 + $0x58] sm:$0xff]
    %v103 = vld [vmem:[#allocation6 + $0x60] sm:$0xff]
    %v104 = vld [vmem:[#allocation6 + $0x68] sm:$0xff]
    %v105 = vld [vmem:[#allocation6 + $0x70] sm:$0xff]
    %v106 = vld [vmem:[#allocation6 + $0x78] sm:$0xff]
    %s107 = scalar_lea.vmem [#allocation6], 128
    %v108 = vld [vmem:[%s107] sm:$0xff]
    %v109 = vld [vmem:[%s107 + $0x8] sm:$0xff]
    %v110 = vld [vmem:[%s107 + $0x10] sm:$0xff]
    %v111 = vld [vmem:[%s107 + $0x18] sm:$0xff]
    %v112 = vld [vmem:[%s107 + $0x20] sm:$0xff]
    %v113 = vld [vmem:[%s107 + $0x28] sm:$0xff]
    %v114 = vld [vmem:[%s107 + $0x30] sm:$0xff]
    %v115 = vld [vmem:[%s107 + $0x38] sm:$0xff]
    %v116 = vld [vmem:[%s107 + $0x40] sm:$0xff]
    %v117 = vld [vmem:[%s107 + $0x48] sm:$0xff]
    %v118 = vld [vmem:[%s107 + $0x50] sm:$0xff]
    %v119 = vld [vmem:[%s107 + $0x58] sm:$0xff]
    %v120 = vld [vmem:[%s107 + $0x60] sm:$0xff]
    %v121 = vld [vmem:[%s107 + $0x68] sm:$0xff]
    %v122 = vld [vmem:[%s107 + $0x70] sm:$0xff]
    %v123 = vld [vmem:[%s107 + $0x78] sm:$0xff]
    %v124 = vld [vmem:[%s3] sm:$0x3]
    %v126 = vlaneseq
    %v127 = vshrl.u32 %v126, 7
    %v128 = vsub.s32 0, %v127
    %v129 = vrot.slane %v124, %v128
    %v130 = vlaneseq
    %v131 = vshrl.u32 %v130, 7
    %v132 = vsub.s32 1, %v131
    %v133 = vrot.slane %v124, %v132
    %s136 = scalar_lea.vmem %s3, 2
    %v137 = vld [vmem:[%s136] sm:$0x3]
    %v139 = vlaneseq
    %v140 = vshrl.u32 %v139, 7
    %v141 = vsub.s32 0, %v140
    %v142 = vrot.slane %v137, %v141
    %v143 = vlaneseq
    %v144 = vshrl.u32 %v143, 7
    %v145 = vsub.s32 1, %v144
    %v146 = vrot.slane %v137, %v145
    %vm149 = vcmask 523264
    %v151 = vsel %vm149, %v56, 0
    %153 = vmatprep.subr.mxu0 0.0
    %154 = vmatpush1.msra.mxu0 0.0
    %155 = vmatprep.subr.mxu0 0.0
    %156 = vmatpush1.msra.mxu0 0.0
    %157 = vmatprep.subr.mxu0 0.0
    %158 = vmatpush1.msra.mxu0 0.0
    %159 = vmatprep.subr.mxu0 0.0
    %160 = vmatpush1.msra.mxu0 0.0
    %161 = vmatprep.subr.mxu0 0.0
    %162 = vmatpush1.msra.mxu0 0.0
    %163 = vmatprep.subr.mxu0 0.0
    %164 = vmatpush1.msra.mxu0 0.0
    %165 = vmatprep.subr.mxu0 0.0
    %166 = vmatpush1.msra.mxu0 0.0
    %167 = vmatprep.subr.mxu0 0.0
    %168 = vmatpush1.msra.mxu0 0.0
    %169 = vmatprep.subr.mxu0 %v106
    %170 = vmatpush1.msra.mxu0 %v105
    %171 = vmatprep.subr.mxu0 %v104
    %172 = vmatpush1.msra.mxu0 %v103
    %173 = vmatprep.subr.mxu0 %v102
    %174 = vmatpush1.msra.mxu0 %v101
    %175 = vmatprep.subr.mxu0 %v100
    %176 = vmatpush1.msra.mxu0 %v99
    %177 = vmatprep.subr.mxu0 %v98
    %178 = vmatpush1.msra.mxu0 %v97
    %179 = vmatprep.subr.mxu0 %v96
    %180 = vmatpush1.msra.mxu0 %v95
    %181 = vmatprep.subr.mxu0 %v94
    %182 = vmatpush1.msra.mxu0 %v93
    %183 = vmatprep.subr.mxu0 %v92
    %184 = vmatpush1.msra.mxu0 %v91
    %185 = vmatprep.subr.mxu0 0.0
    %186 = vmatpush2.msra.mxu0 0.0
    %187 = vmatprep.subr.mxu0 0.0
    %188 = vmatpush2.msra.mxu0 0.0
    %189 = vmatprep.subr.mxu0 0.0
    %190 = vmatpush2.msra.mxu0 0.0
    %191 = vmatprep.subr.mxu0 0.0
    %192 = vmatpush2.msra.mxu0 0.0
    %193 = vmatprep.subr.mxu0 0.0
    %194 = vmatpush2.msra.mxu0 0.0
    %195 = vmatprep.subr.mxu0 0.0
    %196 = vmatpush2.msra.mxu0 0.0
    %197 = vmatprep.subr.mxu0 0.0
    %198 = vmatpush2.msra.mxu0 0.0
    %199 = vmatprep.subr.mxu0 0.0
    %200 = vmatpush2.msra.mxu0 0.0
    %201 = vmatprep.subr.mxu0 0.0
    %202 = vmatpush2.msra.mxu0 0.0
    %203 = vmatprep.subr.mxu0 0.0
    %204 = vmatpush2.msra.mxu0 0.0
    %205 = vmatprep.subr.mxu0 0.0
    %206 = vmatpush2.msra.mxu0 0.0
    %207 = vmatprep.subr.mxu0 0.0
    %208 = vmatpush2.msra.mxu0 0.0
    %209 = vmatprep.subr.mxu0 0.0
    %210 = vmatpush2.msra.mxu0 0.0
    %211 = vmatprep.subr.mxu0 0.0
    %212 = vmatpush2.msra.mxu0 0.0
    %213 = vmatprep.subr.mxu0 0.0
    %214 = vmatpush2.msra.mxu0 0.0
    %215 = vmatprep.subr.mxu0 0.0
    %216 = vmatpush2.msra.mxu0 0.0
    %217 = vmatprep.mubr.f32.mxu0 0.0
    %218 = vmatmul.mubr.f32.gmra.mxu0 %v151
    %v219 = vpop.f32.mrf.mxu0
    %v220 = vadd.f32 %v129, %v219
    %v221 = vpop.f32.mrf.mxu0
    %v222 = vadd.f32 %v133, %v221
    %223 = vdwg.mxu0
    %224 = vrot.lane.b32.xlu0 %v56, 64
    %v225 = vpop.permute.xlu0 %224
    %v226 = vsel %vm149, %v225, 0
    %228 = vmatprep.subr.mxu0 0.0
    %229 = vmatpush1.msra.mxu0 0.0
    %230 = vmatprep.subr.mxu0 0.0
    %231 = vmatpush1.msra.mxu0 0.0
    %232 = vmatprep.subr.mxu0 0.0
    %233 = vmatpush1.msra.mxu0 0.0
    %234 = vmatprep.subr.mxu0 0.0
    %235 = vmatpush1.msra.mxu0 0.0
    %236 = vmatprep.subr.mxu0 0.0
    %237 = vmatpush1.msra.mxu0 0.0
    %238 = vmatprep.subr.mxu0 0.0
    %239 = vmatpush1.msra.mxu0 0.0
    %240 = vmatprep.subr.mxu0 0.0
    %241 = vmatpush1.msra.mxu0 0.0
    %242 = vmatprep.subr.mxu0 0.0
    %243 = vmatpush1.msra.mxu0 0.0
    %244 = vmatprep.subr.mxu0 %v123
    %245 = vmatpush1.msra.mxu0 %v122
    %246 = vmatprep.subr.mxu0 %v121
    %247 = vmatpush1.msra.mxu0 %v120
    %248 = vmatprep.subr.mxu0 %v119
    %249 = vmatpush1.msra.mxu0 %v118
    %250 = vmatprep.subr.mxu0 %v117
    %251 = vmatpush1.msra.mxu0 %v116
    %252 = vmatprep.subr.mxu0 %v115
    %253 = vmatpush1.msra.mxu0 %v114
    %254 = vmatprep.subr.mxu0 %v113
    %255 = vmatpush1.msra.mxu0 %v112
    %256 = vmatprep.subr.mxu0 %v111
    %257 = vmatpush1.msra.mxu0 %v110
    %258 = vmatprep.subr.mxu0 %v109
    %259 = vmatpush1.msra.mxu0 %v108
    %260 = vmatprep.subr.mxu0 0.0
    %261 = vmatpush2.msra.mxu0 0.0
    %262 = vmatprep.subr.mxu0 0.0
    %263 = vmatpush2.msra.mxu0 0.0
    %264 = vmatprep.subr.mxu0 0.0
    %265 = vmatpush2.msra.mxu0 0.0
    %266 = vmatprep.subr.mxu0 0.0
    %267 = vmatpush2.msra.mxu0 0.0
    %268 = vmatprep.subr.mxu0 0.0
    %269 = vmatpush2.msra.mxu0 0.0
    %270 = vmatprep.subr.mxu0 0.0
    %271 = vmatpush2.msra.mxu0 0.0
    %272 = vmatprep.subr.mxu0 0.0
    %273 = vmatpush2.msra.mxu0 0.0
    %274 = vmatprep.subr.mxu0 0.0
    %275 = vmatpush2.msra.mxu0 0.0
    %276 = vmatprep.subr.mxu0 0.0
    %277 = vmatpush2.msra.mxu0 0.0
    %278 = vmatprep.subr.mxu0 0.0
    %279 = vmatpush2.msra.mxu0 0.0
    %280 = vmatprep.subr.mxu0 0.0
    %281 = vmatpush2.msra.mxu0 0.0
    %282 = vmatprep.subr.mxu0 0.0
    %283 = vmatpush2.msra.mxu0 0.0
    %284 = vmatprep.subr.mxu0 0.0
    %285 = vmatpush2.msra.mxu0 0.0
    %286 = vmatprep.subr.mxu0 0.0
    %287 = vmatpush2.msra.mxu0 0.0
    %288 = vmatprep.subr.mxu0 0.0
    %289 = vmatpush2.msra.mxu0 0.0
    %290 = vmatprep.subr.mxu0 0.0
    %291 = vmatpush2.msra.mxu0 0.0
    %292 = vmatprep.mubr.f32.mxu0 0.0
    %293 = vmatmul.mubr.f32.gmra.mxu0 %v226
    %v294 = vpop.f32.mrf.mxu0
    %v295 = vadd.f32 %v142, %v294
    %v296 = vpop.f32.mrf.mxu0
    %v297 = vadd.f32 %v146, %v296
    %298 = vdwg.mxu0
    %v299 = vxor.u32 %v220, 2147483648
    %v300 = vxor.u32 %v222, 2147483648
    %v301 = vmul.f32 %v299, 1.442695
    %v302 = vpow.pop %v301
    %v303 = vmul.f32 %v300, 1.442695
    %v304 = vpow.pop %v303
    %v305 = vadd.f32 %v302, 1.0
    %v306 = vadd.f32 %v304, 1.0
    %v307 = vrcp.pop %v305
    %v308 = vmul.f32 1.0, %v307
    %v309 = vrcp.pop %v306
    %v310 = vmul.f32 1.0, %v309
    %v311 = vmul.f32 %v310, 2.0
    %v312 = vsub.f32 %v311, 1.0
    %314 = vrot.lane.b32.xlu0 %v57, 64
    %v315 = vpop.permute.xlu0 %314
    %v317 = vmul.f32 %v308, %v315
    %v318 = vmul.f32 %v308, %v312
    %320 = vrot.lane.b32.xlu0 %v318, 64
    %v321 = vpop.permute.xlu0 %320
    %v323 = vadd.f32 %v317, %v321
    %v324 = vtanh.pop %v323
    %v325 = vmul.f32 %v310, %v324
    %327 = vrot.lane.b32.xlu0 %v325, 64
    %v328 = vpop.permute.xlu0 %327
    %v329 = vsel %vm149, %v328, 0
    %331 = vmatprep.subr.mxu0 0.0
    %332 = vmatpush1.msra.mxu0 0.0
    %333 = vmatprep.subr.mxu0 0.0
    %334 = vmatpush1.msra.mxu0 0.0
    %335 = vmatprep.subr.mxu0 0.0
    %336 = vmatpush1.msra.mxu0 0.0
    %337 = vmatprep.subr.mxu0 0.0
    %338 = vmatpush1.msra.mxu0 0.0
    %339 = vmatprep.subr.mxu0 0.0
    %340 = vmatpush1.msra.mxu0 0.0
    %341 = vmatprep.subr.mxu0 0.0
    %342 = vmatpush1.msra.mxu0 0.0
    %343 = vmatprep.subr.mxu0 0.0
    %344 = vmatpush1.msra.mxu0 0.0
    %345 = vmatprep.subr.mxu0 0.0
    %346 = vmatpush1.msra.mxu0 0.0
    %347 = vmatprep.subr.mxu0 %v90
    %348 = vmatpush1.msra.mxu0 %v89
    %349 = vmatprep.subr.mxu0 %v88
    %350 = vmatpush1.msra.mxu0 %v87
    %351 = vmatprep.subr.mxu0 %v86
    %352 = vmatpush1.msra.mxu0 %v85
    %353 = vmatprep.subr.mxu0 %v84
    %354 = vmatpush1.msra.mxu0 %v83
    %355 = vmatprep.subr.mxu0 %v82
    %356 = vmatpush1.msra.mxu0 %v81
    %357 = vmatprep.subr.mxu0 %v80
    %358 = vmatpush1.msra.mxu0 %v79
    %359 = vmatprep.subr.mxu0 %v78
    %360 = vmatpush1.msra.mxu0 %v77
    %361 = vmatprep.subr.mxu0 %v76
    %362 = vmatpush1.msra.mxu0 %v75
    %363 = vmatprep.subr.mxu0 0.0
    %364 = vmatpush2.msra.mxu0 0.0
    %365 = vmatprep.subr.mxu0 0.0
    %366 = vmatpush2.msra.mxu0 0.0
    %367 = vmatprep.subr.mxu0 0.0
    %368 = vmatpush2.msra.mxu0 0.0
    %369 = vmatprep.subr.mxu0 0.0
    %370 = vmatpush2.msra.mxu0 0.0
    %371 = vmatprep.subr.mxu0 0.0
    %372 = vmatpush2.msra.mxu0 0.0
    %373 = vmatprep.subr.mxu0 0.0
    %374 = vmatpush2.msra.mxu0 0.0
    %375 = vmatprep.subr.mxu0 0.0
    %376 = vmatpush2.msra.mxu0 0.0
    %377 = vmatprep.subr.mxu0 0.0
    %378 = vmatpush2.msra.mxu0 0.0
    %379 = vmatprep.subr.mxu0 0.0
    %380 = vmatpush2.msra.mxu0 0.0
    %381 = vmatprep.subr.mxu0 0.0
    %382 = vmatpush2.msra.mxu0 0.0
    %383 = vmatprep.subr.mxu0 0.0
    %384 = vmatpush2.msra.mxu0 0.0
    %385 = vmatprep.subr.mxu0 0.0
    %386 = vmatpush2.msra.mxu0 0.0
    %387 = vmatprep.subr.mxu0 0.0
    %388 = vmatpush2.msra.mxu0 0.0
    %389 = vmatprep.subr.mxu0 0.0
    %390 = vmatpush2.msra.mxu0 0.0
    %391 = vmatprep.subr.mxu0 0.0
    %392 = vmatpush2.msra.mxu0 0.0
    %393 = vmatprep.subr.mxu0 0.0
    %394 = vmatpush2.msra.mxu0 0.0
    %395 = vmatprep.mubr.f32.mxu0 0.0
    %396 = vmatmul.mubr.f32.gmra.mxu0 %v329
    %v397 = vpop.f32.mrf.mxu0
    %v398 = vadd.f32 %v295, %v397
    %v399 = vpop.f32.mrf.mxu0
    %v400 = vadd.f32 %v297, %v399
    %401 = vdwg.mxu0
    %v402 = vxor.u32 %v398, 2147483648
    %v403 = vxor.u32 %v400, 2147483648
    %v404 = vmul.f32 %v402, 1.442695
    %v405 = vpow.pop %v404
    %v406 = vmul.f32 %v403, 1.442695
    %v407 = vpow.pop %v406
    %v408 = vadd.f32 %v405, 1.0
    %v409 = vadd.f32 %v407, 1.0
    %v410 = vrcp.pop %v408
    %v411 = vmul.f32 1.0, %v410
    %v412 = vrcp.pop %v409
    %v413 = vmul.f32 1.0, %v412
    %v414 = vmul.f32 %v413, 2.0
    %v415 = vsub.f32 %v414, 1.0
    %v416 = vmul.f32 %v411, %v57
    %v417 = vmul.f32 %v411, %v415
    %419 = vrot.lane.b32.xlu0 %v417, 64
    %v420 = vpop.permute.xlu0 %419
    %v422 = vadd.f32 %v416, %v420
    %v423 = vtanh.pop %v422
    %v424 = vmul.f32 %v413, %v423
    %426 = vrot.lane.b32.xlu0 %v424, 64
    %v427 = vpop.permute.xlu0 %426
    %429 = vst.msk [vmem:[%s4] sm:$0xff] %vm149, %v427
    %430 = vmatprep.subr.mxu0 0.0
    %431 = vmatpush1.msra.mxu0 0.0
    %432 = vmatprep.subr.mxu0 0.0
    %433 = vmatpush1.msra.mxu0 0.0
    %434 = vmatprep.subr.mxu0 0.0
    %435 = vmatpush1.msra.mxu0 0.0
    %436 = vmatprep.subr.mxu0 0.0
    %437 = vmatpush1.msra.mxu0 0.0
    %438 = vmatprep.subr.mxu0 0.0
    %439 = vmatpush1.msra.mxu0 0.0
    %440 = vmatprep.subr.mxu0 0.0
    %441 = vmatpush1.msra.mxu0 0.0
    %442 = vmatprep.subr.mxu0 0.0
    %443 = vmatpush1.msra.mxu0 0.0
    %444 = vmatprep.subr.mxu0 0.0
    %445 = vmatpush1.msra.mxu0 0.0
    %446 = vmatprep.subr.mxu0 %v106
    %447 = vmatpush1.msra.mxu0 %v105
    %448 = vmatprep.subr.mxu0 %v104
    %449 = vmatpush1.msra.mxu0 %v103
    %450 = vmatprep.subr.mxu0 %v102
    %451 = vmatpush1.msra.mxu0 %v101
    %452 = vmatprep.subr.mxu0 %v100
    %453 = vmatpush1.msra.mxu0 %v99
    %454 = vmatprep.subr.mxu0 %v98
    %455 = vmatpush1.msra.mxu0 %v97
    %456 = vmatprep.subr.mxu0 %v96
    %457 = vmatpush1.msra.mxu0 %v95
    %458 = vmatprep.subr.mxu0 %v94
    %459 = vmatpush1.msra.mxu0 %v93
    %460 = vmatprep.subr.mxu0 %v92
    %461 = vmatpush1.msra.mxu0 %v91
    %462 = vmatprep.subr.mxu0 0.0
    %463 = vmatpush2.msra.mxu0 0.0
    %464 = vmatprep.subr.mxu0 0.0
    %465 = vmatpush2.msra.mxu0 0.0
    %466 = vmatprep.subr.mxu0 0.0
    %467 = vmatpush2.msra.mxu0 0.0
    %468 = vmatprep.subr.mxu0 0.0
    %469 = vmatpush2.msra.mxu0 0.0
    %470 = vmatprep.subr.mxu0 0.0
    %471 = vmatpush2.msra.mxu0 0.0
    %472 = vmatprep.subr.mxu0 0.0
    %473 = vmatpush2.msra.mxu0 0.0
    %474 = vmatprep.subr.mxu0 0.0
    %475 = vmatpush2.msra.mxu0 0.0
    %476 = vmatprep.subr.mxu0 0.0
    %477 = vmatpush2.msra.mxu0 0.0
    %478 = vmatprep.subr.mxu0 0.0
    %479 = vmatpush2.msra.mxu0 0.0
    %480 = vmatprep.subr.mxu0 0.0
    %481 = vmatpush2.msra.mxu0 0.0
    %482 = vmatprep.subr.mxu0 0.0
    %483 = vmatpush2.msra.mxu0 0.0
    %484 = vmatprep.subr.mxu0 0.0
    %485 = vmatpush2.msra.mxu0 0.0
    %486 = vmatprep.subr.mxu0 0.0
    %487 = vmatpush2.msra.mxu0 0.0
    %488 = vmatprep.subr.mxu0 0.0
    %489 = vmatpush2.msra.mxu0 0.0
    %490 = vmatprep.subr.mxu0 0.0
    %491 = vmatpush2.msra.mxu0 0.0
    %492 = vmatprep.subr.mxu0 0.0
    %493 = vmatpush2.msra.mxu0 0.0
    %494 = vmatprep.mubr.f32.mxu0 0.0
    %495 = vmatmul.mubr.f32.gmra.mxu0 %v329
    %v496 = vpop.f32.mrf.mxu0
    %v497 = vadd.f32 %v129, %v496
    %v498 = vpop.f32.mrf.mxu0
    %v499 = vadd.f32 %v133, %v498
    %500 = vdwg.mxu0
    %v501 = vsel %vm149, %v427, 0
    %503 = vmatprep.subr.mxu0 0.0
    %504 = vmatpush1.msra.mxu0 0.0
    %505 = vmatprep.subr.mxu0 0.0
    %506 = vmatpush1.msra.mxu0 0.0
    %507 = vmatprep.subr.mxu0 0.0
    %508 = vmatpush1.msra.mxu0 0.0
    %509 = vmatprep.subr.mxu0 0.0
    %510 = vmatpush1.msra.mxu0 0.0
    %511 = vmatprep.subr.mxu0 0.0
    %512 = vmatpush1.msra.mxu0 0.0
    %513 = vmatprep.subr.mxu0 0.0
    %514 = vmatpush1.msra.mxu0 0.0
    %515 = vmatprep.subr.mxu0 0.0
    %516 = vmatpush1.msra.mxu0 0.0
    %517 = vmatprep.subr.mxu0 0.0
    %518 = vmatpush1.msra.mxu0 0.0
    %519 = vmatprep.subr.mxu0 %v123
    %520 = vmatpush1.msra.mxu0 %v122
    %521 = vmatprep.subr.mxu0 %v121
    %522 = vmatpush1.msra.mxu0 %v120
    %523 = vmatprep.subr.mxu0 %v119
    %524 = vmatpush1.msra.mxu0 %v118
    %525 = vmatprep.subr.mxu0 %v117
    %526 = vmatpush1.msra.mxu0 %v116
    %527 = vmatprep.subr.mxu0 %v115
    %528 = vmatpush1.msra.mxu0 %v114
    %529 = vmatprep.subr.mxu0 %v113
    %530 = vmatpush1.msra.mxu0 %v112
    %531 = vmatprep.subr.mxu0 %v111
    %532 = vmatpush1.msra.mxu0 %v110
    %533 = vmatprep.subr.mxu0 %v109
    %534 = vmatpush1.msra.mxu0 %v108
    %535 = vmatprep.subr.mxu0 0.0
    %536 = vmatpush2.msra.mxu0 0.0
    %537 = vmatprep.subr.mxu0 0.0
    %538 = vmatpush2.msra.mxu0 0.0
    %539 = vmatprep.subr.mxu0 0.0
    %540 = vmatpush2.msra.mxu0 0.0
    %541 = vmatprep.subr.mxu0 0.0
    %542 = vmatpush2.msra.mxu0 0.0
    %543 = vmatprep.subr.mxu0 0.0
    %544 = vmatpush2.msra.mxu0 0.0
    %545 = vmatprep.subr.mxu0 0.0
    %546 = vmatpush2.msra.mxu0 0.0
    %547 = vmatprep.subr.mxu0 0.0
    %548 = vmatpush2.msra.mxu0 0.0
    %549 = vmatprep.subr.mxu0 0.0
    %550 = vmatpush2.msra.mxu0 0.0
    %551 = vmatprep.subr.mxu0 0.0
    %552 = vmatpush2.msra.mxu0 0.0
    %553 = vmatprep.subr.mxu0 0.0
    %554 = vmatpush2.msra.mxu0 0.0
    %555 = vmatprep.subr.mxu0 0.0
    %556 = vmatpush2.msra.mxu0 0.0
    %557 = vmatprep.subr.mxu0 0.0
    %558 = vmatpush2.msra.mxu0 0.0
    %559 = vmatprep.subr.mxu0 0.0
    %560 = vmatpush2.msra.mxu0 0.0
    %561 = vmatprep.subr.mxu0 0.0
    %562 = vmatpush2.msra.mxu0 0.0
    %563 = vmatprep.subr.mxu0 0.0
    %564 = vmatpush2.msra.mxu0 0.0
    %565 = vmatprep.subr.mxu0 0.0
    %566 = vmatpush2.msra.mxu0 0.0
    %567 = vmatprep.mubr.f32.mxu0 0.0
    %568 = vmatmul.mubr.f32.gmra.mxu0 %v501
    %v569 = vpop.f32.mrf.mxu0
    %v570 = vadd.f32 %v142, %v569
    %v571 = vpop.f32.mrf.mxu0
    %v572 = vadd.f32 %v146, %v571
    %573 = vdwg.mxu0
    %574 = vmatprep.subr.mxu0 0.0
    %575 = vmatpush1.msra.mxu0 0.0
    %576 = vmatprep.subr.mxu0 0.0
    %577 = vmatpush1.msra.mxu0 0.0
    %578 = vmatprep.subr.mxu0 0.0
    %579 = vmatpush1.msra.mxu0 0.0
    %580 = vmatprep.subr.mxu0 0.0
    %581 = vmatpush1.msra.mxu0 0.0
    %582 = vmatprep.subr.mxu0 0.0
    %583 = vmatpush1.msra.mxu0 0.0
    %584 = vmatprep.subr.mxu0 0.0
    %585 = vmatpush1.msra.mxu0 0.0
    %586 = vmatprep.subr.mxu0 0.0
    %587 = vmatpush1.msra.mxu0 0.0
    %588 = vmatprep.subr.mxu0 0.0
    %589 = vmatpush1.msra.mxu0 0.0
    %590 = vmatprep.subr.mxu0 %v73
    %591 = vmatpush1.msra.mxu0 %v72
    %592 = vmatprep.subr.mxu0 %v71
    %593 = vmatpush1.msra.mxu0 %v70
    %594 = vmatprep.subr.mxu0 %v69
    %595 = vmatpush1.msra.mxu0 %v68
    %596 = vmatprep.subr.mxu0 %v67
    %597 = vmatpush1.msra.mxu0 %v66
    %598 = vmatprep.subr.mxu0 %v65
    %599 = vmatpush1.msra.mxu0 %v64
    %600 = vmatprep.subr.mxu0 %v63
    %601 = vmatpush1.msra.mxu0 %v62
    %602 = vmatprep.subr.mxu0 %v61
    %603 = vmatpush1.msra.mxu0 %v60
    %604 = vmatprep.subr.mxu0 %v59
    %605 = vmatpush1.msra.mxu0 %v58
    %606 = vmatprep.subr.mxu0 0.0
    %607 = vmatpush2.msra.mxu0 0.0
    %608 = vmatprep.subr.mxu0 0.0
    %609 = vmatpush2.msra.mxu0 0.0
    %610 = vmatprep.subr.mxu0 0.0
    %611 = vmatpush2.msra.mxu0 0.0
    %612 = vmatprep.subr.mxu0 0.0
    %613 = vmatpush2.msra.mxu0 0.0
    %614 = vmatprep.subr.mxu0 0.0
    %615 = vmatpush2.msra.mxu0 0.0
    %616 = vmatprep.subr.mxu0 0.0
    %617 = vmatpush2.msra.mxu0 0.0
    %618 = vmatprep.subr.mxu0 0.0
    %619 = vmatpush2.msra.mxu0 0.0
    %620 = vmatprep.subr.mxu0 0.0
    %621 = vmatpush2.msra.mxu0 0.0
    %622 = vmatprep.subr.mxu0 0.0
    %623 = vmatpush2.msra.mxu0 0.0
    %624 = vmatprep.subr.mxu0 0.0
    %625 = vmatpush2.msra.mxu0 0.0
    %626 = vmatprep.subr.mxu0 0.0
    %627 = vmatpush2.msra.mxu0 0.0
    %628 = vmatprep.subr.mxu0 0.0
    %629 = vmatpush2.msra.mxu0 0.0
    %630 = vmatprep.subr.mxu0 0.0
    %631 = vmatpush2.msra.mxu0 0.0
    %632 = vmatprep.subr.mxu0 0.0
    %633 = vmatpush2.msra.mxu0 0.0
    %634 = vmatprep.subr.mxu0 0.0
    %635 = vmatpush2.msra.mxu0 0.0
    %636 = vmatprep.subr.mxu0 0.0
    %637 = vmatpush2.msra.mxu0 0.0
    %638 = vmatprep.mubr.f32.mxu0 0.0
    %639 = vmatmul.mubr.f32.gmra.mxu0 %v501
    %v640 = vpop.f32.mrf.mxu0
    %v641 = vadd.f32 %v497, %v640
    %v642 = vpop.f32.mrf.mxu0
    %v643 = vadd.f32 %v499, %v642
    %644 = vdwg.mxu0
    %v645 = vxor.u32 %v641, 2147483648
    %v646 = vxor.u32 %v643, 2147483648
    %v647 = vmul.f32 %v645, 1.442695
    %v648 = vpow.pop %v647
    %v649 = vmul.f32 %v646, 1.442695
    %v650 = vpow.pop %v649
    %v651 = vadd.f32 %v648, 1.0
    %v652 = vadd.f32 %v650, 1.0
    %v653 = vrcp.pop %v651
    %v654 = vmul.f32 1.0, %v653
    %v655 = vrcp.pop %v652
    %v656 = vmul.f32 1.0, %v655
    %v657 = vmul.f32 %v656, 2.0
    %v658 = vsub.f32 %v657, 1.0
    %v659 = vmul.f32 %v654, %v323
    %v660 = vmul.f32 %v654, %v658
    %662 = vrot.lane.b32.xlu0 %v660, 64
    %v663 = vpop.permute.xlu0 %662
    %v665 = vadd.f32 %v659, %v663
    %v666 = vtanh.pop %v665
    %v667 = vmul.f32 %v656, %v666
    %669 = vrot.lane.b32.xlu0 %v667, 64
    %v670 = vpop.permute.xlu0 %669
    %v671 = vsel %vm149, %v670, 0
    %673 = vmatprep.subr.mxu0 0.0
    %674 = vmatpush1.msra.mxu0 0.0
    %675 = vmatprep.subr.mxu0 0.0
    %676 = vmatpush1.msra.mxu0 0.0
    %677 = vmatprep.subr.mxu0 0.0
    %678 = vmatpush1.msra.mxu0 0.0
    %679 = vmatprep.subr.mxu0 0.0
    %680 = vmatpush1.msra.mxu0 0.0
    %681 = vmatprep.subr.mxu0 0.0
    %682 = vmatpush1.msra.mxu0 0.0
    %683 = vmatprep.subr.mxu0 0.0
    %684 = vmatpush1.msra.mxu0 0.0
    %685 = vmatprep.subr.mxu0 0.0
    %686 = vmatpush1.msra.mxu0 0.0
    %687 = vmatprep.subr.mxu0 0.0
    %688 = vmatpush1.msra.mxu0 0.0
    %689 = vmatprep.subr.mxu0 %v90
    %690 = vmatpush1.msra.mxu0 %v89
    %691 = vmatprep.subr.mxu0 %v88
    %692 = vmatpush1.msra.mxu0 %v87
    %693 = vmatprep.subr.mxu0 %v86
    %694 = vmatpush1.msra.mxu0 %v85
    %695 = vmatprep.subr.mxu0 %v84
    %696 = vmatpush1.msra.mxu0 %v83
    %697 = vmatprep.subr.mxu0 %v82
    %698 = vmatpush1.msra.mxu0 %v81
    %699 = vmatprep.subr.mxu0 %v80
    %700 = vmatpush1.msra.mxu0 %v79
    %701 = vmatprep.subr.mxu0 %v78
    %702 = vmatpush1.msra.mxu0 %v77
    %703 = vmatprep.subr.mxu0 %v76
    %704 = vmatpush1.msra.mxu0 %v75
    %705 = vmatprep.subr.mxu0 0.0
    %706 = vmatpush2.msra.mxu0 0.0
    %707 = vmatprep.subr.mxu0 0.0
    %708 = vmatpush2.msra.mxu0 0.0
    %709 = vmatprep.subr.mxu0 0.0
    %710 = vmatpush2.msra.mxu0 0.0
    %711 = vmatprep.subr.mxu0 0.0
    %712 = vmatpush2.msra.mxu0 0.0
    %713 = vmatprep.subr.mxu0 0.0
    %714 = vmatpush2.msra.mxu0 0.0
    %715 = vmatprep.subr.mxu0 0.0
    %716 = vmatpush2.msra.mxu0 0.0
    %717 = vmatprep.subr.mxu0 0.0
    %718 = vmatpush2.msra.mxu0 0.0
    %719 = vmatprep.subr.mxu0 0.0
    %720 = vmatpush2.msra.mxu0 0.0
    %721 = vmatprep.subr.mxu0 0.0
    %722 = vmatpush2.msra.mxu0 0.0
    %723 = vmatprep.subr.mxu0 0.0
    %724 = vmatpush2.msra.mxu0 0.0
    %725 = vmatprep.subr.mxu0 0.0
    %726 = vmatpush2.msra.mxu0 0.0
    %727 = vmatprep.subr.mxu0 0.0
    %728 = vmatpush2.msra.mxu0 0.0
    %729 = vmatprep.subr.mxu0 0.0
    %730 = vmatpush2.msra.mxu0 0.0
    %731 = vmatprep.subr.mxu0 0.0
    %732 = vmatpush2.msra.mxu0 0.0
    %733 = vmatprep.subr.mxu0 0.0
    %734 = vmatpush2.msra.mxu0 0.0
    %735 = vmatprep.subr.mxu0 0.0
    %736 = vmatpush2.msra.mxu0 0.0
    %737 = vmatprep.mubr.f32.mxu0 0.0
    %738 = vmatmul.mubr.f32.gmra.mxu0 %v671
    %v739 = vpop.f32.mrf.mxu0
    %v740 = vadd.f32 %v570, %v739
    %v741 = vpop.f32.mrf.mxu0
    %v742 = vadd.f32 %v572, %v741
    %743 = vdwg.mxu0
    %v744 = vxor.u32 %v740, 2147483648
    %v745 = vxor.u32 %v742, 2147483648
    %v746 = vmul.f32 %v744, 1.442695
    %v747 = vpow.pop %v746
    %v748 = vmul.f32 %v745, 1.442695
    %v749 = vpow.pop %v748
    %v750 = vadd.f32 %v747, 1.0
    %v751 = vadd.f32 %v749, 1.0
    %v752 = vrcp.pop %v750
    %v753 = vmul.f32 1.0, %v752
    %v754 = vrcp.pop %v751
    %v755 = vmul.f32 1.0, %v754
    %v756 = vmul.f32 %v755, 2.0
    %v757 = vsub.f32 %v756, 1.0
    %v758 = vmul.f32 %v753, %v422
    %v759 = vmul.f32 %v753, %v757
    %761 = vrot.lane.b32.xlu0 %v759, 64
    %v762 = vpop.permute.xlu0 %761
    %v764 = vadd.f32 %v758, %v762
    %v765 = vtanh.pop %v764
    %v766 = vmul.f32 %v755, %v765
    %768 = vrot.lane.b32.xlu0 %v766, 64
    %v769 = vpop.permute.xlu0 %768
    %s771 = scalar_lea.vmem %s4, 8
    %772 = vst.msk [vmem:[%s771] sm:$0xff] %vm149, %v769
    %773 = vmatprep.subr.mxu0 0.0
    %774 = vmatpush1.msra.mxu0 0.0
    %775 = vmatprep.subr.mxu0 0.0
    %776 = vmatpush1.msra.mxu0 0.0
    %777 = vmatprep.subr.mxu0 0.0
    %778 = vmatpush1.msra.mxu0 0.0
    %779 = vmatprep.subr.mxu0 0.0
    %780 = vmatpush1.msra.mxu0 0.0
    %781 = vmatprep.subr.mxu0 0.0
    %782 = vmatpush1.msra.mxu0 0.0
    %783 = vmatprep.subr.mxu0 0.0
    %784 = vmatpush1.msra.mxu0 0.0
    %785 = vmatprep.subr.mxu0 0.0
    %786 = vmatpush1.msra.mxu0 0.0
    %787 = vmatprep.subr.mxu0 0.0
    %788 = vmatpush1.msra.mxu0 0.0
    %789 = vmatprep.subr.mxu0 %v106
    %790 = vmatpush1.msra.mxu0 %v105
    %791 = vmatprep.subr.mxu0 %v104
    %792 = vmatpush1.msra.mxu0 %v103
    %793 = vmatprep.subr.mxu0 %v102
    %794 = vmatpush1.msra.mxu0 %v101
    %795 = vmatprep.subr.mxu0 %v100
    %796 = vmatpush1.msra.mxu0 %v99
    %797 = vmatprep.subr.mxu0 %v98
    %798 = vmatpush1.msra.mxu0 %v97
    %799 = vmatprep.subr.mxu0 %v96
    %800 = vmatpush1.msra.mxu0 %v95
    %801 = vmatprep.subr.mxu0 %v94
    %802 = vmatpush1.msra.mxu0 %v93
    %803 = vmatprep.subr.mxu0 %v92
    %804 = vmatpush1.msra.mxu0 %v91
    %805 = vmatprep.subr.mxu0 0.0
    %806 = vmatpush2.msra.mxu0 0.0
    %807 = vmatprep.subr.mxu0 0.0
    %808 = vmatpush2.msra.mxu0 0.0
    %809 = vmatprep.subr.mxu0 0.0
    %810 = vmatpush2.msra.mxu0 0.0
    %811 = vmatprep.subr.mxu0 0.0
    %812 = vmatpush2.msra.mxu0 0.0
    %813 = vmatprep.subr.mxu0 0.0
    %814 = vmatpush2.msra.mxu0 0.0
    %815 = vmatprep.subr.mxu0 0.0
    %816 = vmatpush2.msra.mxu0 0.0
    %817 = vmatprep.subr.mxu0 0.0
    %818 = vmatpush2.msra.mxu0 0.0
    %819 = vmatprep.subr.mxu0 0.0
    %820 = vmatpush2.msra.mxu0 0.0
    %821 = vmatprep.subr.mxu0 0.0
    %822 = vmatpush2.msra.mxu0 0.0
    %823 = vmatprep.subr.mxu0 0.0
    %824 = vmatpush2.msra.mxu0 0.0
    %825 = vmatprep.subr.mxu0 0.0
    %826 = vmatpush2.msra.mxu0 0.0
    %827 = vmatprep.subr.mxu0 0.0
    %828 = vmatpush2.msra.mxu0 0.0
    %829 = vmatprep.subr.mxu0 0.0
    %830 = vmatpush2.msra.mxu0 0.0
    %831 = vmatprep.subr.mxu0 0.0
    %832 = vmatpush2.msra.mxu0 0.0
    %833 = vmatprep.subr.mxu0 0.0
    %834 = vmatpush2.msra.mxu0 0.0
    %835 = vmatprep.subr.mxu0 0.0
    %836 = vmatpush2.msra.mxu0 0.0
    %837 = vmatprep.mubr.f32.mxu0 0.0
    %838 = vmatmul.mubr.f32.gmra.mxu0 %v671
    %v839 = vpop.f32.mrf.mxu0
    %v840 = vadd.f32 %v129, %v839
    %v841 = vpop.f32.mrf.mxu0
    %v842 = vadd.f32 %v133, %v841
    %843 = vdwg.mxu0
    %v844 = vsel %vm149, %v769, 0
    %846 = vmatprep.subr.mxu0 0.0
    %847 = vmatpush1.msra.mxu0 0.0
    %848 = vmatprep.subr.mxu0 0.0
    %849 = vmatpush1.msra.mxu0 0.0
    %850 = vmatprep.subr.mxu0 0.0
    %851 = vmatpush1.msra.mxu0 0.0
    %852 = vmatprep.subr.mxu0 0.0
    %853 = vmatpush1.msra.mxu0 0.0
    %854 = vmatprep.subr.mxu0 0.0
    %855 = vmatpush1.msra.mxu0 0.0
    %856 = vmatprep.subr.mxu0 0.0
    %857 = vmatpush1.msra.mxu0 0.0
    %858 = vmatprep.subr.mxu0 0.0
    %859 = vmatpush1.msra.mxu0 0.0
    %860 = vmatprep.subr.mxu0 0.0
    %861 = vmatpush1.msra.mxu0 0.0
    %862 = vmatprep.subr.mxu0 %v123
    %863 = vmatpush1.msra.mxu0 %v122
    %864 = vmatprep.subr.mxu0 %v121
    %865 = vmatpush1.msra.mxu0 %v120
    %866 = vmatprep.subr.mxu0 %v119
    %867 = vmatpush1.msra.mxu0 %v118
    %868 = vmatprep.subr.mxu0 %v117
    %869 = vmatpush1.msra.mxu0 %v116
    %870 = vmatprep.subr.mxu0 %v115
    %871 = vmatpush1.msra.mxu0 %v114
    %872 = vmatprep.subr.mxu0 %v113
    %873 = vmatpush1.msra.mxu0 %v112
    %874 = vmatprep.subr.mxu0 %v111
    %875 = vmatpush1.msra.mxu0 %v110
    %876 = vmatprep.subr.mxu0 %v109
    %877 = vmatpush1.msra.mxu0 %v108
    %878 = vmatprep.subr.mxu0 0.0
    %879 = vmatpush2.msra.mxu0 0.0
    %880 = vmatprep.subr.mxu0 0.0
    %881 = vmatpush2.msra.mxu0 0.0
    %882 = vmatprep.subr.mxu0 0.0
    %883 = vmatpush2.msra.mxu0 0.0
    %884 = vmatprep.subr.mxu0 0.0
    %885 = vmatpush2.msra.mxu0 0.0
    %886 = vmatprep.subr.mxu0 0.0
    %887 = vmatpush2.msra.mxu0 0.0
    %888 = vmatprep.subr.mxu0 0.0
    %889 = vmatpush2.msra.mxu0 0.0
    %890 = vmatprep.subr.mxu0 0.0
    %891 = vmatpush2.msra.mxu0 0.0
    %892 = vmatprep.subr.mxu0 0.0
    %893 = vmatpush2.msra.mxu0 0.0
    %894 = vmatprep.subr.mxu0 0.0
    %895 = vmatpush2.msra.mxu0 0.0
    %896 = vmatprep.subr.mxu0 0.0
    %897 = vmatpush2.msra.mxu0 0.0
    %898 = vmatprep.subr.mxu0 0.0
    %899 = vmatpush2.msra.mxu0 0.0
    %900 = vmatprep.subr.mxu0 0.0
    %901 = vmatpush2.msra.mxu0 0.0
    %902 = vmatprep.subr.mxu0 0.0
    %903 = vmatpush2.msra.mxu0 0.0
    %904 = vmatprep.subr.mxu0 0.0
    %905 = vmatpush2.msra.mxu0 0.0
    %906 = vmatprep.subr.mxu0 0.0
    %907 = vmatpush2.msra.mxu0 0.0
    %908 = vmatprep.subr.mxu0 0.0
    %909 = vmatpush2.msra.mxu0 0.0
    %910 = vmatprep.mubr.f32.mxu0 0.0
    %911 = vmatmul.mubr.f32.gmra.mxu0 %v844
    %v912 = vpop.f32.mrf.mxu0
    %v913 = vadd.f32 %v142, %v912
    %v914 = vpop.f32.mrf.mxu0
    %v915 = vadd.f32 %v146, %v914
    %916 = vdwg.mxu0
    %917 = vmatprep.subr.mxu0 0.0
    %918 = vmatpush1.msra.mxu0 0.0
    %919 = vmatprep.subr.mxu0 0.0
    %920 = vmatpush1.msra.mxu0 0.0
    %921 = vmatprep.subr.mxu0 0.0
    %922 = vmatpush1.msra.mxu0 0.0
    %923 = vmatprep.subr.mxu0 0.0
    %924 = vmatpush1.msra.mxu0 0.0
    %925 = vmatprep.subr.mxu0 0.0
    %926 = vmatpush1.msra.mxu0 0.0
    %927 = vmatprep.subr.mxu0 0.0
    %928 = vmatpush1.msra.mxu0 0.0
    %929 = vmatprep.subr.mxu0 0.0
    %930 = vmatpush1.msra.mxu0 0.0
    %931 = vmatprep.subr.mxu0 0.0
    %932 = vmatpush1.msra.mxu0 0.0
    %933 = vmatprep.subr.mxu0 %v73
    %934 = vmatpush1.msra.mxu0 %v72
    %935 = vmatprep.subr.mxu0 %v71
    %936 = vmatpush1.msra.mxu0 %v70
    %937 = vmatprep.subr.mxu0 %v69
    %938 = vmatpush1.msra.mxu0 %v68
    %939 = vmatprep.subr.mxu0 %v67
    %940 = vmatpush1.msra.mxu0 %v66
    %941 = vmatprep.subr.mxu0 %v65
    %942 = vmatpush1.msra.mxu0 %v64
    %943 = vmatprep.subr.mxu0 %v63
    %944 = vmatpush1.msra.mxu0 %v62
    %945 = vmatprep.subr.mxu0 %v61
    %946 = vmatpush1.msra.mxu0 %v60
    %947 = vmatprep.subr.mxu0 %v59
    %948 = vmatpush1.msra.mxu0 %v58
    %949 = vmatprep.subr.mxu0 0.0
    %950 = vmatpush2.msra.mxu0 0.0
    %951 = vmatprep.subr.mxu0 0.0
    %952 = vmatpush2.msra.mxu0 0.0
    %953 = vmatprep.subr.mxu0 0.0
    %954 = vmatpush2.msra.mxu0 0.0
    %955 = vmatprep.subr.mxu0 0.0
    %956 = vmatpush2.msra.mxu0 0.0
    %957 = vmatprep.subr.mxu0 0.0
    %958 = vmatpush2.msra.mxu0 0.0
    %959 = vmatprep.subr.mxu0 0.0
    %960 = vmatpush2.msra.mxu0 0.0
    %961 = vmatprep.subr.mxu0 0.0
    %962 = vmatpush2.msra.mxu0 0.0
    %963 = vmatprep.subr.mxu0 0.0
    %964 = vmatpush2.msra.mxu0 0.0
    %965 = vmatprep.subr.mxu0 0.0
    %966 = vmatpush2.msra.mxu0 0.0
    %967 = vmatprep.subr.mxu0 0.0
    %968 = vmatpush2.msra.mxu0 0.0
    %969 = vmatprep.subr.mxu0 0.0
    %970 = vmatpush2.msra.mxu0 0.0
    %971 = vmatprep.subr.mxu0 0.0
    %972 = vmatpush2.msra.mxu0 0.0
    %973 = vmatprep.subr.mxu0 0.0
    %974 = vmatpush2.msra.mxu0 0.0
    %975 = vmatprep.subr.mxu0 0.0
    %976 = vmatpush2.msra.mxu0 0.0
    %977 = vmatprep.subr.mxu0 0.0
    %978 = vmatpush2.msra.mxu0 0.0
    %979 = vmatprep.subr.mxu0 0.0
    %980 = vmatpush2.msra.mxu0 0.0
    %981 = vmatprep.mubr.f32.mxu0 0.0
    %982 = vmatmul.mubr.f32.gmra.mxu0 %v844
    %v983 = vpop.f32.mrf.mxu0
    %v984 = vadd.f32 %v840, %v983
    %v985 = vpop.f32.mrf.mxu0
    %v986 = vadd.f32 %v842, %v985
    %987 = vdwg.mxu0
    %v988 = vxor.u32 %v984, 2147483648
    %v989 = vxor.u32 %v986, 2147483648
    %v990 = vmul.f32 %v988, 1.442695
    %v991 = vpow.pop %v990
    %v992 = vmul.f32 %v989, 1.442695
    %v993 = vpow.pop %v992
    %v994 = vadd.f32 %v991, 1.0
    %v995 = vadd.f32 %v993, 1.0
    %v996 = vrcp.pop %v994
    %v997 = vmul.f32 1.0, %v996
    %v998 = vrcp.pop %v995
    %v999 = vmul.f32 1.0, %v998
    %v1000 = vmul.f32 %v999, 2.0
    %v1001 = vsub.f32 %v1000, 1.0
    %v1002 = vmul.f32 %v997, %v665
    %v1003 = vmul.f32 %v997, %v1001
    %1005 = vrot.lane.b32.xlu0 %v1003, 64
    %v1006 = vpop.permute.xlu0 %1005
    %v1008 = vadd.f32 %v1002, %v1006
    %v1009 = vtanh.pop %v1008
    %v1010 = vmul.f32 %v999, %v1009
    %1012 = vrot.lane.b32.xlu0 %v1010, 64
    %v1013 = vpop.permute.xlu0 %1012
    %v1014 = vsel %vm149, %v1013, 0
    %1016 = vmatprep.subr.mxu0 0.0
    %1017 = vmatpush1.msra.mxu0 0.0
    %1018 = vmatprep.subr.mxu0 0.0
    %1019 = vmatpush1.msra.mxu0 0.0
    %1020 = vmatprep.subr.mxu0 0.0
    %1021 = vmatpush1.msra.mxu0 0.0
    %1022 = vmatprep.subr.mxu0 0.0
    %1023 = vmatpush1.msra.mxu0 0.0
    %1024 = vmatprep.subr.mxu0 0.0
    %1025 = vmatpush1.msra.mxu0 0.0
    %1026 = vmatprep.subr.mxu0 0.0
    %1027 = vmatpush1.msra.mxu0 0.0
    %1028 = vmatprep.subr.mxu0 0.0
    %1029 = vmatpush1.msra.mxu0 0.0
    %1030 = vmatprep.subr.mxu0 0.0
    %1031 = vmatpush1.msra.mxu0 0.0
    %1032 = vmatprep.subr.mxu0 %v90
    %1033 = vmatpush1.msra.mxu0 %v89
    %1034 = vmatprep.subr.mxu0 %v88
    %1035 = vmatpush1.msra.mxu0 %v87
    %1036 = vmatprep.subr.mxu0 %v86
    %1037 = vmatpush1.msra.mxu0 %v85
    %1038 = vmatprep.subr.mxu0 %v84
    %1039 = vmatpush1.msra.mxu0 %v83
    %1040 = vmatprep.subr.mxu0 %v82
    %1041 = vmatpush1.msra.mxu0 %v81
    %1042 = vmatprep.subr.mxu0 %v80
    %1043 = vmatpush1.msra.mxu0 %v79
    %1044 = vmatprep.subr.mxu0 %v78
    %1045 = vmatpush1.msra.mxu0 %v77
    %1046 = vmatprep.subr.mxu0 %v76
    %1047 = vmatpush1.msra.mxu0 %v75
    %1048 = vmatprep.subr.mxu0 0.0
    %1049 = vmatpush2.msra.mxu0 0.0
    %1050 = vmatprep.subr.mxu0 0.0
    %1051 = vmatpush2.msra.mxu0 0.0
    %1052 = vmatprep.subr.mxu0 0.0
    %1053 = vmatpush2.msra.mxu0 0.0
    %1054 = vmatprep.subr.mxu0 0.0
    %1055 = vmatpush2.msra.mxu0 0.0
    %1056 = vmatprep.subr.mxu0 0.0
    %1057 = vmatpush2.msra.mxu0 0.0
    %1058 = vmatprep.subr.mxu0 0.0
    %1059 = vmatpush2.msra.mxu0 0.0
    %1060 = vmatprep.subr.mxu0 0.0
    %1061 = vmatpush2.msra.mxu0 0.0
    %1062 = vmatprep.subr.mxu0 0.0
    %1063 = vmatpush2.msra.mxu0 0.0
    %1064 = vmatprep.subr.mxu0 0.0
    %1065 = vmatpush2.msra.mxu0 0.0
    %1066 = vmatprep.subr.mxu0 0.0
    %1067 = vmatpush2.msra.mxu0 0.0
    %1068 = vmatprep.subr.mxu0 0.0
    %1069 = vmatpush2.msra.mxu0 0.0
    %1070 = vmatprep.subr.mxu0 0.0
    %1071 = vmatpush2.msra.mxu0 0.0
    %1072 = vmatprep.subr.mxu0 0.0
    %1073 = vmatpush2.msra.mxu0 0.0
    %1074 = vmatprep.subr.mxu0 0.0
    %1075 = vmatpush2.msra.mxu0 0.0
    %1076 = vmatprep.subr.mxu0 0.0
    %1077 = vmatpush2.msra.mxu0 0.0
    %1078 = vmatprep.subr.mxu0 0.0
    %1079 = vmatpush2.msra.mxu0 0.0
    %1080 = vmatprep.mubr.f32.mxu0 0.0
    %1081 = vmatmul.mubr.f32.gmra.mxu0 %v1014
    %v1082 = vpop.f32.mrf.mxu0
    %v1083 = vadd.f32 %v913, %v1082
    %v1084 = vpop.f32.mrf.mxu0
    %v1085 = vadd.f32 %v915, %v1084
    %1086 = vdwg.mxu0
    %v1087 = vxor.u32 %v1083, 2147483648
    %v1088 = vxor.u32 %v1085, 2147483648
    %v1089 = vmul.f32 %v1087, 1.442695
    %v1090 = vpow.pop %v1089
    %v1091 = vmul.f32 %v1088, 1.442695
    %v1092 = vpow.pop %v1091
    %v1093 = vadd.f32 %v1090, 1.0
    %v1094 = vadd.f32 %v1092, 1.0
    %v1095 = vrcp.pop %v1093
    %v1096 = vmul.f32 1.0, %v1095
    %v1097 = vrcp.pop %v1094
    %v1098 = vmul.f32 1.0, %v1097
    %v1099 = vmul.f32 %v1098, 2.0
    %v1100 = vsub.f32 %v1099, 1.0
    %v1101 = vmul.f32 %v1096, %v764
    %v1102 = vmul.f32 %v1096, %v1100
    %1104 = vrot.lane.b32.xlu0 %v1102, 64
    %v1105 = vpop.permute.xlu0 %1104
    %v1107 = vadd.f32 %v1101, %v1105
    %v1108 = vtanh.pop %v1107
    %v1109 = vmul.f32 %v1098, %v1108
    %1111 = vrot.lane.b32.xlu0 %v1109, 64
    %v1112 = vpop.permute.xlu0 %1111
    %s1114 = scalar_lea.vmem %s4, 16
    %1115 = vst.msk [vmem:[%s1114] sm:$0xff] %vm149, %v1112
    %1116 = vmatprep.subr.mxu0 0.0
    %1117 = vmatpush1.msra.mxu0 0.0
    %1118 = vmatprep.subr.mxu0 0.0
    %1119 = vmatpush1.msra.mxu0 0.0
    %1120 = vmatprep.subr.mxu0 0.0
    %1121 = vmatpush1.msra.mxu0 0.0
    %1122 = vmatprep.subr.mxu0 0.0
    %1123 = vmatpush1.msra.mxu0 0.0
    %1124 = vmatprep.subr.mxu0 0.0
    %1125 = vmatpush1.msra.mxu0 0.0
    %1126 = vmatprep.subr.mxu0 0.0
    %1127 = vmatpush1.msra.mxu0 0.0
    %1128 = vmatprep.subr.mxu0 0.0
    %1129 = vmatpush1.msra.mxu0 0.0
    %1130 = vmatprep.subr.mxu0 0.0
    %1131 = vmatpush1.msra.mxu0 0.0
    %1132 = vmatprep.subr.mxu0 %v106
    %1133 = vmatpush1.msra.mxu0 %v105
    %1134 = vmatprep.subr.mxu0 %v104
    %1135 = vmatpush1.msra.mxu0 %v103
    %1136 = vmatprep.subr.mxu0 %v102
    %1137 = vmatpush1.msra.mxu0 %v101
    %1138 = vmatprep.subr.mxu0 %v100
    %1139 = vmatpush1.msra.mxu0 %v99
    %1140 = vmatprep.subr.mxu0 %v98
    %1141 = vmatpush1.msra.mxu0 %v97
    %1142 = vmatprep.subr.mxu0 %v96
    %1143 = vmatpush1.msra.mxu0 %v95
    %1144 = vmatprep.subr.mxu0 %v94
    %1145 = vmatpush1.msra.mxu0 %v93
    %1146 = vmatprep.subr.mxu0 %v92
    %1147 = vmatpush1.msra.mxu0 %v91
    %1148 = vmatprep.subr.mxu0 0.0
    %1149 = vmatpush2.msra.mxu0 0.0
    %1150 = vmatprep.subr.mxu0 0.0
    %1151 = vmatpush2.msra.mxu0 0.0
    %1152 = vmatprep.subr.mxu0 0.0
    %1153 = vmatpush2.msra.mxu0 0.0
    %1154 = vmatprep.subr.mxu0 0.0
    %1155 = vmatpush2.msra.mxu0 0.0
    %1156 = vmatprep.subr.mxu0 0.0
    %1157 = vmatpush2.msra.mxu0 0.0
    %1158 = vmatprep.subr.mxu0 0.0
    %1159 = vmatpush2.msra.mxu0 0.0
    %1160 = vmatprep.subr.mxu0 0.0
    %1161 = vmatpush2.msra.mxu0 0.0
    %1162 = vmatprep.subr.mxu0 0.0
    %1163 = vmatpush2.msra.mxu0 0.0
    %1164 = vmatprep.subr.mxu0 0.0
    %1165 = vmatpush2.msra.mxu0 0.0
    %1166 = vmatprep.subr.mxu0 0.0
    %1167 = vmatpush2.msra.mxu0 0.0
    %1168 = vmatprep.subr.mxu0 0.0
    %1169 = vmatpush2.msra.mxu0 0.0
    %1170 = vmatprep.subr.mxu0 0.0
    %1171 = vmatpush2.msra.mxu0 0.0
    %1172 = vmatprep.subr.mxu0 0.0
    %1173 = vmatpush2.msra.mxu0 0.0
    %1174 = vmatprep.subr.mxu0 0.0
    %1175 = vmatpush2.msra.mxu0 0.0
    %1176 = vmatprep.subr.mxu0 0.0
    %1177 = vmatpush2.msra.mxu0 0.0
    %1178 = vmatprep.subr.mxu0 0.0
    %1179 = vmatpush2.msra.mxu0 0.0
    %1180 = vmatprep.mubr.f32.mxu0 0.0
    %1181 = vmatmul.mubr.f32.gmra.mxu0 %v1014
    %v1182 = vpop.f32.mrf.mxu0
    %v1183 = vadd.f32 %v129, %v1182
    %v1184 = vpop.f32.mrf.mxu0
    %v1185 = vadd.f32 %v133, %v1184
    %1186 = vdwg.mxu0
    %v1187 = vsel %vm149, %v1112, 0
    %1189 = vmatprep.subr.mxu0 0.0
    %1190 = vmatpush1.msra.mxu0 0.0
    %1191 = vmatprep.subr.mxu0 0.0
    %1192 = vmatpush1.msra.mxu0 0.0
    %1193 = vmatprep.subr.mxu0 0.0
    %1194 = vmatpush1.msra.mxu0 0.0
    %1195 = vmatprep.subr.mxu0 0.0
    %1196 = vmatpush1.msra.mxu0 0.0
    %1197 = vmatprep.subr.mxu0 0.0
    %1198 = vmatpush1.msra.mxu0 0.0
    %1199 = vmatprep.subr.mxu0 0.0
    %1200 = vmatpush1.msra.mxu0 0.0
    %1201 = vmatprep.subr.mxu0 0.0
    %1202 = vmatpush1.msra.mxu0 0.0
    %1203 = vmatprep.subr.mxu0 0.0
    %1204 = vmatpush1.msra.mxu0 0.0
    %1205 = vmatprep.subr.mxu0 %v123
    %1206 = vmatpush1.msra.mxu0 %v122
    %1207 = vmatprep.subr.mxu0 %v121
    %1208 = vmatpush1.msra.mxu0 %v120
    %1209 = vmatprep.subr.mxu0 %v119
    %1210 = vmatpush1.msra.mxu0 %v118
    %1211 = vmatprep.subr.mxu0 %v117
    %1212 = vmatpush1.msra.mxu0 %v116
    %1213 = vmatprep.subr.mxu0 %v115
    %1214 = vmatpush1.msra.mxu0 %v114
    %1215 = vmatprep.subr.mxu0 %v113
    %1216 = vmatpush1.msra.mxu0 %v112
    %1217 = vmatprep.subr.mxu0 %v111
    %1218 = vmatpush1.msra.mxu0 %v110
    %1219 = vmatprep.subr.mxu0 %v109
    %1220 = vmatpush1.msra.mxu0 %v108
    %1221 = vmatprep.subr.mxu0 0.0
    %1222 = vmatpush2.msra.mxu0 0.0
    %1223 = vmatprep.subr.mxu0 0.0
    %1224 = vmatpush2.msra.mxu0 0.0
    %1225 = vmatprep.subr.mxu0 0.0
    %1226 = vmatpush2.msra.mxu0 0.0
    %1227 = vmatprep.subr.mxu0 0.0
    %1228 = vmatpush2.msra.mxu0 0.0
    %1229 = vmatprep.subr.mxu0 0.0
    %1230 = vmatpush2.msra.mxu0 0.0
    %1231 = vmatprep.subr.mxu0 0.0
    %1232 = vmatpush2.msra.mxu0 0.0
    %1233 = vmatprep.subr.mxu0 0.0
    %1234 = vmatpush2.msra.mxu0 0.0
    %1235 = vmatprep.subr.mxu0 0.0
    %1236 = vmatpush2.msra.mxu0 0.0
    %1237 = vmatprep.subr.mxu0 0.0
    %1238 = vmatpush2.msra.mxu0 0.0
    %1239 = vmatprep.subr.mxu0 0.0
    %1240 = vmatpush2.msra.mxu0 0.0
    %1241 = vmatprep.subr.mxu0 0.0
    %1242 = vmatpush2.msra.mxu0 0.0
    %1243 = vmatprep.subr.mxu0 0.0
    %1244 = vmatpush2.msra.mxu0 0.0
    %1245 = vmatprep.subr.mxu0 0.0
    %1246 = vmatpush2.msra.mxu0 0.0
    %1247 = vmatprep.subr.mxu0 0.0
    %1248 = vmatpush2.msra.mxu0 0.0
    %1249 = vmatprep.subr.mxu0 0.0
    %1250 = vmatpush2.msra.mxu0 0.0
    %1251 = vmatprep.subr.mxu0 0.0
    %1252 = vmatpush2.msra.mxu0 0.0
    %1253 = vmatprep.mubr.f32.mxu0 0.0
    %1254 = vmatmul.mubr.f32.gmra.mxu0 %v1187
    %v1255 = vpop.f32.mrf.mxu0
    %v1256 = vadd.f32 %v142, %v1255
    %v1257 = vpop.f32.mrf.mxu0
    %v1258 = vadd.f32 %v146, %v1257
    %1259 = vdwg.mxu0
    %1260 = vmatprep.subr.mxu0 0.0
    %1261 = vmatpush1.msra.mxu0 0.0
    %1262 = vmatprep.subr.mxu0 0.0
    %1263 = vmatpush1.msra.mxu0 0.0
    %1264 = vmatprep.subr.mxu0 0.0
    %1265 = vmatpush1.msra.mxu0 0.0
    %1266 = vmatprep.subr.mxu0 0.0
    %1267 = vmatpush1.msra.mxu0 0.0
    %1268 = vmatprep.subr.mxu0 0.0
    %1269 = vmatpush1.msra.mxu0 0.0
    %1270 = vmatprep.subr.mxu0 0.0
    %1271 = vmatpush1.msra.mxu0 0.0
    %1272 = vmatprep.subr.mxu0 0.0
    %1273 = vmatpush1.msra.mxu0 0.0
    %1274 = vmatprep.subr.mxu0 0.0
    %1275 = vmatpush1.msra.mxu0 0.0
    %1276 = vmatprep.subr.mxu0 %v73
    %1277 = vmatpush1.msra.mxu0 %v72
    %1278 = vmatprep.subr.mxu0 %v71
    %1279 = vmatpush1.msra.mxu0 %v70
    %1280 = vmatprep.subr.mxu0 %v69
    %1281 = vmatpush1.msra.mxu0 %v68
    %1282 = vmatprep.subr.mxu0 %v67
    %1283 = vmatpush1.msra.mxu0 %v66
    %1284 = vmatprep.subr.mxu0 %v65
    %1285 = vmatpush1.msra.mxu0 %v64
    %1286 = vmatprep.subr.mxu0 %v63
    %1287 = vmatpush1.msra.mxu0 %v62
    %1288 = vmatprep.subr.mxu0 %v61
    %1289 = vmatpush1.msra.mxu0 %v60
    %1290 = vmatprep.subr.mxu0 %v59
    %1291 = vmatpush1.msra.mxu0 %v58
    %1292 = vmatprep.subr.mxu0 0.0
    %1293 = vmatpush2.msra.mxu0 0.0
    %1294 = vmatprep.subr.mxu0 0.0
    %1295 = vmatpush2.msra.mxu0 0.0
    %1296 = vmatprep.subr.mxu0 0.0
    %1297 = vmatpush2.msra.mxu0 0.0
    %1298 = vmatprep.subr.mxu0 0.0
    %1299 = vmatpush2.msra.mxu0 0.0
    %1300 = vmatprep.subr.mxu0 0.0
    %1301 = vmatpush2.msra.mxu0 0.0
    %1302 = vmatprep.subr.mxu0 0.0
    %1303 = vmatpush2.msra.mxu0 0.0
    %1304 = vmatprep.subr.mxu0 0.0
    %1305 = vmatpush2.msra.mxu0 0.0
    %1306 = vmatprep.subr.mxu0 0.0
    %1307 = vmatpush2.msra.mxu0 0.0
    %1308 = vmatprep.subr.mxu0 0.0
    %1309 = vmatpush2.msra.mxu0 0.0
    %1310 = vmatprep.subr.mxu0 0.0
    %1311 = vmatpush2.msra.mxu0 0.0
    %1312 = vmatprep.subr.mxu0 0.0
    %1313 = vmatpush2.msra.mxu0 0.0
    %1314 = vmatprep.subr.mxu0 0.0
    %1315 = vmatpush2.msra.mxu0 0.0
    %1316 = vmatprep.subr.mxu0 0.0
    %1317 = vmatpush2.msra.mxu0 0.0
    %1318 = vmatprep.subr.mxu0 0.0
    %1319 = vmatpush2.msra.mxu0 0.0
    %1320 = vmatprep.subr.mxu0 0.0
    %1321 = vmatpush2.msra.mxu0 0.0
    %1322 = vmatprep.subr.mxu0 0.0
    %1323 = vmatpush2.msra.mxu0 0.0
    %1324 = vmatprep.mubr.f32.mxu0 0.0
    %1325 = vmatmul.mubr.f32.gmra.mxu0 %v1187
    %v1326 = vpop.f32.mrf.mxu0
    %v1327 = vadd.f32 %v1183, %v1326
    %v1328 = vpop.f32.mrf.mxu0
    %v1329 = vadd.f32 %v1185, %v1328
    %1330 = vdwg.mxu0
    %v1331 = vxor.u32 %v1327, 2147483648
    %v1332 = vxor.u32 %v1329, 2147483648
    %v1333 = vmul.f32 %v1331, 1.442695
    %v1334 = vpow.pop %v1333
    %v1335 = vmul.f32 %v1332, 1.442695
    %v1336 = vpow.pop %v1335
    %v1337 = vadd.f32 %v1334, 1.0
    %v1338 = vadd.f32 %v1336, 1.0
    %v1339 = vrcp.pop %v1337
    %v1340 = vmul.f32 1.0, %v1339
    %v1341 = vrcp.pop %v1338
    %v1342 = vmul.f32 1.0, %v1341
    %v1343 = vmul.f32 %v1342, 2.0
    %v1344 = vsub.f32 %v1343, 1.0
    %v1345 = vmul.f32 %v1340, %v1008
    %v1346 = vmul.f32 %v1340, %v1344
    %1348 = vrot.lane.b32.xlu0 %v1346, 64
    %v1349 = vpop.permute.xlu0 %1348
    %v1351 = vadd.f32 %v1345, %v1349
    %v1352 = vtanh.pop %v1351
    %v1353 = vmul.f32 %v1342, %v1352
    %1355 = vrot.lane.b32.xlu0 %v1353, 64
    %v1356 = vpop.permute.xlu0 %1355
    %v1357 = vsel %vm149, %v1356, 0
    %1359 = vmatprep.subr.mxu0 0.0
    %1360 = vmatpush1.msra.mxu0 0.0
    %1361 = vmatprep.subr.mxu0 0.0
    %1362 = vmatpush1.msra.mxu0 0.0
    %1363 = vmatprep.subr.mxu0 0.0
    %1364 = vmatpush1.msra.mxu0 0.0
    %1365 = vmatprep.subr.mxu0 0.0
    %1366 = vmatpush1.msra.mxu0 0.0
    %1367 = vmatprep.subr.mxu0 0.0
    %1368 = vmatpush1.msra.mxu0 0.0
    %1369 = vmatprep.subr.mxu0 0.0
    %1370 = vmatpush1.msra.mxu0 0.0
    %1371 = vmatprep.subr.mxu0 0.0
    %1372 = vmatpush1.msra.mxu0 0.0
    %1373 = vmatprep.subr.mxu0 0.0
    %1374 = vmatpush1.msra.mxu0 0.0
    %1375 = vmatprep.subr.mxu0 %v90
    %1376 = vmatpush1.msra.mxu0 %v89
    %1377 = vmatprep.subr.mxu0 %v88
    %1378 = vmatpush1.msra.mxu0 %v87
    %1379 = vmatprep.subr.mxu0 %v86
    %1380 = vmatpush1.msra.mxu0 %v85
    %1381 = vmatprep.subr.mxu0 %v84
    %1382 = vmatpush1.msra.mxu0 %v83
    %1383 = vmatprep.subr.mxu0 %v82
    %1384 = vmatpush1.msra.mxu0 %v81
    %1385 = vmatprep.subr.mxu0 %v80
    %1386 = vmatpush1.msra.mxu0 %v79
    %1387 = vmatprep.subr.mxu0 %v78
    %1388 = vmatpush1.msra.mxu0 %v77
    %1389 = vmatprep.subr.mxu0 %v76
    %1390 = vmatpush1.msra.mxu0 %v75
    %1391 = vmatprep.subr.mxu0 0.0
    %1392 = vmatpush2.msra.mxu0 0.0
    %1393 = vmatprep.subr.mxu0 0.0
    %1394 = vmatpush2.msra.mxu0 0.0
    %1395 = vmatprep.subr.mxu0 0.0
    %1396 = vmatpush2.msra.mxu0 0.0
    %1397 = vmatprep.subr.mxu0 0.0
    %1398 = vmatpush2.msra.mxu0 0.0
    %1399 = vmatprep.subr.mxu0 0.0
    %1400 = vmatpush2.msra.mxu0 0.0
    %1401 = vmatprep.subr.mxu0 0.0
    %1402 = vmatpush2.msra.mxu0 0.0
    %1403 = vmatprep.subr.mxu0 0.0
    %1404 = vmatpush2.msra.mxu0 0.0
    %1405 = vmatprep.subr.mxu0 0.0
    %1406 = vmatpush2.msra.mxu0 0.0
    %1407 = vmatprep.subr.mxu0 0.0
    %1408 = vmatpush2.msra.mxu0 0.0
    %1409 = vmatprep.subr.mxu0 0.0
    %1410 = vmatpush2.msra.mxu0 0.0
    %1411 = vmatprep.subr.mxu0 0.0
    %1412 = vmatpush2.msra.mxu0 0.0
    %1413 = vmatprep.subr.mxu0 0.0
    %1414 = vmatpush2.msra.mxu0 0.0
    %1415 = vmatprep.subr.mxu0 0.0
    %1416 = vmatpush2.msra.mxu0 0.0
    %1417 = vmatprep.subr.mxu0 0.0
    %1418 = vmatpush2.msra.mxu0 0.0
    %1419 = vmatprep.subr.mxu0 0.0
    %1420 = vmatpush2.msra.mxu0 0.0
    %1421 = vmatprep.subr.mxu0 0.0
    %1422 = vmatpush2.msra.mxu0 0.0
    %1423 = vmatprep.mubr.f32.mxu0 0.0
    %1424 = vmatmul.mubr.f32.gmra.mxu0 %v1357
    %v1425 = vpop.f32.mrf.mxu0
    %v1426 = vadd.f32 %v1256, %v1425
    %v1427 = vpop.f32.mrf.mxu0
    %v1428 = vadd.f32 %v1258, %v1427
    %1429 = vdwg.mxu0
    %v1430 = vxor.u32 %v1426, 2147483648
    %v1431 = vxor.u32 %v1428, 2147483648
    %v1432 = vmul.f32 %v1430, 1.442695
    %v1433 = vpow.pop %v1432
    %v1434 = vmul.f32 %v1431, 1.442695
    %v1435 = vpow.pop %v1434
    %v1436 = vadd.f32 %v1433, 1.0
    %v1437 = vadd.f32 %v1435, 1.0
    %v1438 = vrcp.pop %v1436
    %v1439 = vmul.f32 1.0, %v1438
    %v1440 = vrcp.pop %v1437
    %v1441 = vmul.f32 1.0, %v1440
    %v1442 = vmul.f32 %v1441, 2.0
    %v1443 = vsub.f32 %v1442, 1.0
    %v1444 = vmul.f32 %v1439, %v1107
    %v1445 = vmul.f32 %v1439, %v1443
    %1447 = vrot.lane.b32.xlu0 %v1445, 64
    %v1448 = vpop.permute.xlu0 %1447
    %v1450 = vadd.f32 %v1444, %v1448
    %v1451 = vtanh.pop %v1450
    %v1452 = vmul.f32 %v1441, %v1451
    %1454 = vrot.lane.b32.xlu0 %v1452, 64
    %v1455 = vpop.permute.xlu0 %1454
    %s1457 = scalar_lea.vmem %s4, 24
    %1458 = vst.msk [vmem:[%s1457] sm:$0xff] %vm149, %v1455
    %1459 = vmatprep.subr.mxu0 0.0
    %1460 = vmatpush1.msra.mxu0 0.0
    %1461 = vmatprep.subr.mxu0 0.0
    %1462 = vmatpush1.msra.mxu0 0.0
    %1463 = vmatprep.subr.mxu0 0.0
    %1464 = vmatpush1.msra.mxu0 0.0
    %1465 = vmatprep.subr.mxu0 0.0
    %1466 = vmatpush1.msra.mxu0 0.0
    %1467 = vmatprep.subr.mxu0 0.0
    %1468 = vmatpush1.msra.mxu0 0.0
    %1469 = vmatprep.subr.mxu0 0.0
    %1470 = vmatpush1.msra.mxu0 0.0
    %1471 = vmatprep.subr.mxu0 0.0
    %1472 = vmatpush1.msra.mxu0 0.0
    %1473 = vmatprep.subr.mxu0 0.0
    %1474 = vmatpush1.msra.mxu0 0.0
    %1475 = vmatprep.subr.mxu0 %v106
    %1476 = vmatpush1.msra.mxu0 %v105
    %1477 = vmatprep.subr.mxu0 %v104
    %1478 = vmatpush1.msra.mxu0 %v103
    %1479 = vmatprep.subr.mxu0 %v102
    %1480 = vmatpush1.msra.mxu0 %v101
    %1481 = vmatprep.subr.mxu0 %v100
    %1482 = vmatpush1.msra.mxu0 %v99
    %1483 = vmatprep.subr.mxu0 %v98
    %1484 = vmatpush1.msra.mxu0 %v97
    %1485 = vmatprep.subr.mxu0 %v96
    %1486 = vmatpush1.msra.mxu0 %v95
    %1487 = vmatprep.subr.mxu0 %v94
    %1488 = vmatpush1.msra.mxu0 %v93
    %1489 = vmatprep.subr.mxu0 %v92
    %1490 = vmatpush1.msra.mxu0 %v91
    %1491 = vmatprep.subr.mxu0 0.0
    %1492 = vmatpush2.msra.mxu0 0.0
    %1493 = vmatprep.subr.mxu0 0.0
    %1494 = vmatpush2.msra.mxu0 0.0
    %1495 = vmatprep.subr.mxu0 0.0
    %1496 = vmatpush2.msra.mxu0 0.0
    %1497 = vmatprep.subr.mxu0 0.0
    %1498 = vmatpush2.msra.mxu0 0.0
    %1499 = vmatprep.subr.mxu0 0.0
    %1500 = vmatpush2.msra.mxu0 0.0
    %1501 = vmatprep.subr.mxu0 0.0
    %1502 = vmatpush2.msra.mxu0 0.0
    %1503 = vmatprep.subr.mxu0 0.0
    %1504 = vmatpush2.msra.mxu0 0.0
    %1505 = vmatprep.subr.mxu0 0.0
    %1506 = vmatpush2.msra.mxu0 0.0
    %1507 = vmatprep.subr.mxu0 0.0
    %1508 = vmatpush2.msra.mxu0 0.0
    %1509 = vmatprep.subr.mxu0 0.0
    %1510 = vmatpush2.msra.mxu0 0.0
    %1511 = vmatprep.subr.mxu0 0.0
    %1512 = vmatpush2.msra.mxu0 0.0
    %1513 = vmatprep.subr.mxu0 0.0
    %1514 = vmatpush2.msra.mxu0 0.0
    %1515 = vmatprep.subr.mxu0 0.0
    %1516 = vmatpush2.msra.mxu0 0.0
    %1517 = vmatprep.subr.mxu0 0.0
    %1518 = vmatpush2.msra.mxu0 0.0
    %1519 = vmatprep.subr.mxu0 0.0
    %1520 = vmatpush2.msra.mxu0 0.0
    %1521 = vmatprep.subr.mxu0 0.0
    %1522 = vmatpush2.msra.mxu0 0.0
    %1523 = vmatprep.mubr.f32.mxu0 0.0
    %1524 = vmatmul.mubr.f32.gmra.mxu0 %v1357
    %v1525 = vpop.f32.mrf.mxu0
    %v1526 = vadd.f32 %v129, %v1525
    %v1527 = vpop.f32.mrf.mxu0
    %v1528 = vadd.f32 %v133, %v1527
    %1529 = vdwg.mxu0
    %v1530 = vsel %vm149, %v1455, 0
    %1532 = vmatprep.subr.mxu0 0.0
    %1533 = vmatpush1.msra.mxu0 0.0
    %1534 = vmatprep.subr.mxu0 0.0
    %1535 = vmatpush1.msra.mxu0 0.0
    %1536 = vmatprep.subr.mxu0 0.0
    %1537 = vmatpush1.msra.mxu0 0.0
    %1538 = vmatprep.subr.mxu0 0.0
    %1539 = vmatpush1.msra.mxu0 0.0
    %1540 = vmatprep.subr.mxu0 0.0
    %1541 = vmatpush1.msra.mxu0 0.0
    %1542 = vmatprep.subr.mxu0 0.0
    %1543 = vmatpush1.msra.mxu0 0.0
    %1544 = vmatprep.subr.mxu0 0.0
    %1545 = vmatpush1.msra.mxu0 0.0
    %1546 = vmatprep.subr.mxu0 0.0
    %1547 = vmatpush1.msra.mxu0 0.0
    %1548 = vmatprep.subr.mxu0 %v123
    %1549 = vmatpush1.msra.mxu0 %v122
    %1550 = vmatprep.subr.mxu0 %v121
    %1551 = vmatpush1.msra.mxu0 %v120
    %1552 = vmatprep.subr.mxu0 %v119
    %1553 = vmatpush1.msra.mxu0 %v118
    %1554 = vmatprep.subr.mxu0 %v117
    %1555 = vmatpush1.msra.mxu0 %v116
    %1556 = vmatprep.subr.mxu0 %v115
    %1557 = vmatpush1.msra.mxu0 %v114
    %1558 = vmatprep.subr.mxu0 %v113
    %1559 = vmatpush1.msra.mxu0 %v112
    %1560 = vmatprep.subr.mxu0 %v111
    %1561 = vmatpush1.msra.mxu0 %v110
    %1562 = vmatprep.subr.mxu0 %v109
    %1563 = vmatpush1.msra.mxu0 %v108
    %1564 = vmatprep.subr.mxu0 0.0
    %1565 = vmatpush2.msra.mxu0 0.0
    %1566 = vmatprep.subr.mxu0 0.0
    %1567 = vmatpush2.msra.mxu0 0.0
    %1568 = vmatprep.subr.mxu0 0.0
    %1569 = vmatpush2.msra.mxu0 0.0
    %1570 = vmatprep.subr.mxu0 0.0
    %1571 = vmatpush2.msra.mxu0 0.0
    %1572 = vmatprep.subr.mxu0 0.0
    %1573 = vmatpush2.msra.mxu0 0.0
    %1574 = vmatprep.subr.mxu0 0.0
    %1575 = vmatpush2.msra.mxu0 0.0
    %1576 = vmatprep.subr.mxu0 0.0
    %1577 = vmatpush2.msra.mxu0 0.0
    %1578 = vmatprep.subr.mxu0 0.0
    %1579 = vmatpush2.msra.mxu0 0.0
    %1580 = vmatprep.subr.mxu0 0.0
    %1581 = vmatpush2.msra.mxu0 0.0
    %1582 = vmatprep.subr.mxu0 0.0
    %1583 = vmatpush2.msra.mxu0 0.0
    %1584 = vmatprep.subr.mxu0 0.0
    %1585 = vmatpush2.msra.mxu0 0.0
    %1586 = vmatprep.subr.mxu0 0.0
    %1587 = vmatpush2.msra.mxu0 0.0
    %1588 = vmatprep.subr.mxu0 0.0
    %1589 = vmatpush2.msra.mxu0 0.0
    %1590 = vmatprep.subr.mxu0 0.0
    %1591 = vmatpush2.msra.mxu0 0.0
    %1592 = vmatprep.subr.mxu0 0.0
    %1593 = vmatpush2.msra.mxu0 0.0
    %1594 = vmatprep.subr.mxu0 0.0
    %1595 = vmatpush2.msra.mxu0 0.0
    %1596 = vmatprep.mubr.f32.mxu0 0.0
    %1597 = vmatmul.mubr.f32.gmra.mxu0 %v1530
    %v1598 = vpop.f32.mrf.mxu0
    %v1599 = vadd.f32 %v142, %v1598
    %v1600 = vpop.f32.mrf.mxu0
    %v1601 = vadd.f32 %v146, %v1600
    %1602 = vdwg.mxu0
    %1603 = vmatprep.subr.mxu0 0.0
    %1604 = vmatpush1.msra.mxu0 0.0
    %1605 = vmatprep.subr.mxu0 0.0
    %1606 = vmatpush1.msra.mxu0 0.0
    %1607 = vmatprep.subr.mxu0 0.0
    %1608 = vmatpush1.msra.mxu0 0.0
    %1609 = vmatprep.subr.mxu0 0.0
    %1610 = vmatpush1.msra.mxu0 0.0
    %1611 = vmatprep.subr.mxu0 0.0
    %1612 = vmatpush1.msra.mxu0 0.0
    %1613 = vmatprep.subr.mxu0 0.0
    %1614 = vmatpush1.msra.mxu0 0.0
    %1615 = vmatprep.subr.mxu0 0.0
    %1616 = vmatpush1.msra.mxu0 0.0
    %1617 = vmatprep.subr.mxu0 0.0
    %1618 = vmatpush1.msra.mxu0 0.0
    %1619 = vmatprep.subr.mxu0 %v73
    %1620 = vmatpush1.msra.mxu0 %v72
    %1621 = vmatprep.subr.mxu0 %v71
    %1622 = vmatpush1.msra.mxu0 %v70
    %1623 = vmatprep.subr.mxu0 %v69
    %1624 = vmatpush1.msra.mxu0 %v68
    %1625 = vmatprep.subr.mxu0 %v67
    %1626 = vmatpush1.msra.mxu0 %v66
    %1627 = vmatprep.subr.mxu0 %v65
    %1628 = vmatpush1.msra.mxu0 %v64
    %1629 = vmatprep.subr.mxu0 %v63
    %1630 = vmatpush1.msra.mxu0 %v62
    %1631 = vmatprep.subr.mxu0 %v61
    %1632 = vmatpush1.msra.mxu0 %v60
    %1633 = vmatprep.subr.mxu0 %v59
    %1634 = vmatpush1.msra.mxu0 %v58
    %1635 = vmatprep.subr.mxu0 0.0
    %1636 = vmatpush2.msra.mxu0 0.0
    %1637 = vmatprep.subr.mxu0 0.0
    %1638 = vmatpush2.msra.mxu0 0.0
    %1639 = vmatprep.subr.mxu0 0.0
    %1640 = vmatpush2.msra.mxu0 0.0
    %1641 = vmatprep.subr.mxu0 0.0
    %1642 = vmatpush2.msra.mxu0 0.0
    %1643 = vmatprep.subr.mxu0 0.0
    %1644 = vmatpush2.msra.mxu0 0.0
    %1645 = vmatprep.subr.mxu0 0.0
    %1646 = vmatpush2.msra.mxu0 0.0
    %1647 = vmatprep.subr.mxu0 0.0
    %1648 = vmatpush2.msra.mxu0 0.0
    %1649 = vmatprep.subr.mxu0 0.0
    %1650 = vmatpush2.msra.mxu0 0.0
    %1651 = vmatprep.subr.mxu0 0.0
    %1652 = vmatpush2.msra.mxu0 0.0
    %1653 = vmatprep.subr.mxu0 0.0
    %1654 = vmatpush2.msra.mxu0 0.0
    %1655 = vmatprep.subr.mxu0 0.0
    %1656 = vmatpush2.msra.mxu0 0.0
    %1657 = vmatprep.subr.mxu0 0.0
    %1658 = vmatpush2.msra.mxu0 0.0
    %1659 = vmatprep.subr.mxu0 0.0
    %1660 = vmatpush2.msra.mxu0 0.0
    %1661 = vmatprep.subr.mxu0 0.0
    %1662 = vmatpush2.msra.mxu0 0.0
    %1663 = vmatprep.subr.mxu0 0.0
    %1664 = vmatpush2.msra.mxu0 0.0
    %1665 = vmatprep.subr.mxu0 0.0
    %1666 = vmatpush2.msra.mxu0 0.0
    %1667 = vmatprep.mubr.f32.mxu0 0.0
    %1668 = vmatmul.mubr.f32.gmra.mxu0 %v1530
    %v1669 = vpop.f32.mrf.mxu0
    %v1670 = vadd.f32 %v1526, %v1669
    %v1671 = vpop.f32.mrf.mxu0
    %v1672 = vadd.f32 %v1528, %v1671
    %1673 = vdwg.mxu0
    %v1674 = vxor.u32 %v1670, 2147483648
    %v1675 = vxor.u32 %v1672, 2147483648
    %v1676 = vmul.f32 %v1674, 1.442695
    %v1677 = vpow.pop %v1676
    %v1678 = vmul.f32 %v1675, 1.442695
    %v1679 = vpow.pop %v1678
    %v1680 = vadd.f32 %v1677, 1.0
    %v1681 = vadd.f32 %v1679, 1.0
    %v1682 = vrcp.pop %v1680
    %v1683 = vmul.f32 1.0, %v1682
    %v1684 = vrcp.pop %v1681
    %v1685 = vmul.f32 1.0, %v1684
    %v1686 = vmul.f32 %v1685, 2.0
    %v1687 = vsub.f32 %v1686, 1.0
    %v1688 = vmul.f32 %v1683, %v1351
    %v1689 = vmul.f32 %v1683, %v1687
    %1691 = vrot.lane.b32.xlu0 %v1689, 64
    %v1692 = vpop.permute.xlu0 %1691
    %v1694 = vadd.f32 %v1688, %v1692
    %v1695 = vtanh.pop %v1694
    %v1696 = vmul.f32 %v1685, %v1695
    %1698 = vrot.lane.b32.xlu0 %v1696, 64
    %v1699 = vpop.permute.xlu0 %1698
    %v1700 = vsel %vm149, %v1699, 0
    %1702 = vmatprep.subr.mxu0 0.0
    %1703 = vmatpush1.msra.mxu0 0.0
    %1704 = vmatprep.subr.mxu0 0.0
    %1705 = vmatpush1.msra.mxu0 0.0
    %1706 = vmatprep.subr.mxu0 0.0
    %1707 = vmatpush1.msra.mxu0 0.0
    %1708 = vmatprep.subr.mxu0 0.0
    %1709 = vmatpush1.msra.mxu0 0.0
    %1710 = vmatprep.subr.mxu0 0.0
    %1711 = vmatpush1.msra.mxu0 0.0
    %1712 = vmatprep.subr.mxu0 0.0
    %1713 = vmatpush1.msra.mxu0 0.0
    %1714 = vmatprep.subr.mxu0 0.0
    %1715 = vmatpush1.msra.mxu0 0.0
    %1716 = vmatprep.subr.mxu0 0.0
    %1717 = vmatpush1.msra.mxu0 0.0
    %1718 = vmatprep.subr.mxu0 %v90
    %1719 = vmatpush1.msra.mxu0 %v89
    %1720 = vmatprep.subr.mxu0 %v88
    %1721 = vmatpush1.msra.mxu0 %v87
    %1722 = vmatprep.subr.mxu0 %v86
    %1723 = vmatpush1.msra.mxu0 %v85
    %1724 = vmatprep.subr.mxu0 %v84
    %1725 = vmatpush1.msra.mxu0 %v83
    %1726 = vmatprep.subr.mxu0 %v82
    %1727 = vmatpush1.msra.mxu0 %v81
    %1728 = vmatprep.subr.mxu0 %v80
    %1729 = vmatpush1.msra.mxu0 %v79
    %1730 = vmatprep.subr.mxu0 %v78
    %1731 = vmatpush1.msra.mxu0 %v77
    %1732 = vmatprep.subr.mxu0 %v76
    %1733 = vmatpush1.msra.mxu0 %v75
    %1734 = vmatprep.subr.mxu0 0.0
    %1735 = vmatpush2.msra.mxu0 0.0
    %1736 = vmatprep.subr.mxu0 0.0
    %1737 = vmatpush2.msra.mxu0 0.0
    %1738 = vmatprep.subr.mxu0 0.0
    %1739 = vmatpush2.msra.mxu0 0.0
    %1740 = vmatprep.subr.mxu0 0.0
    %1741 = vmatpush2.msra.mxu0 0.0
    %1742 = vmatprep.subr.mxu0 0.0
    %1743 = vmatpush2.msra.mxu0 0.0
    %1744 = vmatprep.subr.mxu0 0.0
    %1745 = vmatpush2.msra.mxu0 0.0
    %1746 = vmatprep.subr.mxu0 0.0
    %1747 = vmatpush2.msra.mxu0 0.0
    %1748 = vmatprep.subr.mxu0 0.0
    %1749 = vmatpush2.msra.mxu0 0.0
    %1750 = vmatprep.subr.mxu0 0.0
    %1751 = vmatpush2.msra.mxu0 0.0
    %1752 = vmatprep.subr.mxu0 0.0
    %1753 = vmatpush2.msra.mxu0 0.0
    %1754 = vmatprep.subr.mxu0 0.0
    %1755 = vmatpush2.msra.mxu0 0.0
    %1756 = vmatprep.subr.mxu0 0.0
    %1757 = vmatpush2.msra.mxu0 0.0
    %1758 = vmatprep.subr.mxu0 0.0
    %1759 = vmatpush2.msra.mxu0 0.0
    %1760 = vmatprep.subr.mxu0 0.0
    %1761 = vmatpush2.msra.mxu0 0.0
    %1762 = vmatprep.subr.mxu0 0.0
    %1763 = vmatpush2.msra.mxu0 0.0
    %1764 = vmatprep.subr.mxu0 0.0
    %1765 = vmatpush2.msra.mxu0 0.0
    %1766 = vmatprep.mubr.f32.mxu0 0.0
    %1767 = vmatmul.mubr.f32.gmra.mxu0 %v1700
    %v1768 = vpop.f32.mrf.mxu0
    %v1769 = vadd.f32 %v1599, %v1768
    %v1770 = vpop.f32.mrf.mxu0
    %v1771 = vadd.f32 %v1601, %v1770
    %1772 = vdwg.mxu0
    %v1773 = vxor.u32 %v1769, 2147483648
    %v1774 = vxor.u32 %v1771, 2147483648
    %v1775 = vmul.f32 %v1773, 1.442695
    %v1776 = vpow.pop %v1775
    %v1777 = vmul.f32 %v1774, 1.442695
    %v1778 = vpow.pop %v1777
    %v1779 = vadd.f32 %v1776, 1.0
    %v1780 = vadd.f32 %v1778, 1.0
    %v1781 = vrcp.pop %v1779
    %v1782 = vmul.f32 1.0, %v1781
    %v1783 = vrcp.pop %v1780
    %v1784 = vmul.f32 1.0, %v1783
    %v1785 = vmul.f32 %v1784, 2.0
    %v1786 = vsub.f32 %v1785, 1.0
    %v1787 = vmul.f32 %v1782, %v1450
    %v1788 = vmul.f32 %v1782, %v1786
    %1790 = vrot.lane.b32.xlu0 %v1788, 64
    %v1791 = vpop.permute.xlu0 %1790
    %v1793 = vadd.f32 %v1787, %v1791
    %v1794 = vtanh.pop %v1793
    %v1795 = vmul.f32 %v1784, %v1794
    %1797 = vrot.lane.b32.xlu0 %v1795, 64
    %v1798 = vpop.permute.xlu0 %1797
    %s1800 = scalar_lea.vmem %s4, 32
    %1801 = vst.msk [vmem:[%s1800] sm:$0xff] %vm149, %v1798
    %1802 = vmatprep.subr.mxu0 0.0
    %1803 = vmatpush1.msra.mxu0 0.0
    %1804 = vmatprep.subr.mxu0 0.0
    %1805 = vmatpush1.msra.mxu0 0.0
    %1806 = vmatprep.subr.mxu0 0.0
    %1807 = vmatpush1.msra.mxu0 0.0
    %1808 = vmatprep.subr.mxu0 0.0
    %1809 = vmatpush1.msra.mxu0 0.0
    %1810 = vmatprep.subr.mxu0 0.0
    %1811 = vmatpush1.msra.mxu0 0.0
    %1812 = vmatprep.subr.mxu0 0.0
    %1813 = vmatpush1.msra.mxu0 0.0
    %1814 = vmatprep.subr.mxu0 0.0
    %1815 = vmatpush1.msra.mxu0 0.0
    %1816 = vmatprep.subr.mxu0 0.0
    %1817 = vmatpush1.msra.mxu0 0.0
    %1818 = vmatprep.subr.mxu0 %v106
    %1819 = vmatpush1.msra.mxu0 %v105
    %1820 = vmatprep.subr.mxu0 %v104
    %1821 = vmatpush1.msra.mxu0 %v103
    %1822 = vmatprep.subr.mxu0 %v102
    %1823 = vmatpush1.msra.mxu0 %v101
    %1824 = vmatprep.subr.mxu0 %v100
    %1825 = vmatpush1.msra.mxu0 %v99
    %1826 = vmatprep.subr.mxu0 %v98
    %1827 = vmatpush1.msra.mxu0 %v97
    %1828 = vmatprep.subr.mxu0 %v96
    %1829 = vmatpush1.msra.mxu0 %v95
    %1830 = vmatprep.subr.mxu0 %v94
    %1831 = vmatpush1.msra.mxu0 %v93
    %1832 = vmatprep.subr.mxu0 %v92
    %1833 = vmatpush1.msra.mxu0 %v91
    %1834 = vmatprep.subr.mxu0 0.0
    %1835 = vmatpush2.msra.mxu0 0.0
    %1836 = vmatprep.subr.mxu0 0.0
    %1837 = vmatpush2.msra.mxu0 0.0
    %1838 = vmatprep.subr.mxu0 0.0
    %1839 = vmatpush2.msra.mxu0 0.0
    %1840 = vmatprep.subr.mxu0 0.0
    %1841 = vmatpush2.msra.mxu0 0.0
    %1842 = vmatprep.subr.mxu0 0.0
    %1843 = vmatpush2.msra.mxu0 0.0
    %1844 = vmatprep.subr.mxu0 0.0
    %1845 = vmatpush2.msra.mxu0 0.0
    %1846 = vmatprep.subr.mxu0 0.0
    %1847 = vmatpush2.msra.mxu0 0.0
    %1848 = vmatprep.subr.mxu0 0.0
    %1849 = vmatpush2.msra.mxu0 0.0
    %1850 = vmatprep.subr.mxu0 0.0
    %1851 = vmatpush2.msra.mxu0 0.0
    %1852 = vmatprep.subr.mxu0 0.0
    %1853 = vmatpush2.msra.mxu0 0.0
    %1854 = vmatprep.subr.mxu0 0.0
    %1855 = vmatpush2.msra.mxu0 0.0
    %1856 = vmatprep.subr.mxu0 0.0
    %1857 = vmatpush2.msra.mxu0 0.0
    %1858 = vmatprep.subr.mxu0 0.0
    %1859 = vmatpush2.msra.mxu0 0.0
    %1860 = vmatprep.subr.mxu0 0.0
    %1861 = vmatpush2.msra.mxu0 0.0
    %1862 = vmatprep.subr.mxu0 0.0
    %1863 = vmatpush2.msra.mxu0 0.0
    %1864 = vmatprep.subr.mxu0 0.0
    %1865 = vmatpush2.msra.mxu0 0.0
    %1866 = vmatprep.mubr.f32.mxu0 0.0
    %1867 = vmatmul.mubr.f32.gmra.mxu0 %v1700
    %v1868 = vpop.f32.mrf.mxu0
    %v1869 = vadd.f32 %v129, %v1868
    %v1870 = vpop.f32.mrf.mxu0
    %v1871 = vadd.f32 %v133, %v1870
    %1872 = vdwg.mxu0
    %v1873 = vsel %vm149, %v1798, 0
    %1875 = vmatprep.subr.mxu0 0.0
    %1876 = vmatpush1.msra.mxu0 0.0
    %1877 = vmatprep.subr.mxu0 0.0
    %1878 = vmatpush1.msra.mxu0 0.0
    %1879 = vmatprep.subr.mxu0 0.0
    %1880 = vmatpush1.msra.mxu0 0.0
    %1881 = vmatprep.subr.mxu0 0.0
    %1882 = vmatpush1.msra.mxu0 0.0
    %1883 = vmatprep.subr.mxu0 0.0
    %1884 = vmatpush1.msra.mxu0 0.0
    %1885 = vmatprep.subr.mxu0 0.0
    %1886 = vmatpush1.msra.mxu0 0.0
    %1887 = vmatprep.subr.mxu0 0.0
    %1888 = vmatpush1.msra.mxu0 0.0
    %1889 = vmatprep.subr.mxu0 0.0
    %1890 = vmatpush1.msra.mxu0 0.0
    %1891 = vmatprep.subr.mxu0 %v123
    %1892 = vmatpush1.msra.mxu0 %v122
    %1893 = vmatprep.subr.mxu0 %v121
    %1894 = vmatpush1.msra.mxu0 %v120
    %1895 = vmatprep.subr.mxu0 %v119
    %1896 = vmatpush1.msra.mxu0 %v118
    %1897 = vmatprep.subr.mxu0 %v117
    %1898 = vmatpush1.msra.mxu0 %v116
    %1899 = vmatprep.subr.mxu0 %v115
    %1900 = vmatpush1.msra.mxu0 %v114
    %1901 = vmatprep.subr.mxu0 %v113
    %1902 = vmatpush1.msra.mxu0 %v112
    %1903 = vmatprep.subr.mxu0 %v111
    %1904 = vmatpush1.msra.mxu0 %v110
    %1905 = vmatprep.subr.mxu0 %v109
    %1906 = vmatpush1.msra.mxu0 %v108
    %1907 = vmatprep.subr.mxu0 0.0
    %1908 = vmatpush2.msra.mxu0 0.0
    %1909 = vmatprep.subr.mxu0 0.0
    %1910 = vmatpush2.msra.mxu0 0.0
    %1911 = vmatprep.subr.mxu0 0.0
    %1912 = vmatpush2.msra.mxu0 0.0
    %1913 = vmatprep.subr.mxu0 0.0
    %1914 = vmatpush2.msra.mxu0 0.0
    %1915 = vmatprep.subr.mxu0 0.0
    %1916 = vmatpush2.msra.mxu0 0.0
    %1917 = vmatprep.subr.mxu0 0.0
    %1918 = vmatpush2.msra.mxu0 0.0
    %1919 = vmatprep.subr.mxu0 0.0
    %1920 = vmatpush2.msra.mxu0 0.0
    %1921 = vmatprep.subr.mxu0 0.0
    %1922 = vmatpush2.msra.mxu0 0.0
    %1923 = vmatprep.subr.mxu0 0.0
    %1924 = vmatpush2.msra.mxu0 0.0
    %1925 = vmatprep.subr.mxu0 0.0
    %1926 = vmatpush2.msra.mxu0 0.0
    %1927 = vmatprep.subr.mxu0 0.0
    %1928 = vmatpush2.msra.mxu0 0.0
    %1929 = vmatprep.subr.mxu0 0.0
    %1930 = vmatpush2.msra.mxu0 0.0
    %1931 = vmatprep.subr.mxu0 0.0
    %1932 = vmatpush2.msra.mxu0 0.0
    %1933 = vmatprep.subr.mxu0 0.0
    %1934 = vmatpush2.msra.mxu0 0.0
    %1935 = vmatprep.subr.mxu0 0.0
    %1936 = vmatpush2.msra.mxu0 0.0
    %1937 = vmatprep.subr.mxu0 0.0
    %1938 = vmatpush2.msra.mxu0 0.0
    %1939 = vmatprep.mubr.f32.mxu0 0.0
    %1940 = vmatmul.mubr.f32.gmra.mxu0 %v1873
    %v1941 = vpop.f32.mrf.mxu0
    %v1942 = vadd.f32 %v142, %v1941
    %v1943 = vpop.f32.mrf.mxu0
    %v1944 = vadd.f32 %v146, %v1943
    %1945 = vdwg.mxu0
    %1946 = vmatprep.subr.mxu0 0.0
    %1947 = vmatpush1.msra.mxu0 0.0
    %1948 = vmatprep.subr.mxu0 0.0
    %1949 = vmatpush1.msra.mxu0 0.0
    %1950 = vmatprep.subr.mxu0 0.0
    %1951 = vmatpush1.msra.mxu0 0.0
    %1952 = vmatprep.subr.mxu0 0.0
    %1953 = vmatpush1.msra.mxu0 0.0
    %1954 = vmatprep.subr.mxu0 0.0
    %1955 = vmatpush1.msra.mxu0 0.0
    %1956 = vmatprep.subr.mxu0 0.0
    %1957 = vmatpush1.msra.mxu0 0.0
    %1958 = vmatprep.subr.mxu0 0.0
    %1959 = vmatpush1.msra.mxu0 0.0
    %1960 = vmatprep.subr.mxu0 0.0
    %1961 = vmatpush1.msra.mxu0 0.0
    %1962 = vmatprep.subr.mxu0 %v73
    %1963 = vmatpush1.msra.mxu0 %v72
    %1964 = vmatprep.subr.mxu0 %v71
    %1965 = vmatpush1.msra.mxu0 %v70
    %1966 = vmatprep.subr.mxu0 %v69
    %1967 = vmatpush1.msra.mxu0 %v68
    %1968 = vmatprep.subr.mxu0 %v67
    %1969 = vmatpush1.msra.mxu0 %v66
    %1970 = vmatprep.subr.mxu0 %v65
    %1971 = vmatpush1.msra.mxu0 %v64
    %1972 = vmatprep.subr.mxu0 %v63
    %1973 = vmatpush1.msra.mxu0 %v62
    %1974 = vmatprep.subr.mxu0 %v61
    %1975 = vmatpush1.msra.mxu0 %v60
    %1976 = vmatprep.subr.mxu0 %v59
    %1977 = vmatpush1.msra.mxu0 %v58
    %1978 = vmatprep.subr.mxu0 0.0
    %1979 = vmatpush2.msra.mxu0 0.0
    %1980 = vmatprep.subr.mxu0 0.0
    %1981 = vmatpush2.msra.mxu0 0.0
    %1982 = vmatprep.subr.mxu0 0.0
    %1983 = vmatpush2.msra.mxu0 0.0
    %1984 = vmatprep.subr.mxu0 0.0
    %1985 = vmatpush2.msra.mxu0 0.0
    %1986 = vmatprep.subr.mxu0 0.0
    %1987 = vmatpush2.msra.mxu0 0.0
    %1988 = vmatprep.subr.mxu0 0.0
    %1989 = vmatpush2.msra.mxu0 0.0
    %1990 = vmatprep.subr.mxu0 0.0
    %1991 = vmatpush2.msra.mxu0 0.0
    %1992 = vmatprep.subr.mxu0 0.0
    %1993 = vmatpush2.msra.mxu0 0.0
    %1994 = vmatprep.subr.mxu0 0.0
    %1995 = vmatpush2.msra.mxu0 0.0
    %1996 = vmatprep.subr.mxu0 0.0
    %1997 = vmatpush2.msra.mxu0 0.0
    %1998 = vmatprep.subr.mxu0 0.0
    %1999 = vmatpush2.msra.mxu0 0.0
    %2000 = vmatprep.subr.mxu0 0.0
    %2001 = vmatpush2.msra.mxu0 0.0
    %2002 = vmatprep.subr.mxu0 0.0
    %2003 = vmatpush2.msra.mxu0 0.0
    %2004 = vmatprep.subr.mxu0 0.0
    %2005 = vmatpush2.msra.mxu0 0.0
    %2006 = vmatprep.subr.mxu0 0.0
    %2007 = vmatpush2.msra.mxu0 0.0
    %2008 = vmatprep.subr.mxu0 0.0
    %2009 = vmatpush2.msra.mxu0 0.0
    %2010 = vmatprep.mubr.f32.mxu0 0.0
    %2011 = vmatmul.mubr.f32.gmra.mxu0 %v1873
    %v2012 = vpop.f32.mrf.mxu0
    %v2013 = vadd.f32 %v1869, %v2012
    %v2014 = vpop.f32.mrf.mxu0
    %v2015 = vadd.f32 %v1871, %v2014
    %2016 = vdwg.mxu0
    %v2017 = vxor.u32 %v2013, 2147483648
    %v2018 = vxor.u32 %v2015, 2147483648
    %v2019 = vmul.f32 %v2017, 1.442695
    %v2020 = vpow.pop %v2019
    %v2021 = vmul.f32 %v2018, 1.442695
    %v2022 = vpow.pop %v2021
    %v2023 = vadd.f32 %v2020, 1.0
    %v2024 = vadd.f32 %v2022, 1.0
    %v2025 = vrcp.pop %v2023
    %v2026 = vmul.f32 1.0, %v2025
    %v2027 = vrcp.pop %v2024
    %v2028 = vmul.f32 1.0, %v2027
    %v2029 = vmul.f32 %v2028, 2.0
    %v2030 = vsub.f32 %v2029, 1.0
    %v2031 = vmul.f32 %v2026, %v1694
    %v2032 = vmul.f32 %v2026, %v2030
    %2034 = vrot.lane.b32.xlu0 %v2032, 64
    %v2035 = vpop.permute.xlu0 %2034
    %v2037 = vadd.f32 %v2031, %v2035
    %v2038 = vtanh.pop %v2037
    %v2039 = vmul.f32 %v2028, %v2038
    %2041 = vrot.lane.b32.xlu0 %v2039, 64
    %v2042 = vpop.permute.xlu0 %2041
    %v2043 = vsel %vm149, %v2042, 0
    %2045 = vmatprep.subr.mxu0 0.0
    %2046 = vmatpush1.msra.mxu0 0.0
    %2047 = vmatprep.subr.mxu0 0.0
    %2048 = vmatpush1.msra.mxu0 0.0
    %2049 = vmatprep.subr.mxu0 0.0
    %2050 = vmatpush1.msra.mxu0 0.0
    %2051 = vmatprep.subr.mxu0 0.0
    %2052 = vmatpush1.msra.mxu0 0.0
    %2053 = vmatprep.subr.mxu0 0.0
    %2054 = vmatpush1.msra.mxu0 0.0
    %2055 = vmatprep.subr.mxu0 0.0
    %2056 = vmatpush1.msra.mxu0 0.0
    %2057 = vmatprep.subr.mxu0 0.0
    %2058 = vmatpush1.msra.mxu0 0.0
    %2059 = vmatprep.subr.mxu0 0.0
    %2060 = vmatpush1.msra.mxu0 0.0
    %2061 = vmatprep.subr.mxu0 %v90
    %2062 = vmatpush1.msra.mxu0 %v89
    %2063 = vmatprep.subr.mxu0 %v88
    %2064 = vmatpush1.msra.mxu0 %v87
    %2065 = vmatprep.subr.mxu0 %v86
    %2066 = vmatpush1.msra.mxu0 %v85
    %2067 = vmatprep.subr.mxu0 %v84
    %2068 = vmatpush1.msra.mxu0 %v83
    %2069 = vmatprep.subr.mxu0 %v82
    %2070 = vmatpush1.msra.mxu0 %v81
    %2071 = vmatprep.subr.mxu0 %v80
    %2072 = vmatpush1.msra.mxu0 %v79
    %2073 = vmatprep.subr.mxu0 %v78
    %2074 = vmatpush1.msra.mxu0 %v77
    %2075 = vmatprep.subr.mxu0 %v76
    %2076 = vmatpush1.msra.mxu0 %v75
    %2077 = vmatprep.subr.mxu0 0.0
    %2078 = vmatpush2.msra.mxu0 0.0
    %2079 = vmatprep.subr.mxu0 0.0
    %2080 = vmatpush2.msra.mxu0 0.0
    %2081 = vmatprep.subr.mxu0 0.0
    %2082 = vmatpush2.msra.mxu0 0.0
    %2083 = vmatprep.subr.mxu0 0.0
    %2084 = vmatpush2.msra.mxu0 0.0
    %2085 = vmatprep.subr.mxu0 0.0
    %2086 = vmatpush2.msra.mxu0 0.0
    %2087 = vmatprep.subr.mxu0 0.0
    %2088 = vmatpush2.msra.mxu0 0.0
    %2089 = vmatprep.subr.mxu0 0.0
    %2090 = vmatpush2.msra.mxu0 0.0
    %2091 = vmatprep.subr.mxu0 0.0
    %2092 = vmatpush2.msra.mxu0 0.0
    %2093 = vmatprep.subr.mxu0 0.0
    %2094 = vmatpush2.msra.mxu0 0.0
    %2095 = vmatprep.subr.mxu0 0.0
    %2096 = vmatpush2.msra.mxu0 0.0
    %2097 = vmatprep.subr.mxu0 0.0
    %2098 = vmatpush2.msra.mxu0 0.0
    %2099 = vmatprep.subr.mxu0 0.0
    %2100 = vmatpush2.msra.mxu0 0.0
    %2101 = vmatprep.subr.mxu0 0.0
    %2102 = vmatpush2.msra.mxu0 0.0
    %2103 = vmatprep.subr.mxu0 0.0
    %2104 = vmatpush2.msra.mxu0 0.0
    %2105 = vmatprep.subr.mxu0 0.0
    %2106 = vmatpush2.msra.mxu0 0.0
    %2107 = vmatprep.subr.mxu0 0.0
    %2108 = vmatpush2.msra.mxu0 0.0
    %2109 = vmatprep.mubr.f32.mxu0 0.0
    %2110 = vmatmul.mubr.f32.gmra.mxu0 %v2043
    %v2111 = vpop.f32.mrf.mxu0
    %v2112 = vadd.f32 %v1942, %v2111
    %v2113 = vpop.f32.mrf.mxu0
    %v2114 = vadd.f32 %v1944, %v2113
    %2115 = vdwg.mxu0
    %v2116 = vxor.u32 %v2112, 2147483648
    %v2117 = vxor.u32 %v2114, 2147483648
    %v2118 = vmul.f32 %v2116, 1.442695
    %v2119 = vpow.pop %v2118
    %v2120 = vmul.f32 %v2117, 1.442695
    %v2121 = vpow.pop %v2120
    %v2122 = vadd.f32 %v2119, 1.0
    %v2123 = vadd.f32 %v2121, 1.0
    %v2124 = vrcp.pop %v2122
    %v2125 = vmul.f32 1.0, %v2124
    %v2126 = vrcp.pop %v2123
    %v2127 = vmul.f32 1.0, %v2126
    %v2128 = vmul.f32 %v2127, 2.0
    %v2129 = vsub.f32 %v2128, 1.0
    %v2130 = vmul.f32 %v2125, %v1793
    %v2131 = vmul.f32 %v2125, %v2129
    %2133 = vrot.lane.b32.xlu0 %v2131, 64
    %v2134 = vpop.permute.xlu0 %2133
    %v2136 = vadd.f32 %v2130, %v2134
    %v2137 = vtanh.pop %v2136
    %v2138 = vmul.f32 %v2127, %v2137
    %2140 = vrot.lane.b32.xlu0 %v2138, 64
    %v2141 = vpop.permute.xlu0 %2140
    %s2143 = scalar_lea.vmem %s4, 40
    %2144 = vst.msk [vmem:[%s2143] sm:$0xff] %vm149, %v2141
    %2145 = vmatprep.subr.mxu0 0.0
    %2146 = vmatpush1.msra.mxu0 0.0
    %2147 = vmatprep.subr.mxu0 0.0
    %2148 = vmatpush1.msra.mxu0 0.0
    %2149 = vmatprep.subr.mxu0 0.0
    %2150 = vmatpush1.msra.mxu0 0.0
    %2151 = vmatprep.subr.mxu0 0.0
    %2152 = vmatpush1.msra.mxu0 0.0
    %2153 = vmatprep.subr.mxu0 0.0
    %2154 = vmatpush1.msra.mxu0 0.0
    %2155 = vmatprep.subr.mxu0 0.0
    %2156 = vmatpush1.msra.mxu0 0.0
    %2157 = vmatprep.subr.mxu0 0.0
    %2158 = vmatpush1.msra.mxu0 0.0
    %2159 = vmatprep.subr.mxu0 0.0
    %2160 = vmatpush1.msra.mxu0 0.0
    %2161 = vmatprep.subr.mxu0 %v106
    %2162 = vmatpush1.msra.mxu0 %v105
    %2163 = vmatprep.subr.mxu0 %v104
    %2164 = vmatpush1.msra.mxu0 %v103
    %2165 = vmatprep.subr.mxu0 %v102
    %2166 = vmatpush1.msra.mxu0 %v101
    %2167 = vmatprep.subr.mxu0 %v100
    %2168 = vmatpush1.msra.mxu0 %v99
    %2169 = vmatprep.subr.mxu0 %v98
    %2170 = vmatpush1.msra.mxu0 %v97
    %2171 = vmatprep.subr.mxu0 %v96
    %2172 = vmatpush1.msra.mxu0 %v95
    %2173 = vmatprep.subr.mxu0 %v94
    %2174 = vmatpush1.msra.mxu0 %v93
    %2175 = vmatprep.subr.mxu0 %v92
    %2176 = vmatpush1.msra.mxu0 %v91
    %2177 = vmatprep.subr.mxu0 0.0
    %2178 = vmatpush2.msra.mxu0 0.0
    %2179 = vmatprep.subr.mxu0 0.0
    %2180 = vmatpush2.msra.mxu0 0.0
    %2181 = vmatprep.subr.mxu0 0.0
    %2182 = vmatpush2.msra.mxu0 0.0
    %2183 = vmatprep.subr.mxu0 0.0
    %2184 = vmatpush2.msra.mxu0 0.0
    %2185 = vmatprep.subr.mxu0 0.0
    %2186 = vmatpush2.msra.mxu0 0.0
    %2187 = vmatprep.subr.mxu0 0.0
    %2188 = vmatpush2.msra.mxu0 0.0
    %2189 = vmatprep.subr.mxu0 0.0
    %2190 = vmatpush2.msra.mxu0 0.0
    %2191 = vmatprep.subr.mxu0 0.0
    %2192 = vmatpush2.msra.mxu0 0.0
    %2193 = vmatprep.subr.mxu0 0.0
    %2194 = vmatpush2.msra.mxu0 0.0
    %2195 = vmatprep.subr.mxu0 0.0
    %2196 = vmatpush2.msra.mxu0 0.0
    %2197 = vmatprep.subr.mxu0 0.0
    %2198 = vmatpush2.msra.mxu0 0.0
    %2199 = vmatprep.subr.mxu0 0.0
    %2200 = vmatpush2.msra.mxu0 0.0
    %2201 = vmatprep.subr.mxu0 0.0
    %2202 = vmatpush2.msra.mxu0 0.0
    %2203 = vmatprep.subr.mxu0 0.0
    %2204 = vmatpush2.msra.mxu0 0.0
    %2205 = vmatprep.subr.mxu0 0.0
    %2206 = vmatpush2.msra.mxu0 0.0
    %2207 = vmatprep.subr.mxu0 0.0
    %2208 = vmatpush2.msra.mxu0 0.0
    %2209 = vmatprep.mubr.f32.mxu0 0.0
    %2210 = vmatmul.mubr.f32.gmra.mxu0 %v2043
    %v2211 = vpop.f32.mrf.mxu0
    %v2212 = vadd.f32 %v129, %v2211
    %v2213 = vpop.f32.mrf.mxu0
    %v2214 = vadd.f32 %v133, %v2213
    %2215 = vdwg.mxu0
    %v2216 = vsel %vm149, %v2141, 0
    %2218 = vmatprep.subr.mxu0 0.0
    %2219 = vmatpush1.msra.mxu0 0.0
    %2220 = vmatprep.subr.mxu0 0.0
    %2221 = vmatpush1.msra.mxu0 0.0
    %2222 = vmatprep.subr.mxu0 0.0
    %2223 = vmatpush1.msra.mxu0 0.0
    %2224 = vmatprep.subr.mxu0 0.0
    %2225 = vmatpush1.msra.mxu0 0.0
    %2226 = vmatprep.subr.mxu0 0.0
    %2227 = vmatpush1.msra.mxu0 0.0
    %2228 = vmatprep.subr.mxu0 0.0
    %2229 = vmatpush1.msra.mxu0 0.0
    %2230 = vmatprep.subr.mxu0 0.0
    %2231 = vmatpush1.msra.mxu0 0.0
    %2232 = vmatprep.subr.mxu0 0.0
    %2233 = vmatpush1.msra.mxu0 0.0
    %2234 = vmatprep.subr.mxu0 %v123
    %2235 = vmatpush1.msra.mxu0 %v122
    %2236 = vmatprep.subr.mxu0 %v121
    %2237 = vmatpush1.msra.mxu0 %v120
    %2238 = vmatprep.subr.mxu0 %v119
    %2239 = vmatpush1.msra.mxu0 %v118
    %2240 = vmatprep.subr.mxu0 %v117
    %2241 = vmatpush1.msra.mxu0 %v116
    %2242 = vmatprep.subr.mxu0 %v115
    %2243 = vmatpush1.msra.mxu0 %v114
    %2244 = vmatprep.subr.mxu0 %v113
    %2245 = vmatpush1.msra.mxu0 %v112
    %2246 = vmatprep.subr.mxu0 %v111
    %2247 = vmatpush1.msra.mxu0 %v110
    %2248 = vmatprep.subr.mxu0 %v109
    %2249 = vmatpush1.msra.mxu0 %v108
    %2250 = vmatprep.subr.mxu0 0.0
    %2251 = vmatpush2.msra.mxu0 0.0
    %2252 = vmatprep.subr.mxu0 0.0
    %2253 = vmatpush2.msra.mxu0 0.0
    %2254 = vmatprep.subr.mxu0 0.0
    %2255 = vmatpush2.msra.mxu0 0.0
    %2256 = vmatprep.subr.mxu0 0.0
    %2257 = vmatpush2.msra.mxu0 0.0
    %2258 = vmatprep.subr.mxu0 0.0
    %2259 = vmatpush2.msra.mxu0 0.0
    %2260 = vmatprep.subr.mxu0 0.0
    %2261 = vmatpush2.msra.mxu0 0.0
    %2262 = vmatprep.subr.mxu0 0.0
    %2263 = vmatpush2.msra.mxu0 0.0
    %2264 = vmatprep.subr.mxu0 0.0
    %2265 = vmatpush2.msra.mxu0 0.0
    %2266 = vmatprep.subr.mxu0 0.0
    %2267 = vmatpush2.msra.mxu0 0.0
    %2268 = vmatprep.subr.mxu0 0.0
    %2269 = vmatpush2.msra.mxu0 0.0
    %2270 = vmatprep.subr.mxu0 0.0
    %2271 = vmatpush2.msra.mxu0 0.0
    %2272 = vmatprep.subr.mxu0 0.0
    %2273 = vmatpush2.msra.mxu0 0.0
    %2274 = vmatprep.subr.mxu0 0.0
    %2275 = vmatpush2.msra.mxu0 0.0
    %2276 = vmatprep.subr.mxu0 0.0
    %2277 = vmatpush2.msra.mxu0 0.0
    %2278 = vmatprep.subr.mxu0 0.0
    %2279 = vmatpush2.msra.mxu0 0.0
    %2280 = vmatprep.subr.mxu0 0.0
    %2281 = vmatpush2.msra.mxu0 0.0
    %2282 = vmatprep.mubr.f32.mxu0 0.0
    %2283 = vmatmul.mubr.f32.gmra.mxu0 %v2216
    %v2284 = vpop.f32.mrf.mxu0
    %v2285 = vadd.f32 %v142, %v2284
    %v2286 = vpop.f32.mrf.mxu0
    %v2287 = vadd.f32 %v146, %v2286
    %2288 = vdwg.mxu0
    %2289 = vmatprep.subr.mxu0 0.0
    %2290 = vmatpush1.msra.mxu0 0.0
    %2291 = vmatprep.subr.mxu0 0.0
    %2292 = vmatpush1.msra.mxu0 0.0
    %2293 = vmatprep.subr.mxu0 0.0
    %2294 = vmatpush1.msra.mxu0 0.0
    %2295 = vmatprep.subr.mxu0 0.0
    %2296 = vmatpush1.msra.mxu0 0.0
    %2297 = vmatprep.subr.mxu0 0.0
    %2298 = vmatpush1.msra.mxu0 0.0
    %2299 = vmatprep.subr.mxu0 0.0
    %2300 = vmatpush1.msra.mxu0 0.0
    %2301 = vmatprep.subr.mxu0 0.0
    %2302 = vmatpush1.msra.mxu0 0.0
    %2303 = vmatprep.subr.mxu0 0.0
    %2304 = vmatpush1.msra.mxu0 0.0
    %2305 = vmatprep.subr.mxu0 %v73
    %2306 = vmatpush1.msra.mxu0 %v72
    %2307 = vmatprep.subr.mxu0 %v71
    %2308 = vmatpush1.msra.mxu0 %v70
    %2309 = vmatprep.subr.mxu0 %v69
    %2310 = vmatpush1.msra.mxu0 %v68
    %2311 = vmatprep.subr.mxu0 %v67
    %2312 = vmatpush1.msra.mxu0 %v66
    %2313 = vmatprep.subr.mxu0 %v65
    %2314 = vmatpush1.msra.mxu0 %v64
    %2315 = vmatprep.subr.mxu0 %v63
    %2316 = vmatpush1.msra.mxu0 %v62
    %2317 = vmatprep.subr.mxu0 %v61
    %2318 = vmatpush1.msra.mxu0 %v60
    %2319 = vmatprep.subr.mxu0 %v59
    %2320 = vmatpush1.msra.mxu0 %v58
    %2321 = vmatprep.subr.mxu0 0.0
    %2322 = vmatpush2.msra.mxu0 0.0
    %2323 = vmatprep.subr.mxu0 0.0
    %2324 = vmatpush2.msra.mxu0 0.0
    %2325 = vmatprep.subr.mxu0 0.0
    %2326 = vmatpush2.msra.mxu0 0.0
    %2327 = vmatprep.subr.mxu0 0.0
    %2328 = vmatpush2.msra.mxu0 0.0
    %2329 = vmatprep.subr.mxu0 0.0
    %2330 = vmatpush2.msra.mxu0 0.0
    %2331 = vmatprep.subr.mxu0 0.0
    %2332 = vmatpush2.msra.mxu0 0.0
    %2333 = vmatprep.subr.mxu0 0.0
    %2334 = vmatpush2.msra.mxu0 0.0
    %2335 = vmatprep.subr.mxu0 0.0
    %2336 = vmatpush2.msra.mxu0 0.0
    %2337 = vmatprep.subr.mxu0 0.0
    %2338 = vmatpush2.msra.mxu0 0.0
    %2339 = vmatprep.subr.mxu0 0.0
    %2340 = vmatpush2.msra.mxu0 0.0
    %2341 = vmatprep.subr.mxu0 0.0
    %2342 = vmatpush2.msra.mxu0 0.0
    %2343 = vmatprep.subr.mxu0 0.0
    %2344 = vmatpush2.msra.mxu0 0.0
    %2345 = vmatprep.subr.mxu0 0.0
    %2346 = vmatpush2.msra.mxu0 0.0
    %2347 = vmatprep.subr.mxu0 0.0
    %2348 = vmatpush2.msra.mxu0 0.0
    %2349 = vmatprep.subr.mxu0 0.0
    %2350 = vmatpush2.msra.mxu0 0.0
    %2351 = vmatprep.subr.mxu0 0.0
    %2352 = vmatpush2.msra.mxu0 0.0
    %2353 = vmatprep.mubr.f32.mxu0 0.0
    %2354 = vmatmul.mubr.f32.gmra.mxu0 %v2216
    %v2355 = vpop.f32.mrf.mxu0
    %v2356 = vadd.f32 %v2212, %v2355
    %v2357 = vpop.f32.mrf.mxu0
    %v2358 = vadd.f32 %v2214, %v2357
    %2359 = vdwg.mxu0
    %v2360 = vxor.u32 %v2356, 2147483648
    %v2361 = vxor.u32 %v2358, 2147483648
    %v2362 = vmul.f32 %v2360, 1.442695
    %v2363 = vpow.pop %v2362
    %v2364 = vmul.f32 %v2361, 1.442695
    %v2365 = vpow.pop %v2364
    %v2366 = vadd.f32 %v2363, 1.0
    %v2367 = vadd.f32 %v2365, 1.0
    %v2368 = vrcp.pop %v2366
    %v2369 = vmul.f32 1.0, %v2368
    %v2370 = vrcp.pop %v2367
    %v2371 = vmul.f32 1.0, %v2370
    %v2372 = vmul.f32 %v2371, 2.0
    %v2373 = vsub.f32 %v2372, 1.0
    %v2374 = vmul.f32 %v2369, %v2037
    %v2375 = vmul.f32 %v2369, %v2373
    %2377 = vrot.lane.b32.xlu0 %v2375, 64
    %v2378 = vpop.permute.xlu0 %2377
    %v2380 = vadd.f32 %v2374, %v2378
    %v2381 = vtanh.pop %v2380
    %v2382 = vmul.f32 %v2371, %v2381
    %2384 = vrot.lane.b32.xlu0 %v2382, 64
    %v2385 = vpop.permute.xlu0 %2384
    %v2386 = vsel %vm149, %v2385, 0
    %2388 = vmatprep.subr.mxu0 0.0
    %2389 = vmatpush1.msra.mxu0 0.0
    %2390 = vmatprep.subr.mxu0 0.0
    %2391 = vmatpush1.msra.mxu0 0.0
    %2392 = vmatprep.subr.mxu0 0.0
    %2393 = vmatpush1.msra.mxu0 0.0
    %2394 = vmatprep.subr.mxu0 0.0
    %2395 = vmatpush1.msra.mxu0 0.0
    %2396 = vmatprep.subr.mxu0 0.0
    %2397 = vmatpush1.msra.mxu0 0.0
    %2398 = vmatprep.subr.mxu0 0.0
    %2399 = vmatpush1.msra.mxu0 0.0
    %2400 = vmatprep.subr.mxu0 0.0
    %2401 = vmatpush1.msra.mxu0 0.0
    %2402 = vmatprep.subr.mxu0 0.0
    %2403 = vmatpush1.msra.mxu0 0.0
    %2404 = vmatprep.subr.mxu0 %v90
    %2405 = vmatpush1.msra.mxu0 %v89
    %2406 = vmatprep.subr.mxu0 %v88
    %2407 = vmatpush1.msra.mxu0 %v87
    %2408 = vmatprep.subr.mxu0 %v86
    %2409 = vmatpush1.msra.mxu0 %v85
    %2410 = vmatprep.subr.mxu0 %v84
    %2411 = vmatpush1.msra.mxu0 %v83
    %2412 = vmatprep.subr.mxu0 %v82
    %2413 = vmatpush1.msra.mxu0 %v81
    %2414 = vmatprep.subr.mxu0 %v80
    %2415 = vmatpush1.msra.mxu0 %v79
    %2416 = vmatprep.subr.mxu0 %v78
    %2417 = vmatpush1.msra.mxu0 %v77
    %2418 = vmatprep.subr.mxu0 %v76
    %2419 = vmatpush1.msra.mxu0 %v75
    %2420 = vmatprep.subr.mxu0 0.0
    %2421 = vmatpush2.msra.mxu0 0.0
    %2422 = vmatprep.subr.mxu0 0.0
    %2423 = vmatpush2.msra.mxu0 0.0
    %2424 = vmatprep.subr.mxu0 0.0
    %2425 = vmatpush2.msra.mxu0 0.0
    %2426 = vmatprep.subr.mxu0 0.0
    %2427 = vmatpush2.msra.mxu0 0.0
    %2428 = vmatprep.subr.mxu0 0.0
    %2429 = vmatpush2.msra.mxu0 0.0
    %2430 = vmatprep.subr.mxu0 0.0
    %2431 = vmatpush2.msra.mxu0 0.0
    %2432 = vmatprep.subr.mxu0 0.0
    %2433 = vmatpush2.msra.mxu0 0.0
    %2434 = vmatprep.subr.mxu0 0.0
    %2435 = vmatpush2.msra.mxu0 0.0
    %2436 = vmatprep.subr.mxu0 0.0
    %2437 = vmatpush2.msra.mxu0 0.0
    %2438 = vmatprep.subr.mxu0 0.0
    %2439 = vmatpush2.msra.mxu0 0.0
    %2440 = vmatprep.subr.mxu0 0.0
    %2441 = vmatpush2.msra.mxu0 0.0
    %2442 = vmatprep.subr.mxu0 0.0
    %2443 = vmatpush2.msra.mxu0 0.0
    %2444 = vmatprep.subr.mxu0 0.0
    %2445 = vmatpush2.msra.mxu0 0.0
    %2446 = vmatprep.subr.mxu0 0.0
    %2447 = vmatpush2.msra.mxu0 0.0
    %2448 = vmatprep.subr.mxu0 0.0
    %2449 = vmatpush2.msra.mxu0 0.0
    %2450 = vmatprep.subr.mxu0 0.0
    %2451 = vmatpush2.msra.mxu0 0.0
    %2452 = vmatprep.mubr.f32.mxu0 0.0
    %2453 = vmatmul.mubr.f32.gmra.mxu0 %v2386
    %v2454 = vpop.f32.mrf.mxu0
    %v2455 = vadd.f32 %v2285, %v2454
    %v2456 = vpop.f32.mrf.mxu0
    %v2457 = vadd.f32 %v2287, %v2456
    %2458 = vdwg.mxu0
    %v2459 = vxor.u32 %v2455, 2147483648
    %v2460 = vxor.u32 %v2457, 2147483648
    %v2461 = vmul.f32 %v2459, 1.442695
    %v2462 = vpow.pop %v2461
    %v2463 = vmul.f32 %v2460, 1.442695
    %v2464 = vpow.pop %v2463
    %v2465 = vadd.f32 %v2462, 1.0
    %v2466 = vadd.f32 %v2464, 1.0
    %v2467 = vrcp.pop %v2465
    %v2468 = vmul.f32 1.0, %v2467
    %v2469 = vrcp.pop %v2466
    %v2470 = vmul.f32 1.0, %v2469
    %v2471 = vmul.f32 %v2470, 2.0
    %v2472 = vsub.f32 %v2471, 1.0
    %v2473 = vmul.f32 %v2468, %v2136
    %v2474 = vmul.f32 %v2468, %v2472
    %2476 = vrot.lane.b32.xlu0 %v2474, 64
    %v2477 = vpop.permute.xlu0 %2476
    %v2479 = vadd.f32 %v2473, %v2477
    %v2480 = vtanh.pop %v2479
    %v2481 = vmul.f32 %v2470, %v2480
    %2483 = vrot.lane.b32.xlu0 %v2481, 64
    %v2484 = vpop.permute.xlu0 %2483
    %s2486 = scalar_lea.vmem %s4, 48
    %2487 = vst.msk [vmem:[%s2486] sm:$0xff] %vm149, %v2484
    %2488 = vmatprep.subr.mxu0 0.0
    %2489 = vmatpush1.msra.mxu0 0.0
    %2490 = vmatprep.subr.mxu0 0.0
    %2491 = vmatpush1.msra.mxu0 0.0
    %2492 = vmatprep.subr.mxu0 0.0
    %2493 = vmatpush1.msra.mxu0 0.0
    %2494 = vmatprep.subr.mxu0 0.0
    %2495 = vmatpush1.msra.mxu0 0.0
    %2496 = vmatprep.subr.mxu0 0.0
    %2497 = vmatpush1.msra.mxu0 0.0
    %2498 = vmatprep.subr.mxu0 0.0
    %2499 = vmatpush1.msra.mxu0 0.0
    %2500 = vmatprep.subr.mxu0 0.0
    %2501 = vmatpush1.msra.mxu0 0.0
    %2502 = vmatprep.subr.mxu0 0.0
    %2503 = vmatpush1.msra.mxu0 0.0
    %2504 = vmatprep.subr.mxu0 %v106
    %2505 = vmatpush1.msra.mxu0 %v105
    %2506 = vmatprep.subr.mxu0 %v104
    %2507 = vmatpush1.msra.mxu0 %v103
    %2508 = vmatprep.subr.mxu0 %v102
    %2509 = vmatpush1.msra.mxu0 %v101
    %2510 = vmatprep.subr.mxu0 %v100
    %2511 = vmatpush1.msra.mxu0 %v99
    %2512 = vmatprep.subr.mxu0 %v98
    %2513 = vmatpush1.msra.mxu0 %v97
    %2514 = vmatprep.subr.mxu0 %v96
    %2515 = vmatpush1.msra.mxu0 %v95
    %2516 = vmatprep.subr.mxu0 %v94
    %2517 = vmatpush1.msra.mxu0 %v93
    %2518 = vmatprep.subr.mxu0 %v92
    %2519 = vmatpush1.msra.mxu0 %v91
    %2520 = vmatprep.subr.mxu0 0.0
    %2521 = vmatpush2.msra.mxu0 0.0
    %2522 = vmatprep.subr.mxu0 0.0
    %2523 = vmatpush2.msra.mxu0 0.0
    %2524 = vmatprep.subr.mxu0 0.0
    %2525 = vmatpush2.msra.mxu0 0.0
    %2526 = vmatprep.subr.mxu0 0.0
    %2527 = vmatpush2.msra.mxu0 0.0
    %2528 = vmatprep.subr.mxu0 0.0
    %2529 = vmatpush2.msra.mxu0 0.0
    %2530 = vmatprep.subr.mxu0 0.0
    %2531 = vmatpush2.msra.mxu0 0.0
    %2532 = vmatprep.subr.mxu0 0.0
    %2533 = vmatpush2.msra.mxu0 0.0
    %2534 = vmatprep.subr.mxu0 0.0
    %2535 = vmatpush2.msra.mxu0 0.0
    %2536 = vmatprep.subr.mxu0 0.0
    %2537 = vmatpush2.msra.mxu0 0.0
    %2538 = vmatprep.subr.mxu0 0.0
    %2539 = vmatpush2.msra.mxu0 0.0
    %2540 = vmatprep.subr.mxu0 0.0
    %2541 = vmatpush2.msra.mxu0 0.0
    %2542 = vmatprep.subr.mxu0 0.0
    %2543 = vmatpush2.msra.mxu0 0.0
    %2544 = vmatprep.subr.mxu0 0.0
    %2545 = vmatpush2.msra.mxu0 0.0
    %2546 = vmatprep.subr.mxu0 0.0
    %2547 = vmatpush2.msra.mxu0 0.0
    %2548 = vmatprep.subr.mxu0 0.0
    %2549 = vmatpush2.msra.mxu0 0.0
    %2550 = vmatprep.subr.mxu0 0.0
    %2551 = vmatpush2.msra.mxu0 0.0
    %2552 = vmatprep.mubr.f32.mxu0 0.0
    %2553 = vmatmul.mubr.f32.gmra.mxu0 %v2386
    %v2554 = vpop.f32.mrf.mxu0
    %v2555 = vadd.f32 %v129, %v2554
    %v2556 = vpop.f32.mrf.mxu0
    %v2557 = vadd.f32 %v133, %v2556
    %2558 = vdwg.mxu0
    %v2559 = vsel %vm149, %v2484, 0
    %2561 = vmatprep.subr.mxu0 0.0
    %2562 = vmatpush1.msra.mxu0 0.0
    %2563 = vmatprep.subr.mxu0 0.0
    %2564 = vmatpush1.msra.mxu0 0.0
    %2565 = vmatprep.subr.mxu0 0.0
    %2566 = vmatpush1.msra.mxu0 0.0
    %2567 = vmatprep.subr.mxu0 0.0
    %2568 = vmatpush1.msra.mxu0 0.0
    %2569 = vmatprep.subr.mxu0 0.0
    %2570 = vmatpush1.msra.mxu0 0.0
    %2571 = vmatprep.subr.mxu0 0.0
    %2572 = vmatpush1.msra.mxu0 0.0
    %2573 = vmatprep.subr.mxu0 0.0
    %2574 = vmatpush1.msra.mxu0 0.0
    %2575 = vmatprep.subr.mxu0 0.0
    %2576 = vmatpush1.msra.mxu0 0.0
    %2577 = vmatprep.subr.mxu0 %v123
    %2578 = vmatpush1.msra.mxu0 %v122
    %2579 = vmatprep.subr.mxu0 %v121
    %2580 = vmatpush1.msra.mxu0 %v120
    %2581 = vmatprep.subr.mxu0 %v119
    %2582 = vmatpush1.msra.mxu0 %v118
    %2583 = vmatprep.subr.mxu0 %v117
    %2584 = vmatpush1.msra.mxu0 %v116
    %2585 = vmatprep.subr.mxu0 %v115
    %2586 = vmatpush1.msra.mxu0 %v114
    %2587 = vmatprep.subr.mxu0 %v113
    %2588 = vmatpush1.msra.mxu0 %v112
    %2589 = vmatprep.subr.mxu0 %v111
    %2590 = vmatpush1.msra.mxu0 %v110
    %2591 = vmatprep.subr.mxu0 %v109
    %2592 = vmatpush1.msra.mxu0 %v108
    %2593 = vmatprep.subr.mxu0 0.0
    %2594 = vmatpush2.msra.mxu0 0.0
    %2595 = vmatprep.subr.mxu0 0.0
    %2596 = vmatpush2.msra.mxu0 0.0
    %2597 = vmatprep.subr.mxu0 0.0
    %2598 = vmatpush2.msra.mxu0 0.0
    %2599 = vmatprep.subr.mxu0 0.0
    %2600 = vmatpush2.msra.mxu0 0.0
    %2601 = vmatprep.subr.mxu0 0.0
    %2602 = vmatpush2.msra.mxu0 0.0
    %2603 = vmatprep.subr.mxu0 0.0
    %2604 = vmatpush2.msra.mxu0 0.0
    %2605 = vmatprep.subr.mxu0 0.0
    %2606 = vmatpush2.msra.mxu0 0.0
    %2607 = vmatprep.subr.mxu0 0.0
    %2608 = vmatpush2.msra.mxu0 0.0
    %2609 = vmatprep.subr.mxu0 0.0
    %2610 = vmatpush2.msra.mxu0 0.0
    %2611 = vmatprep.subr.mxu0 0.0
    %2612 = vmatpush2.msra.mxu0 0.0
    %2613 = vmatprep.subr.mxu0 0.0
    %2614 = vmatpush2.msra.mxu0 0.0
    %2615 = vmatprep.subr.mxu0 0.0
    %2616 = vmatpush2.msra.mxu0 0.0
    %2617 = vmatprep.subr.mxu0 0.0
    %2618 = vmatpush2.msra.mxu0 0.0
    %2619 = vmatprep.subr.mxu0 0.0
    %2620 = vmatpush2.msra.mxu0 0.0
    %2621 = vmatprep.subr.mxu0 0.0
    %2622 = vmatpush2.msra.mxu0 0.0
    %2623 = vmatprep.subr.mxu0 0.0
    %2624 = vmatpush2.msra.mxu0 0.0
    %2625 = vmatprep.mubr.f32.mxu0 0.0
    %2626 = vmatmul.mubr.f32.gmra.mxu0 %v2559
    %v2627 = vpop.f32.mrf.mxu0
    %v2628 = vadd.f32 %v142, %v2627
    %v2629 = vpop.f32.mrf.mxu0
    %v2630 = vadd.f32 %v146, %v2629
    %2631 = vdwg.mxu0
    %2632 = vmatprep.subr.mxu0 0.0
    %2633 = vmatpush1.msra.mxu0 0.0
    %2634 = vmatprep.subr.mxu0 0.0
    %2635 = vmatpush1.msra.mxu0 0.0
    %2636 = vmatprep.subr.mxu0 0.0
    %2637 = vmatpush1.msra.mxu0 0.0
    %2638 = vmatprep.subr.mxu0 0.0
    %2639 = vmatpush1.msra.mxu0 0.0
    %2640 = vmatprep.subr.mxu0 0.0
    %2641 = vmatpush1.msra.mxu0 0.0
    %2642 = vmatprep.subr.mxu0 0.0
    %2643 = vmatpush1.msra.mxu0 0.0
    %2644 = vmatprep.subr.mxu0 0.0
    %2645 = vmatpush1.msra.mxu0 0.0
    %2646 = vmatprep.subr.mxu0 0.0
    %2647 = vmatpush1.msra.mxu0 0.0
    %2648 = vmatprep.subr.mxu0 %v73
    %2649 = vmatpush1.msra.mxu0 %v72
    %2650 = vmatprep.subr.mxu0 %v71
    %2651 = vmatpush1.msra.mxu0 %v70
    %2652 = vmatprep.subr.mxu0 %v69
    %2653 = vmatpush1.msra.mxu0 %v68
    %2654 = vmatprep.subr.mxu0 %v67
    %2655 = vmatpush1.msra.mxu0 %v66
    %2656 = vmatprep.subr.mxu0 %v65
    %2657 = vmatpush1.msra.mxu0 %v64
    %2658 = vmatprep.subr.mxu0 %v63
    %2659 = vmatpush1.msra.mxu0 %v62
    %2660 = vmatprep.subr.mxu0 %v61
    %2661 = vmatpush1.msra.mxu0 %v60
    %2662 = vmatprep.subr.mxu0 %v59
    %2663 = vmatpush1.msra.mxu0 %v58
    %2664 = vmatprep.subr.mxu0 0.0
    %2665 = vmatpush2.msra.mxu0 0.0
    %2666 = vmatprep.subr.mxu0 0.0
    %2667 = vmatpush2.msra.mxu0 0.0
    %2668 = vmatprep.subr.mxu0 0.0
    %2669 = vmatpush2.msra.mxu0 0.0
    %2670 = vmatprep.subr.mxu0 0.0
    %2671 = vmatpush2.msra.mxu0 0.0
    %2672 = vmatprep.subr.mxu0 0.0
    %2673 = vmatpush2.msra.mxu0 0.0
    %2674 = vmatprep.subr.mxu0 0.0
    %2675 = vmatpush2.msra.mxu0 0.0
    %2676 = vmatprep.subr.mxu0 0.0
    %2677 = vmatpush2.msra.mxu0 0.0
    %2678 = vmatprep.subr.mxu0 0.0
    %2679 = vmatpush2.msra.mxu0 0.0
    %2680 = vmatprep.subr.mxu0 0.0
    %2681 = vmatpush2.msra.mxu0 0.0
    %2682 = vmatprep.subr.mxu0 0.0
    %2683 = vmatpush2.msra.mxu0 0.0
    %2684 = vmatprep.subr.mxu0 0.0
    %2685 = vmatpush2.msra.mxu0 0.0
    %2686 = vmatprep.subr.mxu0 0.0
    %2687 = vmatpush2.msra.mxu0 0.0
    %2688 = vmatprep.subr.mxu0 0.0
    %2689 = vmatpush2.msra.mxu0 0.0
    %2690 = vmatprep.subr.mxu0 0.0
    %2691 = vmatpush2.msra.mxu0 0.0
    %2692 = vmatprep.subr.mxu0 0.0
    %2693 = vmatpush2.msra.mxu0 0.0
    %2694 = vmatprep.subr.mxu0 0.0
    %2695 = vmatpush2.msra.mxu0 0.0
    %2696 = vmatprep.mubr.f32.mxu0 0.0
    %2697 = vmatmul.mubr.f32.gmra.mxu0 %v2559
    %v2698 = vpop.f32.mrf.mxu0
    %v2699 = vadd.f32 %v2555, %v2698
    %v2700 = vpop.f32.mrf.mxu0
    %v2701 = vadd.f32 %v2557, %v2700
    %2702 = vdwg.mxu0
    %v2703 = vxor.u32 %v2699, 2147483648
    %v2704 = vxor.u32 %v2701, 2147483648
    %v2705 = vmul.f32 %v2703, 1.442695
    %v2706 = vpow.pop %v2705
    %v2707 = vmul.f32 %v2704, 1.442695
    %v2708 = vpow.pop %v2707
    %v2709 = vadd.f32 %v2706, 1.0
    %v2710 = vadd.f32 %v2708, 1.0
    %v2711 = vrcp.pop %v2709
    %v2712 = vmul.f32 1.0, %v2711
    %v2713 = vrcp.pop %v2710
    %v2714 = vmul.f32 1.0, %v2713
    %v2715 = vmul.f32 %v2714, 2.0
    %v2716 = vsub.f32 %v2715, 1.0
    %v2717 = vmul.f32 %v2712, %v2380
    %v2718 = vmul.f32 %v2712, %v2716
    %2720 = vrot.lane.b32.xlu0 %v2718, 64
    %v2721 = vpop.permute.xlu0 %2720
    %v2723 = vadd.f32 %v2717, %v2721
    %v2724 = vtanh.pop %v2723
    %v2725 = vmul.f32 %v2714, %v2724
    %2727 = vrot.lane.b32.xlu0 %v2725, 64
    %v2728 = vpop.permute.xlu0 %2727
    %v2729 = vsel %vm149, %v2728, 0
    %2731 = vmatprep.subr.mxu0 0.0
    %2732 = vmatpush1.msra.mxu0 0.0
    %2733 = vmatprep.subr.mxu0 0.0
    %2734 = vmatpush1.msra.mxu0 0.0
    %2735 = vmatprep.subr.mxu0 0.0
    %2736 = vmatpush1.msra.mxu0 0.0
    %2737 = vmatprep.subr.mxu0 0.0
    %2738 = vmatpush1.msra.mxu0 0.0
    %2739 = vmatprep.subr.mxu0 0.0
    %2740 = vmatpush1.msra.mxu0 0.0
    %2741 = vmatprep.subr.mxu0 0.0
    %2742 = vmatpush1.msra.mxu0 0.0
    %2743 = vmatprep.subr.mxu0 0.0
    %2744 = vmatpush1.msra.mxu0 0.0
    %2745 = vmatprep.subr.mxu0 0.0
    %2746 = vmatpush1.msra.mxu0 0.0
    %2747 = vmatprep.subr.mxu0 %v90
    %2748 = vmatpush1.msra.mxu0 %v89
    %2749 = vmatprep.subr.mxu0 %v88
    %2750 = vmatpush1.msra.mxu0 %v87
    %2751 = vmatprep.subr.mxu0 %v86
    %2752 = vmatpush1.msra.mxu0 %v85
    %2753 = vmatprep.subr.mxu0 %v84
    %2754 = vmatpush1.msra.mxu0 %v83
    %2755 = vmatprep.subr.mxu0 %v82
    %2756 = vmatpush1.msra.mxu0 %v81
    %2757 = vmatprep.subr.mxu0 %v80
    %2758 = vmatpush1.msra.mxu0 %v79
    %2759 = vmatprep.subr.mxu0 %v78
    %2760 = vmatpush1.msra.mxu0 %v77
    %2761 = vmatprep.subr.mxu0 %v76
    %2762 = vmatpush1.msra.mxu0 %v75
    %2763 = vmatprep.subr.mxu0 0.0
    %2764 = vmatpush2.msra.mxu0 0.0
    %2765 = vmatprep.subr.mxu0 0.0
    %2766 = vmatpush2.msra.mxu0 0.0
    %2767 = vmatprep.subr.mxu0 0.0
    %2768 = vmatpush2.msra.mxu0 0.0
    %2769 = vmatprep.subr.mxu0 0.0
    %2770 = vmatpush2.msra.mxu0 0.0
    %2771 = vmatprep.subr.mxu0 0.0
    %2772 = vmatpush2.msra.mxu0 0.0
    %2773 = vmatprep.subr.mxu0 0.0
    %2774 = vmatpush2.msra.mxu0 0.0
    %2775 = vmatprep.subr.mxu0 0.0
    %2776 = vmatpush2.msra.mxu0 0.0
    %2777 = vmatprep.subr.mxu0 0.0
    %2778 = vmatpush2.msra.mxu0 0.0
    %2779 = vmatprep.subr.mxu0 0.0
    %2780 = vmatpush2.msra.mxu0 0.0
    %2781 = vmatprep.subr.mxu0 0.0
    %2782 = vmatpush2.msra.mxu0 0.0
    %2783 = vmatprep.subr.mxu0 0.0
    %2784 = vmatpush2.msra.mxu0 0.0
    %2785 = vmatprep.subr.mxu0 0.0
    %2786 = vmatpush2.msra.mxu0 0.0
    %2787 = vmatprep.subr.mxu0 0.0
    %2788 = vmatpush2.msra.mxu0 0.0
    %2789 = vmatprep.subr.mxu0 0.0
    %2790 = vmatpush2.msra.mxu0 0.0
    %2791 = vmatprep.subr.mxu0 0.0
    %2792 = vmatpush2.msra.mxu0 0.0
    %2793 = vmatprep.subr.mxu0 0.0
    %2794 = vmatpush2.msra.mxu0 0.0
    %2795 = vmatprep.mubr.f32.mxu0 0.0
    %2796 = vmatmul.mubr.f32.gmra.mxu0 %v2729
    %v2797 = vpop.f32.mrf.mxu0
    %v2798 = vadd.f32 %v2628, %v2797
    %v2799 = vpop.f32.mrf.mxu0
    %v2800 = vadd.f32 %v2630, %v2799
    %2801 = vdwg.mxu0
    %v2802 = vxor.u32 %v2798, 2147483648
    %v2803 = vxor.u32 %v2800, 2147483648
    %v2804 = vmul.f32 %v2802, 1.442695
    %v2805 = vpow.pop %v2804
    %v2806 = vmul.f32 %v2803, 1.442695
    %v2807 = vpow.pop %v2806
    %v2808 = vadd.f32 %v2805, 1.0
    %v2809 = vadd.f32 %v2807, 1.0
    %v2810 = vrcp.pop %v2808
    %v2811 = vmul.f32 1.0, %v2810
    %v2812 = vrcp.pop %v2809
    %v2813 = vmul.f32 1.0, %v2812
    %v2814 = vmul.f32 %v2813, 2.0
    %v2815 = vsub.f32 %v2814, 1.0
    %v2816 = vmul.f32 %v2811, %v2479
    %v2817 = vmul.f32 %v2811, %v2815
    %2819 = vrot.lane.b32.xlu0 %v2817, 64
    %v2820 = vpop.permute.xlu0 %2819
    %v2822 = vadd.f32 %v2816, %v2820
    %v2823 = vtanh.pop %v2822
    %v2824 = vmul.f32 %v2813, %v2823
    %2826 = vrot.lane.b32.xlu0 %v2824, 64
    %v2827 = vpop.permute.xlu0 %2826
    %s2829 = scalar_lea.vmem %s4, 56
    %2830 = vst.msk [vmem:[%s2829] sm:$0xff] %vm149, %v2827
    // Predicated region
    $region30: #{signal_decoder_forward.1} parent=1 // pred_check
      _
    $region31: #{signal_decoder_forward.1} parent=1 // pred_check_branch
      %2832 = sbr.rel (0) target = $region33
    $region32: #{signal_decoder_forward.1} parent=1 // pred_region
      _
    $region33: #{signal_decoder_forward.1} parent=1 // pred_fallthru
      _
    // Predicated region
    $region34: #{signal_decoder_forward.1} parent=1 // pred_check
      _
    $region35: #{signal_decoder_forward.1} parent=1 // pred_check_branch
      %2834 = sbr.rel (0) target = $region37
    $region36: #{signal_decoder_forward.1} parent=1 // pred_region
      _
    $region37: #{signal_decoder_forward.1} parent=1 // pred_fallthru
      _
    %2835 = vsyncpa [#allocation3], 1
    %2836 = vsyncpa [#allocation5], 1

</llo_original>
